<compile_context>
chip_gen: v7x
topology: tpu7x:2x2x1
jax: 0.10.0
libtpu: 0.0.40
codegen_flags: <defaults>
</compile_context>

<pallas_src>
import functools
import math

import jax
import jax.numpy as jnp
from jax.experimental import pallas as pl
from jax.experimental.pallas import tpu as pltpu

# ---- model hyper-parameters (small, consistent with the module) ----
SEQ = 8          # S
BATCH = 2        # B
D_MODEL = 32     # E  (hidden_dim)
FF_DIM = 64      # dim_feedforward
NUM_HEADS = 4    # n_head
NUM_LAYERS = 2
HEAD_DIM = D_MODEL // NUM_HEADS
LN_EPS = 1e-5

# Packed-slab layout constants.
W_ROWS_PER_LAYER = 4 * D_MODEL + FF_DIM       # wqk(E) + wv(E) + wo(E) + w1(E) + w2(F)
VEC_ROWS_PER_LAYER = 9                         # b_qk, b_v, b_o, b1, b2, g1, be1, g2, be2
SLAB_COLS = max(2 * D_MODEL, FF_DIM)           # 64


# ----------------------------------------------------------------------------
# Kernel
# ----------------------------------------------------------------------------
def _layer_norm(x, gamma, beta):
    """x: (N, E); gamma/beta: (1, E). Biased variance + eps, matching nn.LayerNorm."""
    mean = jnp.mean(x, axis=-1, keepdims=True)
    c = x - mean
    var = jnp.mean(c * c, axis=-1, keepdims=True)
    return c * jax.lax.rsqrt(var + LN_EPS) * gamma + beta


def encoder_kernel(src_ref, pos_ref, w_ref, vec_ref, out_ref,
                   *, num_layers, num_heads, batch, seq, ff_dim):
    E = src_ref.shape[-1]
    F = ff_dim
    H = num_heads
    dh = E // H
    N = batch * seq
    LROWS = 4 * E + F

    x = src_ref[...].astype(jnp.float32)          # (N, E), rows ordered (b, s)
    p = pos_ref[...].astype(jnp.float32)

    def vrow(r, width):
        # One bias / LN-parameter row from the vector slab -> (1, width).
        return vec_ref[r:r + 1, 0:width]

    # TODO(synk): attn_mask / key_padding_mask / dropout are unused by Encoder.forward
    # (masks default to None, dropout is identity in eval) and are therefore omitted.
    for l in range(num_layers):                   # unrolled; distinct weights per layer
        wb = l * LROWS
        vb = l * VEC_ROWS_PER_LAYER

        # Weight slices: sublane-aligned row ranges / offset-0 lane ranges (cheap views).
        w_qk = w_ref[wb:wb + E, 0:2 * E]                      # (E, 2E); Q half pre-scaled
        w_v = w_ref[wb + E:wb + 2 * E, 0:E]                   # (E, E)
        w1 = w_ref[wb + 3 * E:wb + 4 * E, 0:F]                # (E, F)
        w2 = w_ref[wb + 4 * E:wb + 4 * E + F, 0:E]            # (F, E)
        b_qk = vrow(vb + 0, 2 * E)
        b_v = vrow(vb + 1, E)
        b_o = vrow(vb + 2, E)
        b1 = vrow(vb + 3, F)
        b2 = vrow(vb + 4, E)
        g1 = vrow(vb + 5, E)
        be1 = vrow(vb + 6, E)
        g2 = vrow(vb + 7, E)
        be2 = vrow(vb + 8, E)

        # ---- self-attention: q = k = src + pos, value = src ----
        qk_in = x + p
        qk = jnp.dot(qk_in, w_qk, preferred_element_type=jnp.float32) + b_qk   # (N, 2E)
        v = jnp.dot(x, w_v, preferred_element_type=jnp.float32) + b_v          # (N, E)

        # Output projection decomposed per head: attn = b_o + sum_h o_h @ w_o_h
        # (no lane concatenate, no transpose-back of the head outputs).
        attn = b_o                                                              # (1, E)
        for h in range(H):
            lo = h * dh
            q_h = qk[:, lo:lo + dh].reshape(batch, seq, dh)             # scale pre-folded
            k_h = qk[:, E + lo:E + lo + dh].reshape(batch, seq, dh)
            v_h = v[:, lo:lo + dh].reshape(batch, seq, dh)
            s_h = jnp.einsum('bqd,bkd->bqk', q_h, k_h,
                             preferred_element_type=jnp.float32)                # (B, S, S)
            s_h = s_h - jnp.max(s_h, axis=-1, keepdims=True)
            e_h = jnp.exp(s_h)
            a_h = e_h / jnp.sum(e_h, axis=-1, keepdims=True)                    # exact softmax
            o_h = jnp.einsum('bqk,bkd->bqd', a_h, v_h,
                             preferred_element_type=jnp.float32)                # (B, S, dh)
            w_o_h = w_ref[wb + 2 * E + lo:wb + 2 * E + lo + dh, 0:E]            # (dh, E)
            attn = attn + jnp.dot(o_h.reshape(N, dh), w_o_h,
                                  preferred_element_type=jnp.float32)

        # ---- residual + norm1 ----
        x = _layer_norm(x + attn, g1, be1)

        # ---- feed-forward: linear1 -> relu -> linear2, residual + norm2 ----
        h1 = jnp.maximum(jnp.dot(x, w1, preferred_element_type=jnp.float32) + b1, 0.0)
        ffn = jnp.dot(h1, w2, preferred_element_type=jnp.float32) + b2
        x = _layer_norm(x + ffn, g2, be2)

    # Final encoder norm (normalize_before=False -> applied after the layer stack).
    gn = vrow(num_layers * VEC_ROWS_PER_LAYER, E)
    bn = vrow(num_layers * VEC_ROWS_PER_LAYER + 1, E)
    out_ref[...] = _layer_norm(x, gn, bn).astype(out_ref.dtype)


# ----------------------------------------------------------------------------
# Parameter init (deterministic, synthetic) and one-time packing
# ----------------------------------------------------------------------------
def init_encoder_params(key, d_model=D_MODEL, ff_dim=FF_DIM, num_layers=NUM_LAYERS):
    ks = jax.random.split(key, 6)
    std = 0.02
    layer = {
        # pre-transposed (Din, Dout) weights
        "wq_t": jax.random.normal(ks[0], (d_model, d_model), jnp.float32) * std,
        "wk_t": jax.random.normal(ks[1], (d_model, d_model), jnp.float32) * std,
        "wv_t": jax.random.normal(ks[2], (d_model, d_model), jnp.float32) * std,
        "bq": jnp.zeros((d_model,), jnp.float32),
        "bk": jnp.zeros((d_model,), jnp.float32),
        "bv": jnp.zeros((d_model,), jnp.float32),
        "wo_t": jax.random.normal(ks[3], (d_model, d_model), jnp.float32) * std,
        "bo": jnp.zeros((d_model,), jnp.float32),
        "w1_t": jax.random.normal(ks[4], (d_model, ff_dim), jnp.float32) * std,
        "b1": jnp.zeros((ff_dim,), jnp.float32),
        "w2_t": jax.random.normal(ks[5], (ff_dim, d_model), jnp.float32) * std,
        "b2": jnp.zeros((d_model,), jnp.float32),
        "g1": jnp.ones((d_model,), jnp.float32),
        "be1": jnp.zeros((d_model,), jnp.float32),
        "g2": jnp.ones((d_model,), jnp.float32),
        "be2": jnp.zeros((d_model,), jnp.float32),
    }
    # PyTorch Encoder deepcopies one initialized layer -> all layers share identical
    # values; the packed slab nevertheless supports distinct per-layer weights.
    return {"layers": [dict(layer) for _ in range(num_layers)],
            "gn": jnp.ones((d_model,), jnp.float32),
            "bn": jnp.zeros((d_model,), jnp.float32)}


def pack_encoder_params(params, num_heads=NUM_HEADS):
    """One-time parameter packing (hoisted out of the per-call forward).

    Returns:
      w_slab  : (L*(4E+F), SLAB_COLS) f32 -- all matmul weights, row-stacked.
      vec_slab: (9L+2,    SLAB_COLS) f32 -- biases and LayerNorm params, one per row.
    The 1/sqrt(head_dim) softmax scale is folded into the Q columns (and bq).
    """
    layers = params["layers"]
    E = layers[0]["wq_t"].shape[0]
    F = layers[0]["w1_t"].shape[1]
    W = max(2 * E, F)
    dh = E // num_heads
    scale = 1.0 / math.sqrt(dh)

    def pad_cols(m, width):
        return jnp.pad(m, ((0, 0), (0, width - m.shape[1])))

    def pad_row(v, width):
        v = jnp.asarray(v, jnp.float32).reshape(-1)
        return jnp.pad(v, (0, width - v.shape[0]))

    w_blocks, vec_rows = [], []
    for lp in layers:
        w_qk = jnp.concatenate([lp["wq_t"] * scale, lp["wk_t"]], axis=1)   # (E, 2E)
        w_blocks += [pad_cols(w_qk, W),
                     pad_cols(lp["wv_t"], W),
                     pad_cols(lp["wo_t"], W),
                     pad_cols(lp["w1_t"], W),
                     pad_cols(lp["w2_t"], W)]
        b_qk = jnp.concatenate([lp["bq"] * scale, lp["bk"]], axis=0)       # (2E,)
        vec_rows += [pad_row(b_qk, W), pad_row(lp["bv"], W), pad_row(lp["bo"], W),
                     pad_row(lp["b1"], W), pad_row(lp["b2"], W),
                     pad_row(lp["g1"], W), pad_row(lp["be1"], W),
                     pad_row(lp["g2"], W), pad_row(lp["be2"], W)]
    vec_rows += [pad_row(params["gn"], W), pad_row(params["bn"], W)]

    w_slab = jnp.concatenate(w_blocks, axis=0).astype(jnp.float32)
    vec_slab = jnp.stack(vec_rows).astype(jnp.float32)
    return w_slab, vec_slab


# ----------------------------------------------------------------------------
# Forward wrapper (layout plumbing only; no per-call parameter packing)
# ----------------------------------------------------------------------------
@jax.jit
def encoder_forward(src, pos, w_slab, vec_slab):
    S, B, E = src.shape

    # (S, B, E) -> dense 2-D (B*S, E) rows ordered (b, s); kernel never transposes.
    src2d = jnp.transpose(src, (1, 0, 2)).reshape(B * S, E)
    pos2d = jnp.transpose(pos, (1, 0, 2)).reshape(B * S, E)

    vmem = pl.BlockSpec(memory_space=pltpu.MemorySpace.VMEM)
    out2d = pl.pallas_call(
        functools.partial(encoder_kernel, num_layers=NUM_LAYERS,
                          num_heads=NUM_HEADS, batch=B, seq=S, ff_dim=FF_DIM),
        out_shape=jax.ShapeDtypeStruct((B * S, E), src.dtype),
        in_specs=[vmem, vmem, vmem, vmem],
        out_specs=vmem,
    )(src2d, pos2d, w_slab, vec_slab)

    return jnp.transpose(out2d.reshape(B, S, E), (1, 0, 2))   # back to (S, B, E)


if __name__ == "__main__":
    key = jax.random.PRNGKey(0)
    k_src, k_pos, k_param = jax.random.split(key, 3)

    src = jax.random.normal(k_src, (SEQ, BATCH, D_MODEL), jnp.float32)
    pos = jax.random.normal(k_pos, (SEQ, BATCH, D_MODEL), jnp.float32)

    params = init_encoder_params(k_param)
    # One-time parameter preparation (scale folding + slab packing), hoisted out of
    # the forward path as recommended by the performance review.
    w_slab, vec_slab = pack_encoder_params(params)

    out = encoder_forward(src, pos, w_slab, vec_slab)
    out = jax.block_until_ready(out)
    assert out.shape == (SEQ, BATCH, D_MODEL)
    print("KERNEL_OK")
</pallas_src>

<mosaic_0001>
module attributes {stable_mosaic.version = 11 : i64} {
  func.func @encoder_kernel(%arg0: memref<16x32xf32, #tpu.memory_space<vmem>>, %arg1: memref<16x32xf32, #tpu.memory_space<vmem>>, %arg2: memref<384x64xf32, #tpu.memory_space<vmem>>, %arg3: memref<20x64xf32, #tpu.memory_space<vmem>>, %arg4: memref<16x32xf32, #tpu.memory_space<vmem>>) attributes {dimension_semantics = [], scalar_prefetch = 0 : i64, scratch_operands = 0 : i64, tpu.core_type = #tpu.core_type<tc>} {
    %c0 = arith.constant 0 : index
    %c0_0 = arith.constant 0 : index
    %0 = vector.load %arg0[%c0, %c0_0] : memref<16x32xf32, #tpu.memory_space<vmem>>, vector<16x32xf32>
    %c0_1 = arith.constant 0 : index
    %c0_2 = arith.constant 0 : index
    %1 = vector.load %arg1[%c0_1, %c0_2] : memref<16x32xf32, #tpu.memory_space<vmem>>, vector<16x32xf32>
    %c0_3 = arith.constant 0 : index
    %c0_4 = arith.constant 0 : index
    %2 = vector.load %arg2[%c0_3, %c0_4] : memref<384x64xf32, #tpu.memory_space<vmem>>, vector<32x64xf32>
    %c32 = arith.constant 32 : index
    %c0_5 = arith.constant 0 : index
    %3 = vector.load %arg2[%c32, %c0_5] : memref<384x64xf32, #tpu.memory_space<vmem>>, vector<32x32xf32>
    %c96 = arith.constant 96 : index
    %c0_6 = arith.constant 0 : index
    %4 = vector.load %arg2[%c96, %c0_6] : memref<384x64xf32, #tpu.memory_space<vmem>>, vector<32x64xf32>
    %c128 = arith.constant 128 : index
    %c0_7 = arith.constant 0 : index
    %5 = vector.load %arg2[%c128, %c0_7] : memref<384x64xf32, #tpu.memory_space<vmem>>, vector<64x32xf32>
    %c0_8 = arith.constant 0 : index
    %c0_9 = arith.constant 0 : index
    %6 = vector.load %arg3[%c0_8, %c0_9] : memref<20x64xf32, #tpu.memory_space<vmem>>, vector<1x64xf32>
    %c1 = arith.constant 1 : index
    %c0_10 = arith.constant 0 : index
    %7 = vector.load %arg3[%c1, %c0_10] : memref<20x64xf32, #tpu.memory_space<vmem>>, vector<1x32xf32>
    %c2 = arith.constant 2 : index
    %c0_11 = arith.constant 0 : index
    %8 = vector.load %arg3[%c2, %c0_11] : memref<20x64xf32, #tpu.memory_space<vmem>>, vector<1x32xf32>
    %c3 = arith.constant 3 : index
    %c0_12 = arith.constant 0 : index
    %9 = vector.load %arg3[%c3, %c0_12] : memref<20x64xf32, #tpu.memory_space<vmem>>, vector<1x64xf32>
    %c4 = arith.constant 4 : index
    %c0_13 = arith.constant 0 : index
    %10 = vector.load %arg3[%c4, %c0_13] : memref<20x64xf32, #tpu.memory_space<vmem>>, vector<1x32xf32>
    %c5 = arith.constant 5 : index
    %c0_14 = arith.constant 0 : index
    %11 = vector.load %arg3[%c5, %c0_14] : memref<20x64xf32, #tpu.memory_space<vmem>>, vector<1x32xf32>
    %c6 = arith.constant 6 : index
    %c0_15 = arith.constant 0 : index
    %12 = vector.load %arg3[%c6, %c0_15] : memref<20x64xf32, #tpu.memory_space<vmem>>, vector<1x32xf32>
    %c7 = arith.constant 7 : index
    %c0_16 = arith.constant 0 : index
    %13 = vector.load %arg3[%c7, %c0_16] : memref<20x64xf32, #tpu.memory_space<vmem>>, vector<1x32xf32>
    %c8 = arith.constant 8 : index
    %c0_17 = arith.constant 0 : index
    %14 = vector.load %arg3[%c8, %c0_17] : memref<20x64xf32, #tpu.memory_space<vmem>>, vector<1x32xf32>
    %15 = arith.addf %0, %1 : vector<16x32xf32>
    %cst = arith.constant dense<0.000000e+00> : vector<16x64xf32>
    %16 = tpu.matmul %15, %2, %cst {dimension_numbers = #tpu.dot_dimension_numbers<[1], [0], [0], [1], [0, 0, 1, 1], [], []>} : vector<16x32xf32>, vector<32x64xf32>, vector<16x64xf32> -> vector<16x64xf32>
    %17 = vector.broadcast %6 : vector<1x64xf32> to vector<16x64xf32>
    %18 = arith.addf %16, %17 : vector<16x64xf32>
    %cst_18 = arith.constant dense<0.000000e+00> : vector<16x32xf32>
    %19 = tpu.matmul %0, %3, %cst_18 {dimension_numbers = #tpu.dot_dimension_numbers<[1], [0], [0], [1], [0, 0, 1, 1], [], []>} : vector<16x32xf32>, vector<32x32xf32>, vector<16x32xf32> -> vector<16x32xf32>
    %20 = vector.broadcast %7 : vector<1x32xf32> to vector<16x32xf32>
    %21 = arith.addf %19, %20 : vector<16x32xf32>
    %22 = vector.extract_strided_slice %18 {offsets = [0, 0], sizes = [16, 8], strides = [1, 1]} : vector<16x64xf32> to vector<16x8xf32>
    %23 = vector.shape_cast %22 : vector<16x8xf32> to vector<2x8x8xf32>
    %24 = vector.extract_strided_slice %18 {offsets = [0, 32], sizes = [16, 8], strides = [1, 1]} : vector<16x64xf32> to vector<16x8xf32>
    %25 = vector.shape_cast %24 : vector<16x8xf32> to vector<2x8x8xf32>
    %26 = vector.extract_strided_slice %21 {offsets = [0, 0], sizes = [16, 8], strides = [1, 1]} : vector<16x32xf32> to vector<16x8xf32>
    %27 = vector.shape_cast %26 : vector<16x8xf32> to vector<2x8x8xf32>
    "tpu.trace_start"() <{level = 10 : i32, message = "bqd,bkd->bqk"}> : () -> ()
    %cst_19 = arith.constant dense<0.000000e+00> : vector<2x8x8xf32>
    %28 = tpu.matmul %23, %25, %cst_19 {dimension_numbers = #tpu.dot_dimension_numbers<[2], [2], [1], [1], [0, 0, 0, 1, 1, 1], [0], [0]>} : vector<2x8x8xf32>, vector<2x8x8xf32>, vector<2x8x8xf32> -> vector<2x8x8xf32>
    "tpu.trace_stop"() : () -> ()
    %cst_20 = arith.constant dense<0xFF800000> : vector<2x8xf32>
    %29 = vector.multi_reduction <maximumf>, %28, %cst_20 [2] : vector<2x8x8xf32> to vector<2x8xf32>
    %30 = vector.shape_cast %29 : vector<2x8xf32> to vector<2x8x1xf32>
    %31 = vector.broadcast %30 : vector<2x8x1xf32> to vector<2x8x8xf32>
    %32 = arith.subf %28, %31 : vector<2x8x8xf32>
    %33 = math.exp %32 : vector<2x8x8xf32>
    %cst_21 = arith.constant dense<0.000000e+00> : vector<2x8xf32>
    %34 = vector.multi_reduction <add>, %33, %cst_21 [2] : vector<2x8x8xf32> to vector<2x8xf32>
    %35 = vector.shape_cast %34 : vector<2x8xf32> to vector<2x8x1xf32>
    %36 = vector.broadcast %35 : vector<2x8x1xf32> to vector<2x8x8xf32>
    %37 = arith.divf %33, %36 : vector<2x8x8xf32>
    "tpu.trace_start"() <{level = 10 : i32, message = "bqk,bkd->bqd"}> : () -> ()
    %cst_22 = arith.constant dense<0.000000e+00> : vector<2x8x8xf32>
    %38 = tpu.matmul %37, %27, %cst_22 {dimension_numbers = #tpu.dot_dimension_numbers<[2], [1], [1], [2], [0, 0, 0, 1, 1, 2], [0], [0]>} : vector<2x8x8xf32>, vector<2x8x8xf32>, vector<2x8x8xf32> -> vector<2x8x8xf32>
    "tpu.trace_stop"() : () -> ()
    %c64 = arith.constant 64 : index
    %c0_23 = arith.constant 0 : index
    %39 = vector.load %arg2[%c64, %c0_23] : memref<384x64xf32, #tpu.memory_space<vmem>>, vector<8x32xf32>
    %40 = vector.shape_cast %38 : vector<2x8x8xf32> to vector<16x8xf32>
    %cst_24 = arith.constant dense<0.000000e+00> : vector<16x32xf32>
    %41 = tpu.matmul %40, %39, %cst_24 {dimension_numbers = #tpu.dot_dimension_numbers<[1], [0], [0], [1], [0, 0, 1, 1], [], []>} : vector<16x8xf32>, vector<8x32xf32>, vector<16x32xf32> -> vector<16x32xf32>
    %42 = vector.broadcast %8 : vector<1x32xf32> to vector<16x32xf32>
    %43 = arith.addf %42, %41 : vector<16x32xf32>
    %44 = vector.extract_strided_slice %18 {offsets = [0, 8], sizes = [16, 8], strides = [1, 1]} : vector<16x64xf32> to vector<16x8xf32>
    %45 = vector.shape_cast %44 : vector<16x8xf32> to vector<2x8x8xf32>
    %46 = vector.extract_strided_slice %18 {offsets = [0, 40], sizes = [16, 8], strides = [1, 1]} : vector<16x64xf32> to vector<16x8xf32>
    %47 = vector.shape_cast %46 : vector<16x8xf32> to vector<2x8x8xf32>
    %48 = vector.extract_strided_slice %21 {offsets = [0, 8], sizes = [16, 8], strides = [1, 1]} : vector<16x32xf32> to vector<16x8xf32>
    %49 = vector.shape_cast %48 : vector<16x8xf32> to vector<2x8x8xf32>
    "tpu.trace_start"() <{level = 10 : i32, message = "bqd,bkd->bqk"}> : () -> ()
    %cst_25 = arith.constant dense<0.000000e+00> : vector<2x8x8xf32>
    %50 = tpu.matmul %45, %47, %cst_25 {dimension_numbers = #tpu.dot_dimension_numbers<[2], [2], [1], [1], [0, 0, 0, 1, 1, 1], [0], [0]>} : vector<2x8x8xf32>, vector<2x8x8xf32>, vector<2x8x8xf32> -> vector<2x8x8xf32>
    "tpu.trace_stop"() : () -> ()
    %cst_26 = arith.constant dense<0xFF800000> : vector<2x8xf32>
    %51 = vector.multi_reduction <maximumf>, %50, %cst_26 [2] : vector<2x8x8xf32> to vector<2x8xf32>
    %52 = vector.shape_cast %51 : vector<2x8xf32> to vector<2x8x1xf32>
    %53 = vector.broadcast %52 : vector<2x8x1xf32> to vector<2x8x8xf32>
    %54 = arith.subf %50, %53 : vector<2x8x8xf32>
    %55 = math.exp %54 : vector<2x8x8xf32>
    %cst_27 = arith.constant dense<0.000000e+00> : vector<2x8xf32>
    %56 = vector.multi_reduction <add>, %55, %cst_27 [2] : vector<2x8x8xf32> to vector<2x8xf32>
    %57 = vector.shape_cast %56 : vector<2x8xf32> to vector<2x8x1xf32>
    %58 = vector.broadcast %57 : vector<2x8x1xf32> to vector<2x8x8xf32>
    %59 = arith.divf %55, %58 : vector<2x8x8xf32>
    "tpu.trace_start"() <{level = 10 : i32, message = "bqk,bkd->bqd"}> : () -> ()
    %cst_28 = arith.constant dense<0.000000e+00> : vector<2x8x8xf32>
    %60 = tpu.matmul %59, %49, %cst_28 {dimension_numbers = #tpu.dot_dimension_numbers<[2], [1], [1], [2], [0, 0, 0, 1, 1, 2], [0], [0]>} : vector<2x8x8xf32>, vector<2x8x8xf32>, vector<2x8x8xf32> -> vector<2x8x8xf32>
    "tpu.trace_stop"() : () -> ()
    %c72 = arith.constant 72 : index
    %c0_29 = arith.constant 0 : index
    %61 = vector.load %arg2[%c72, %c0_29] : memref<384x64xf32, #tpu.memory_space<vmem>>, vector<8x32xf32>
    %62 = vector.shape_cast %60 : vector<2x8x8xf32> to vector<16x8xf32>
    %cst_30 = arith.constant dense<0.000000e+00> : vector<16x32xf32>
    %63 = tpu.matmul %62, %61, %cst_30 {dimension_numbers = #tpu.dot_dimension_numbers<[1], [0], [0], [1], [0, 0, 1, 1], [], []>} : vector<16x8xf32>, vector<8x32xf32>, vector<16x32xf32> -> vector<16x32xf32>
    %64 = arith.addf %43, %63 : vector<16x32xf32>
    %65 = vector.extract_strided_slice %18 {offsets = [0, 16], sizes = [16, 8], strides = [1, 1]} : vector<16x64xf32> to vector<16x8xf32>
    %66 = vector.shape_cast %65 : vector<16x8xf32> to vector<2x8x8xf32>
    %67 = vector.extract_strided_slice %18 {offsets = [0, 48], sizes = [16, 8], strides = [1, 1]} : vector<16x64xf32> to vector<16x8xf32>
    %68 = vector.shape_cast %67 : vector<16x8xf32> to vector<2x8x8xf32>
    %69 = vector.extract_strided_slice %21 {offsets = [0, 16], sizes = [16, 8], strides = [1, 1]} : vector<16x32xf32> to vector<16x8xf32>
    %70 = vector.shape_cast %69 : vector<16x8xf32> to vector<2x8x8xf32>
    "tpu.trace_start"() <{level = 10 : i32, message = "bqd,bkd->bqk"}> : () -> ()
    %cst_31 = arith.constant dense<0.000000e+00> : vector<2x8x8xf32>
    %71 = tpu.matmul %66, %68, %cst_31 {dimension_numbers = #tpu.dot_dimension_numbers<[2], [2], [1], [1], [0, 0, 0, 1, 1, 1], [0], [0]>} : vector<2x8x8xf32>, vector<2x8x8xf32>, vector<2x8x8xf32> -> vector<2x8x8xf32>
    "tpu.trace_stop"() : () -> ()
    %cst_32 = arith.constant dense<0xFF800000> : vector<2x8xf32>
    %72 = vector.multi_reduction <maximumf>, %71, %cst_32 [2] : vector<2x8x8xf32> to vector<2x8xf32>
    %73 = vector.shape_cast %72 : vector<2x8xf32> to vector<2x8x1xf32>
    %74 = vector.broadcast %73 : vector<2x8x1xf32> to vector<2x8x8xf32>
    %75 = arith.subf %71, %74 : vector<2x8x8xf32>
    %76 = math.exp %75 : vector<2x8x8xf32>
    %cst_33 = arith.constant dense<0.000000e+00> : vector<2x8xf32>
    %77 = vector.multi_reduction <add>, %76, %cst_33 [2] : vector<2x8x8xf32> to vector<2x8xf32>
    %78 = vector.shape_cast %77 : vector<2x8xf32> to vector<2x8x1xf32>
    %79 = vector.broadcast %78 : vector<2x8x1xf32> to vector<2x8x8xf32>
    %80 = arith.divf %76, %79 : vector<2x8x8xf32>
    "tpu.trace_start"() <{level = 10 : i32, message = "bqk,bkd->bqd"}> : () -> ()
    %cst_34 = arith.constant dense<0.000000e+00> : vector<2x8x8xf32>
    %81 = tpu.matmul %80, %70, %cst_34 {dimension_numbers = #tpu.dot_dimension_numbers<[2], [1], [1], [2], [0, 0, 0, 1, 1, 2], [0], [0]>} : vector<2x8x8xf32>, vector<2x8x8xf32>, vector<2x8x8xf32> -> vector<2x8x8xf32>
    "tpu.trace_stop"() : () -> ()
    %c80 = arith.constant 80 : index
    %c0_35 = arith.constant 0 : index
    %82 = vector.load %arg2[%c80, %c0_35] : memref<384x64xf32, #tpu.memory_space<vmem>>, vector<8x32xf32>
    %83 = vector.shape_cast %81 : vector<2x8x8xf32> to vector<16x8xf32>
    %cst_36 = arith.constant dense<0.000000e+00> : vector<16x32xf32>
    %84 = tpu.matmul %83, %82, %cst_36 {dimension_numbers = #tpu.dot_dimension_numbers<[1], [0], [0], [1], [0, 0, 1, 1], [], []>} : vector<16x8xf32>, vector<8x32xf32>, vector<16x32xf32> -> vector<16x32xf32>
    %85 = arith.addf %64, %84 : vector<16x32xf32>
    %86 = vector.extract_strided_slice %18 {offsets = [0, 24], sizes = [16, 8], strides = [1, 1]} : vector<16x64xf32> to vector<16x8xf32>
    %87 = vector.shape_cast %86 : vector<16x8xf32> to vector<2x8x8xf32>
    %88 = vector.extract_strided_slice %18 {offsets = [0, 56], sizes = [16, 8], strides = [1, 1]} : vector<16x64xf32> to vector<16x8xf32>
    %89 = vector.shape_cast %88 : vector<16x8xf32> to vector<2x8x8xf32>
    %90 = vector.extract_strided_slice %21 {offsets = [0, 24], sizes = [16, 8], strides = [1, 1]} : vector<16x32xf32> to vector<16x8xf32>
    %91 = vector.shape_cast %90 : vector<16x8xf32> to vector<2x8x8xf32>
    "tpu.trace_start"() <{level = 10 : i32, message = "bqd,bkd->bqk"}> : () -> ()
    %cst_37 = arith.constant dense<0.000000e+00> : vector<2x8x8xf32>
    %92 = tpu.matmul %87, %89, %cst_37 {dimension_numbers = #tpu.dot_dimension_numbers<[2], [2], [1], [1], [0, 0, 0, 1, 1, 1], [0], [0]>} : vector<2x8x8xf32>, vector<2x8x8xf32>, vector<2x8x8xf32> -> vector<2x8x8xf32>
    "tpu.trace_stop"() : () -> ()
    %cst_38 = arith.constant dense<0xFF800000> : vector<2x8xf32>
    %93 = vector.multi_reduction <maximumf>, %92, %cst_38 [2] : vector<2x8x8xf32> to vector<2x8xf32>
    %94 = vector.shape_cast %93 : vector<2x8xf32> to vector<2x8x1xf32>
    %95 = vector.broadcast %94 : vector<2x8x1xf32> to vector<2x8x8xf32>
    %96 = arith.subf %92, %95 : vector<2x8x8xf32>
    %97 = math.exp %96 : vector<2x8x8xf32>
    %cst_39 = arith.constant dense<0.000000e+00> : vector<2x8xf32>
    %98 = vector.multi_reduction <add>, %97, %cst_39 [2] : vector<2x8x8xf32> to vector<2x8xf32>
    %99 = vector.shape_cast %98 : vector<2x8xf32> to vector<2x8x1xf32>
    %100 = vector.broadcast %99 : vector<2x8x1xf32> to vector<2x8x8xf32>
    %101 = arith.divf %97, %100 : vector<2x8x8xf32>
    "tpu.trace_start"() <{level = 10 : i32, message = "bqk,bkd->bqd"}> : () -> ()
    %cst_40 = arith.constant dense<0.000000e+00> : vector<2x8x8xf32>
    %102 = tpu.matmul %101, %91, %cst_40 {dimension_numbers = #tpu.dot_dimension_numbers<[2], [1], [1], [2], [0, 0, 0, 1, 1, 2], [0], [0]>} : vector<2x8x8xf32>, vector<2x8x8xf32>, vector<2x8x8xf32> -> vector<2x8x8xf32>
    "tpu.trace_stop"() : () -> ()
    %c88 = arith.constant 88 : index
    %c0_41 = arith.constant 0 : index
    %103 = vector.load %arg2[%c88, %c0_41] : memref<384x64xf32, #tpu.memory_space<vmem>>, vector<8x32xf32>
    %104 = vector.shape_cast %102 : vector<2x8x8xf32> to vector<16x8xf32>
    %cst_42 = arith.constant dense<0.000000e+00> : vector<16x32xf32>
    %105 = tpu.matmul %104, %103, %cst_42 {dimension_numbers = #tpu.dot_dimension_numbers<[1], [0], [0], [1], [0, 0, 1, 1], [], []>} : vector<16x8xf32>, vector<8x32xf32>, vector<16x32xf32> -> vector<16x32xf32>
    %106 = arith.addf %85, %105 : vector<16x32xf32>
    %107 = arith.addf %0, %106 : vector<16x32xf32>
    %cst_43 = arith.constant dense<0.000000e+00> : vector<16xf32>
    %108 = vector.multi_reduction <add>, %107, %cst_43 [1] : vector<16x32xf32> to vector<16xf32>
    %109 = vector.shape_cast %108 : vector<16xf32> to vector<16x1xf32>
    %cst_44 = arith.constant 3.200000e+01 : f32
    %110 = vector.broadcast %cst_44 : f32 to vector<16x1xf32>
    %111 = arith.divf %109, %110 : vector<16x1xf32>
    %112 = vector.broadcast %111 : vector<16x1xf32> to vector<16x32xf32>
    %113 = arith.subf %107, %112 : vector<16x32xf32>
    %114 = arith.mulf %113, %113 : vector<16x32xf32>
    %cst_45 = arith.constant dense<0.000000e+00> : vector<16xf32>
    %115 = vector.multi_reduction <add>, %114, %cst_45 [1] : vector<16x32xf32> to vector<16xf32>
    %116 = vector.shape_cast %115 : vector<16xf32> to vector<16x1xf32>
    %cst_46 = arith.constant 3.200000e+01 : f32
    %117 = vector.broadcast %cst_46 : f32 to vector<16x1xf32>
    %118 = arith.divf %116, %117 : vector<16x1xf32>
    %cst_47 = arith.constant 9.99999974E-6 : f32
    %119 = vector.broadcast %cst_47 : f32 to vector<16x1xf32>
    %120 = arith.addf %118, %119 : vector<16x1xf32>
    %121 = math.rsqrt %120 : vector<16x1xf32>
    %122 = vector.broadcast %121 : vector<16x1xf32> to vector<16x32xf32>
    %123 = arith.mulf %113, %122 : vector<16x32xf32>
    %124 = vector.broadcast %11 : vector<1x32xf32> to vector<16x32xf32>
    %125 = arith.mulf %123, %124 : vector<16x32xf32>
    %126 = vector.broadcast %12 : vector<1x32xf32> to vector<16x32xf32>
    %127 = arith.addf %125, %126 : vector<16x32xf32>
    %cst_48 = arith.constant dense<0.000000e+00> : vector<16x64xf32>
    %128 = tpu.matmul %127, %4, %cst_48 {dimension_numbers = #tpu.dot_dimension_numbers<[1], [0], [0], [1], [0, 0, 1, 1], [], []>} : vector<16x32xf32>, vector<32x64xf32>, vector<16x64xf32> -> vector<16x64xf32>
    %129 = vector.broadcast %9 : vector<1x64xf32> to vector<16x64xf32>
    %130 = arith.addf %128, %129 : vector<16x64xf32>
    %cst_49 = arith.constant 0.000000e+00 : f32
    %131 = vector.broadcast %cst_49 : f32 to vector<16x64xf32>
    %132 = arith.maximumf %130, %131 : vector<16x64xf32>
    %cst_50 = arith.constant dense<0.000000e+00> : vector<16x32xf32>
    %133 = tpu.matmul %132, %5, %cst_50 {dimension_numbers = #tpu.dot_dimension_numbers<[1], [0], [0], [1], [0, 0, 1, 1], [], []>} : vector<16x64xf32>, vector<64x32xf32>, vector<16x32xf32> -> vector<16x32xf32>
    %134 = vector.broadcast %10 : vector<1x32xf32> to vector<16x32xf32>
    %135 = arith.addf %133, %134 : vector<16x32xf32>
    %136 = arith.addf %127, %135 : vector<16x32xf32>
    %cst_51 = arith.constant dense<0.000000e+00> : vector<16xf32>
    %137 = vector.multi_reduction <add>, %136, %cst_51 [1] : vector<16x32xf32> to vector<16xf32>
    %138 = vector.shape_cast %137 : vector<16xf32> to vector<16x1xf32>
    %cst_52 = arith.constant 3.200000e+01 : f32
    %139 = vector.broadcast %cst_52 : f32 to vector<16x1xf32>
    %140 = arith.divf %138, %139 : vector<16x1xf32>
    %141 = vector.broadcast %140 : vector<16x1xf32> to vector<16x32xf32>
    %142 = arith.subf %136, %141 : vector<16x32xf32>
    %143 = arith.mulf %142, %142 : vector<16x32xf32>
    %cst_53 = arith.constant dense<0.000000e+00> : vector<16xf32>
    %144 = vector.multi_reduction <add>, %143, %cst_53 [1] : vector<16x32xf32> to vector<16xf32>
    %145 = vector.shape_cast %144 : vector<16xf32> to vector<16x1xf32>
    %cst_54 = arith.constant 3.200000e+01 : f32
    %146 = vector.broadcast %cst_54 : f32 to vector<16x1xf32>
    %147 = arith.divf %145, %146 : vector<16x1xf32>
    %cst_55 = arith.constant 9.99999974E-6 : f32
    %148 = vector.broadcast %cst_55 : f32 to vector<16x1xf32>
    %149 = arith.addf %147, %148 : vector<16x1xf32>
    %150 = math.rsqrt %149 : vector<16x1xf32>
    %151 = vector.broadcast %150 : vector<16x1xf32> to vector<16x32xf32>
    %152 = arith.mulf %142, %151 : vector<16x32xf32>
    %153 = vector.broadcast %13 : vector<1x32xf32> to vector<16x32xf32>
    %154 = arith.mulf %152, %153 : vector<16x32xf32>
    %155 = vector.broadcast %14 : vector<1x32xf32> to vector<16x32xf32>
    %156 = arith.addf %154, %155 : vector<16x32xf32>
    %c192 = arith.constant 192 : index
    %c0_56 = arith.constant 0 : index
    %157 = vector.load %arg2[%c192, %c0_56] : memref<384x64xf32, #tpu.memory_space<vmem>>, vector<32x64xf32>
    %c224 = arith.constant 224 : index
    %c0_57 = arith.constant 0 : index
    %158 = vector.load %arg2[%c224, %c0_57] : memref<384x64xf32, #tpu.memory_space<vmem>>, vector<32x32xf32>
    %c288 = arith.constant 288 : index
    %c0_58 = arith.constant 0 : index
    %159 = vector.load %arg2[%c288, %c0_58] : memref<384x64xf32, #tpu.memory_space<vmem>>, vector<32x64xf32>
    %c320 = arith.constant 320 : index
    %c0_59 = arith.constant 0 : index
    %160 = vector.load %arg2[%c320, %c0_59] : memref<384x64xf32, #tpu.memory_space<vmem>>, vector<64x32xf32>
    %c9 = arith.constant 9 : index
    %c0_60 = arith.constant 0 : index
    %161 = vector.load %arg3[%c9, %c0_60] : memref<20x64xf32, #tpu.memory_space<vmem>>, vector<1x64xf32>
    %c10 = arith.constant 10 : index
    %c0_61 = arith.constant 0 : index
    %162 = vector.load %arg3[%c10, %c0_61] : memref<20x64xf32, #tpu.memory_space<vmem>>, vector<1x32xf32>
    %c11 = arith.constant 11 : index
    %c0_62 = arith.constant 0 : index
    %163 = vector.load %arg3[%c11, %c0_62] : memref<20x64xf32, #tpu.memory_space<vmem>>, vector<1x32xf32>
    %c12 = arith.constant 12 : index
    %c0_63 = arith.constant 0 : index
    %164 = vector.load %arg3[%c12, %c0_63] : memref<20x64xf32, #tpu.memory_space<vmem>>, vector<1x64xf32>
    %c13 = arith.constant 13 : index
    %c0_64 = arith.constant 0 : index
    %165 = vector.load %arg3[%c13, %c0_64] : memref<20x64xf32, #tpu.memory_space<vmem>>, vector<1x32xf32>
    %c14 = arith.constant 14 : index
    %c0_65 = arith.constant 0 : index
    %166 = vector.load %arg3[%c14, %c0_65] : memref<20x64xf32, #tpu.memory_space<vmem>>, vector<1x32xf32>
    %c15 = arith.constant 15 : index
    %c0_66 = arith.constant 0 : index
    %167 = vector.load %arg3[%c15, %c0_66] : memref<20x64xf32, #tpu.memory_space<vmem>>, vector<1x32xf32>
    %c16 = arith.constant 16 : index
    %c0_67 = arith.constant 0 : index
    %168 = vector.load %arg3[%c16, %c0_67] : memref<20x64xf32, #tpu.memory_space<vmem>>, vector<1x32xf32>
    %c17 = arith.constant 17 : index
    %c0_68 = arith.constant 0 : index
    %169 = vector.load %arg3[%c17, %c0_68] : memref<20x64xf32, #tpu.memory_space<vmem>>, vector<1x32xf32>
    %170 = arith.addf %156, %1 : vector<16x32xf32>
    %cst_69 = arith.constant dense<0.000000e+00> : vector<16x64xf32>
    %171 = tpu.matmul %170, %157, %cst_69 {dimension_numbers = #tpu.dot_dimension_numbers<[1], [0], [0], [1], [0, 0, 1, 1], [], []>} : vector<16x32xf32>, vector<32x64xf32>, vector<16x64xf32> -> vector<16x64xf32>
    %172 = vector.broadcast %161 : vector<1x64xf32> to vector<16x64xf32>
    %173 = arith.addf %171, %172 : vector<16x64xf32>
    %cst_70 = arith.constant dense<0.000000e+00> : vector<16x32xf32>
    %174 = tpu.matmul %156, %158, %cst_70 {dimension_numbers = #tpu.dot_dimension_numbers<[1], [0], [0], [1], [0, 0, 1, 1], [], []>} : vector<16x32xf32>, vector<32x32xf32>, vector<16x32xf32> -> vector<16x32xf32>
    %175 = vector.broadcast %162 : vector<1x32xf32> to vector<16x32xf32>
    %176 = arith.addf %174, %175 : vector<16x32xf32>
    %177 = vector.extract_strided_slice %173 {offsets = [0, 0], sizes = [16, 8], strides = [1, 1]} : vector<16x64xf32> to vector<16x8xf32>
    %178 = vector.shape_cast %177 : vector<16x8xf32> to vector<2x8x8xf32>
    %179 = vector.extract_strided_slice %173 {offsets = [0, 32], sizes = [16, 8], strides = [1, 1]} : vector<16x64xf32> to vector<16x8xf32>
    %180 = vector.shape_cast %179 : vector<16x8xf32> to vector<2x8x8xf32>
    %181 = vector.extract_strided_slice %176 {offsets = [0, 0], sizes = [16, 8], strides = [1, 1]} : vector<16x32xf32> to vector<16x8xf32>
    %182 = vector.shape_cast %181 : vector<16x8xf32> to vector<2x8x8xf32>
    "tpu.trace_start"() <{level = 10 : i32, message = "bqd,bkd->bqk"}> : () -> ()
    %cst_71 = arith.constant dense<0.000000e+00> : vector<2x8x8xf32>
    %183 = tpu.matmul %178, %180, %cst_71 {dimension_numbers = #tpu.dot_dimension_numbers<[2], [2], [1], [1], [0, 0, 0, 1, 1, 1], [0], [0]>} : vector<2x8x8xf32>, vector<2x8x8xf32>, vector<2x8x8xf32> -> vector<2x8x8xf32>
    "tpu.trace_stop"() : () -> ()
    %cst_72 = arith.constant dense<0xFF800000> : vector<2x8xf32>
    %184 = vector.multi_reduction <maximumf>, %183, %cst_72 [2] : vector<2x8x8xf32> to vector<2x8xf32>
    %185 = vector.shape_cast %184 : vector<2x8xf32> to vector<2x8x1xf32>
    %186 = vector.broadcast %185 : vector<2x8x1xf32> to vector<2x8x8xf32>
    %187 = arith.subf %183, %186 : vector<2x8x8xf32>
    %188 = math.exp %187 : vector<2x8x8xf32>
    %cst_73 = arith.constant dense<0.000000e+00> : vector<2x8xf32>
    %189 = vector.multi_reduction <add>, %188, %cst_73 [2] : vector<2x8x8xf32> to vector<2x8xf32>
    %190 = vector.shape_cast %189 : vector<2x8xf32> to vector<2x8x1xf32>
    %191 = vector.broadcast %190 : vector<2x8x1xf32> to vector<2x8x8xf32>
    %192 = arith.divf %188, %191 : vector<2x8x8xf32>
    "tpu.trace_start"() <{level = 10 : i32, message = "bqk,bkd->bqd"}> : () -> ()
    %cst_74 = arith.constant dense<0.000000e+00> : vector<2x8x8xf32>
    %193 = tpu.matmul %192, %182, %cst_74 {dimension_numbers = #tpu.dot_dimension_numbers<[2], [1], [1], [2], [0, 0, 0, 1, 1, 2], [0], [0]>} : vector<2x8x8xf32>, vector<2x8x8xf32>, vector<2x8x8xf32> -> vector<2x8x8xf32>
    "tpu.trace_stop"() : () -> ()
    %c256 = arith.constant 256 : index
    %c0_75 = arith.constant 0 : index
    %194 = vector.load %arg2[%c256, %c0_75] : memref<384x64xf32, #tpu.memory_space<vmem>>, vector<8x32xf32>
    %195 = vector.shape_cast %193 : vector<2x8x8xf32> to vector<16x8xf32>
    %cst_76 = arith.constant dense<0.000000e+00> : vector<16x32xf32>
    %196 = tpu.matmul %195, %194, %cst_76 {dimension_numbers = #tpu.dot_dimension_numbers<[1], [0], [0], [1], [0, 0, 1, 1], [], []>} : vector<16x8xf32>, vector<8x32xf32>, vector<16x32xf32> -> vector<16x32xf32>
    %197 = vector.broadcast %163 : vector<1x32xf32> to vector<16x32xf32>
    %198 = arith.addf %197, %196 : vector<16x32xf32>
    %199 = vector.extract_strided_slice %173 {offsets = [0, 8], sizes = [16, 8], strides = [1, 1]} : vector<16x64xf32> to vector<16x8xf32>
    %200 = vector.shape_cast %199 : vector<16x8xf32> to vector<2x8x8xf32>
    %201 = vector.extract_strided_slice %173 {offsets = [0, 40], sizes = [16, 8], strides = [1, 1]} : vector<16x64xf32> to vector<16x8xf32>
    %202 = vector.shape_cast %201 : vector<16x8xf32> to vector<2x8x8xf32>
    %203 = vector.extract_strided_slice %176 {offsets = [0, 8], sizes = [16, 8], strides = [1, 1]} : vector<16x32xf32> to vector<16x8xf32>
    %204 = vector.shape_cast %203 : vector<16x8xf32> to vector<2x8x8xf32>
    "tpu.trace_start"() <{level = 10 : i32, message = "bqd,bkd->bqk"}> : () -> ()
    %cst_77 = arith.constant dense<0.000000e+00> : vector<2x8x8xf32>
    %205 = tpu.matmul %200, %202, %cst_77 {dimension_numbers = #tpu.dot_dimension_numbers<[2], [2], [1], [1], [0, 0, 0, 1, 1, 1], [0], [0]>} : vector<2x8x8xf32>, vector<2x8x8xf32>, vector<2x8x8xf32> -> vector<2x8x8xf32>
    "tpu.trace_stop"() : () -> ()
    %cst_78 = arith.constant dense<0xFF800000> : vector<2x8xf32>
    %206 = vector.multi_reduction <maximumf>, %205, %cst_78 [2] : vector<2x8x8xf32> to vector<2x8xf32>
    %207 = vector.shape_cast %206 : vector<2x8xf32> to vector<2x8x1xf32>
    %208 = vector.broadcast %207 : vector<2x8x1xf32> to vector<2x8x8xf32>
    %209 = arith.subf %205, %208 : vector<2x8x8xf32>
    %210 = math.exp %209 : vector<2x8x8xf32>
    %cst_79 = arith.constant dense<0.000000e+00> : vector<2x8xf32>
    %211 = vector.multi_reduction <add>, %210, %cst_79 [2] : vector<2x8x8xf32> to vector<2x8xf32>
    %212 = vector.shape_cast %211 : vector<2x8xf32> to vector<2x8x1xf32>
    %213 = vector.broadcast %212 : vector<2x8x1xf32> to vector<2x8x8xf32>
    %214 = arith.divf %210, %213 : vector<2x8x8xf32>
    "tpu.trace_start"() <{level = 10 : i32, message = "bqk,bkd->bqd"}> : () -> ()
    %cst_80 = arith.constant dense<0.000000e+00> : vector<2x8x8xf32>
    %215 = tpu.matmul %214, %204, %cst_80 {dimension_numbers = #tpu.dot_dimension_numbers<[2], [1], [1], [2], [0, 0, 0, 1, 1, 2], [0], [0]>} : vector<2x8x8xf32>, vector<2x8x8xf32>, vector<2x8x8xf32> -> vector<2x8x8xf32>
    "tpu.trace_stop"() : () -> ()
    %c264 = arith.constant 264 : index
    %c0_81 = arith.constant 0 : index
    %216 = vector.load %arg2[%c264, %c0_81] : memref<384x64xf32, #tpu.memory_space<vmem>>, vector<8x32xf32>
    %217 = vector.shape_cast %215 : vector<2x8x8xf32> to vector<16x8xf32>
    %cst_82 = arith.constant dense<0.000000e+00> : vector<16x32xf32>
    %218 = tpu.matmul %217, %216, %cst_82 {dimension_numbers = #tpu.dot_dimension_numbers<[1], [0], [0], [1], [0, 0, 1, 1], [], []>} : vector<16x8xf32>, vector<8x32xf32>, vector<16x32xf32> -> vector<16x32xf32>
    %219 = arith.addf %198, %218 : vector<16x32xf32>
    %220 = vector.extract_strided_slice %173 {offsets = [0, 16], sizes = [16, 8], strides = [1, 1]} : vector<16x64xf32> to vector<16x8xf32>
    %221 = vector.shape_cast %220 : vector<16x8xf32> to vector<2x8x8xf32>
    %222 = vector.extract_strided_slice %173 {offsets = [0, 48], sizes = [16, 8], strides = [1, 1]} : vector<16x64xf32> to vector<16x8xf32>
    %223 = vector.shape_cast %222 : vector<16x8xf32> to vector<2x8x8xf32>
    %224 = vector.extract_strided_slice %176 {offsets = [0, 16], sizes = [16, 8], strides = [1, 1]} : vector<16x32xf32> to vector<16x8xf32>
    %225 = vector.shape_cast %224 : vector<16x8xf32> to vector<2x8x8xf32>
    "tpu.trace_start"() <{level = 10 : i32, message = "bqd,bkd->bqk"}> : () -> ()
    %cst_83 = arith.constant dense<0.000000e+00> : vector<2x8x8xf32>
    %226 = tpu.matmul %221, %223, %cst_83 {dimension_numbers = #tpu.dot_dimension_numbers<[2], [2], [1], [1], [0, 0, 0, 1, 1, 1], [0], [0]>} : vector<2x8x8xf32>, vector<2x8x8xf32>, vector<2x8x8xf32> -> vector<2x8x8xf32>
    "tpu.trace_stop"() : () -> ()
    %cst_84 = arith.constant dense<0xFF800000> : vector<2x8xf32>
    %227 = vector.multi_reduction <maximumf>, %226, %cst_84 [2] : vector<2x8x8xf32> to vector<2x8xf32>
    %228 = vector.shape_cast %227 : vector<2x8xf32> to vector<2x8x1xf32>
    %229 = vector.broadcast %228 : vector<2x8x1xf32> to vector<2x8x8xf32>
    %230 = arith.subf %226, %229 : vector<2x8x8xf32>
    %231 = math.exp %230 : vector<2x8x8xf32>
    %cst_85 = arith.constant dense<0.000000e+00> : vector<2x8xf32>
    %232 = vector.multi_reduction <add>, %231, %cst_85 [2] : vector<2x8x8xf32> to vector<2x8xf32>
    %233 = vector.shape_cast %232 : vector<2x8xf32> to vector<2x8x1xf32>
    %234 = vector.broadcast %233 : vector<2x8x1xf32> to vector<2x8x8xf32>
    %235 = arith.divf %231, %234 : vector<2x8x8xf32>
    "tpu.trace_start"() <{level = 10 : i32, message = "bqk,bkd->bqd"}> : () -> ()
    %cst_86 = arith.constant dense<0.000000e+00> : vector<2x8x8xf32>
    %236 = tpu.matmul %235, %225, %cst_86 {dimension_numbers = #tpu.dot_dimension_numbers<[2], [1], [1], [2], [0, 0, 0, 1, 1, 2], [0], [0]>} : vector<2x8x8xf32>, vector<2x8x8xf32>, vector<2x8x8xf32> -> vector<2x8x8xf32>
    "tpu.trace_stop"() : () -> ()
    %c272 = arith.constant 272 : index
    %c0_87 = arith.constant 0 : index
    %237 = vector.load %arg2[%c272, %c0_87] : memref<384x64xf32, #tpu.memory_space<vmem>>, vector<8x32xf32>
    %238 = vector.shape_cast %236 : vector<2x8x8xf32> to vector<16x8xf32>
    %cst_88 = arith.constant dense<0.000000e+00> : vector<16x32xf32>
    %239 = tpu.matmul %238, %237, %cst_88 {dimension_numbers = #tpu.dot_dimension_numbers<[1], [0], [0], [1], [0, 0, 1, 1], [], []>} : vector<16x8xf32>, vector<8x32xf32>, vector<16x32xf32> -> vector<16x32xf32>
    %240 = arith.addf %219, %239 : vector<16x32xf32>
    %241 = vector.extract_strided_slice %173 {offsets = [0, 24], sizes = [16, 8], strides = [1, 1]} : vector<16x64xf32> to vector<16x8xf32>
    %242 = vector.shape_cast %241 : vector<16x8xf32> to vector<2x8x8xf32>
    %243 = vector.extract_strided_slice %173 {offsets = [0, 56], sizes = [16, 8], strides = [1, 1]} : vector<16x64xf32> to vector<16x8xf32>
    %244 = vector.shape_cast %243 : vector<16x8xf32> to vector<2x8x8xf32>
    %245 = vector.extract_strided_slice %176 {offsets = [0, 24], sizes = [16, 8], strides = [1, 1]} : vector<16x32xf32> to vector<16x8xf32>
    %246 = vector.shape_cast %245 : vector<16x8xf32> to vector<2x8x8xf32>
    "tpu.trace_start"() <{level = 10 : i32, message = "bqd,bkd->bqk"}> : () -> ()
    %cst_89 = arith.constant dense<0.000000e+00> : vector<2x8x8xf32>
    %247 = tpu.matmul %242, %244, %cst_89 {dimension_numbers = #tpu.dot_dimension_numbers<[2], [2], [1], [1], [0, 0, 0, 1, 1, 1], [0], [0]>} : vector<2x8x8xf32>, vector<2x8x8xf32>, vector<2x8x8xf32> -> vector<2x8x8xf32>
    "tpu.trace_stop"() : () -> ()
    %cst_90 = arith.constant dense<0xFF800000> : vector<2x8xf32>
    %248 = vector.multi_reduction <maximumf>, %247, %cst_90 [2] : vector<2x8x8xf32> to vector<2x8xf32>
    %249 = vector.shape_cast %248 : vector<2x8xf32> to vector<2x8x1xf32>
    %250 = vector.broadcast %249 : vector<2x8x1xf32> to vector<2x8x8xf32>
    %251 = arith.subf %247, %250 : vector<2x8x8xf32>
    %252 = math.exp %251 : vector<2x8x8xf32>
    %cst_91 = arith.constant dense<0.000000e+00> : vector<2x8xf32>
    %253 = vector.multi_reduction <add>, %252, %cst_91 [2] : vector<2x8x8xf32> to vector<2x8xf32>
    %254 = vector.shape_cast %253 : vector<2x8xf32> to vector<2x8x1xf32>
    %255 = vector.broadcast %254 : vector<2x8x1xf32> to vector<2x8x8xf32>
    %256 = arith.divf %252, %255 : vector<2x8x8xf32>
    "tpu.trace_start"() <{level = 10 : i32, message = "bqk,bkd->bqd"}> : () -> ()
    %cst_92 = arith.constant dense<0.000000e+00> : vector<2x8x8xf32>
    %257 = tpu.matmul %256, %246, %cst_92 {dimension_numbers = #tpu.dot_dimension_numbers<[2], [1], [1], [2], [0, 0, 0, 1, 1, 2], [0], [0]>} : vector<2x8x8xf32>, vector<2x8x8xf32>, vector<2x8x8xf32> -> vector<2x8x8xf32>
    "tpu.trace_stop"() : () -> ()
    %c280 = arith.constant 280 : index
    %c0_93 = arith.constant 0 : index
    %258 = vector.load %arg2[%c280, %c0_93] : memref<384x64xf32, #tpu.memory_space<vmem>>, vector<8x32xf32>
    %259 = vector.shape_cast %257 : vector<2x8x8xf32> to vector<16x8xf32>
    %cst_94 = arith.constant dense<0.000000e+00> : vector<16x32xf32>
    %260 = tpu.matmul %259, %258, %cst_94 {dimension_numbers = #tpu.dot_dimension_numbers<[1], [0], [0], [1], [0, 0, 1, 1], [], []>} : vector<16x8xf32>, vector<8x32xf32>, vector<16x32xf32> -> vector<16x32xf32>
    %261 = arith.addf %240, %260 : vector<16x32xf32>
    %262 = arith.addf %156, %261 : vector<16x32xf32>
    %cst_95 = arith.constant dense<0.000000e+00> : vector<16xf32>
    %263 = vector.multi_reduction <add>, %262, %cst_95 [1] : vector<16x32xf32> to vector<16xf32>
    %264 = vector.shape_cast %263 : vector<16xf32> to vector<16x1xf32>
    %cst_96 = arith.constant 3.200000e+01 : f32
    %265 = vector.broadcast %cst_96 : f32 to vector<16x1xf32>
    %266 = arith.divf %264, %265 : vector<16x1xf32>
    %267 = vector.broadcast %266 : vector<16x1xf32> to vector<16x32xf32>
    %268 = arith.subf %262, %267 : vector<16x32xf32>
    %269 = arith.mulf %268, %268 : vector<16x32xf32>
    %cst_97 = arith.constant dense<0.000000e+00> : vector<16xf32>
    %270 = vector.multi_reduction <add>, %269, %cst_97 [1] : vector<16x32xf32> to vector<16xf32>
    %271 = vector.shape_cast %270 : vector<16xf32> to vector<16x1xf32>
    %cst_98 = arith.constant 3.200000e+01 : f32
    %272 = vector.broadcast %cst_98 : f32 to vector<16x1xf32>
    %273 = arith.divf %271, %272 : vector<16x1xf32>
    %cst_99 = arith.constant 9.99999974E-6 : f32
    %274 = vector.broadcast %cst_99 : f32 to vector<16x1xf32>
    %275 = arith.addf %273, %274 : vector<16x1xf32>
    %276 = math.rsqrt %275 : vector<16x1xf32>
    %277 = vector.broadcast %276 : vector<16x1xf32> to vector<16x32xf32>
    %278 = arith.mulf %268, %277 : vector<16x32xf32>
    %279 = vector.broadcast %166 : vector<1x32xf32> to vector<16x32xf32>
    %280 = arith.mulf %278, %279 : vector<16x32xf32>
    %281 = vector.broadcast %167 : vector<1x32xf32> to vector<16x32xf32>
    %282 = arith.addf %280, %281 : vector<16x32xf32>
    %cst_100 = arith.constant dense<0.000000e+00> : vector<16x64xf32>
    %283 = tpu.matmul %282, %159, %cst_100 {dimension_numbers = #tpu.dot_dimension_numbers<[1], [0], [0], [1], [0, 0, 1, 1], [], []>} : vector<16x32xf32>, vector<32x64xf32>, vector<16x64xf32> -> vector<16x64xf32>
    %284 = vector.broadcast %164 : vector<1x64xf32> to vector<16x64xf32>
    %285 = arith.addf %283, %284 : vector<16x64xf32>
    %cst_101 = arith.constant 0.000000e+00 : f32
    %286 = vector.broadcast %cst_101 : f32 to vector<16x64xf32>
    %287 = arith.maximumf %285, %286 : vector<16x64xf32>
    %cst_102 = arith.constant dense<0.000000e+00> : vector<16x32xf32>
    %288 = tpu.matmul %287, %160, %cst_102 {dimension_numbers = #tpu.dot_dimension_numbers<[1], [0], [0], [1], [0, 0, 1, 1], [], []>} : vector<16x64xf32>, vector<64x32xf32>, vector<16x32xf32> -> vector<16x32xf32>
    %289 = vector.broadcast %165 : vector<1x32xf32> to vector<16x32xf32>
    %290 = arith.addf %288, %289 : vector<16x32xf32>
    %291 = arith.addf %282, %290 : vector<16x32xf32>
    %cst_103 = arith.constant dense<0.000000e+00> : vector<16xf32>
    %292 = vector.multi_reduction <add>, %291, %cst_103 [1] : vector<16x32xf32> to vector<16xf32>
    %293 = vector.shape_cast %292 : vector<16xf32> to vector<16x1xf32>
    %cst_104 = arith.constant 3.200000e+01 : f32
    %294 = vector.broadcast %cst_104 : f32 to vector<16x1xf32>
    %295 = arith.divf %293, %294 : vector<16x1xf32>
    %296 = vector.broadcast %295 : vector<16x1xf32> to vector<16x32xf32>
    %297 = arith.subf %291, %296 : vector<16x32xf32>
    %298 = arith.mulf %297, %297 : vector<16x32xf32>
    %cst_105 = arith.constant dense<0.000000e+00> : vector<16xf32>
    %299 = vector.multi_reduction <add>, %298, %cst_105 [1] : vector<16x32xf32> to vector<16xf32>
    %300 = vector.shape_cast %299 : vector<16xf32> to vector<16x1xf32>
    %cst_106 = arith.constant 3.200000e+01 : f32
    %301 = vector.broadcast %cst_106 : f32 to vector<16x1xf32>
    %302 = arith.divf %300, %301 : vector<16x1xf32>
    %cst_107 = arith.constant 9.99999974E-6 : f32
    %303 = vector.broadcast %cst_107 : f32 to vector<16x1xf32>
    %304 = arith.addf %302, %303 : vector<16x1xf32>
    %305 = math.rsqrt %304 : vector<16x1xf32>
    %306 = vector.broadcast %305 : vector<16x1xf32> to vector<16x32xf32>
    %307 = arith.mulf %297, %306 : vector<16x32xf32>
    %308 = vector.broadcast %168 : vector<1x32xf32> to vector<16x32xf32>
    %309 = arith.mulf %307, %308 : vector<16x32xf32>
    %310 = vector.broadcast %169 : vector<1x32xf32> to vector<16x32xf32>
    %311 = arith.addf %309, %310 : vector<16x32xf32>
    %c18 = arith.constant 18 : index
    %c0_108 = arith.constant 0 : index
    %312 = vector.load %arg3[%c18, %c0_108] : memref<20x64xf32, #tpu.memory_space<vmem>>, vector<1x32xf32>
    %c19 = arith.constant 19 : index
    %c0_109 = arith.constant 0 : index
    %313 = vector.load %arg3[%c19, %c0_109] : memref<20x64xf32, #tpu.memory_space<vmem>>, vector<1x32xf32>
    %cst_110 = arith.constant dense<0.000000e+00> : vector<16xf32>
    %314 = vector.multi_reduction <add>, %311, %cst_110 [1] : vector<16x32xf32> to vector<16xf32>
    %315 = vector.shape_cast %314 : vector<16xf32> to vector<16x1xf32>
    %cst_111 = arith.constant 3.200000e+01 : f32
    %316 = vector.broadcast %cst_111 : f32 to vector<16x1xf32>
    %317 = arith.divf %315, %316 : vector<16x1xf32>
    %318 = vector.broadcast %317 : vector<16x1xf32> to vector<16x32xf32>
    %319 = arith.subf %311, %318 : vector<16x32xf32>
    %320 = arith.mulf %319, %319 : vector<16x32xf32>
    %cst_112 = arith.constant dense<0.000000e+00> : vector<16xf32>
    %321 = vector.multi_reduction <add>, %320, %cst_112 [1] : vector<16x32xf32> to vector<16xf32>
    %322 = vector.shape_cast %321 : vector<16xf32> to vector<16x1xf32>
    %cst_113 = arith.constant 3.200000e+01 : f32
    %323 = vector.broadcast %cst_113 : f32 to vector<16x1xf32>
    %324 = arith.divf %322, %323 : vector<16x1xf32>
    %cst_114 = arith.constant 9.99999974E-6 : f32
    %325 = vector.broadcast %cst_114 : f32 to vector<16x1xf32>
    %326 = arith.addf %324, %325 : vector<16x1xf32>
    %327 = math.rsqrt %326 : vector<16x1xf32>
    %328 = vector.broadcast %327 : vector<16x1xf32> to vector<16x32xf32>
    %329 = arith.mulf %319, %328 : vector<16x32xf32>
    %330 = vector.broadcast %312 : vector<1x32xf32> to vector<16x32xf32>
    %331 = arith.mulf %329, %330 : vector<16x32xf32>
    %332 = vector.broadcast %313 : vector<1x32xf32> to vector<16x32xf32>
    %333 = arith.addf %331, %332 : vector<16x32xf32>
    %c0_115 = arith.constant 0 : index
    %c0_116 = arith.constant 0 : index
    %334 = vector.load %arg4[%c0_115, %c0_116] : memref<16x32xf32, #tpu.memory_space<vmem>>, vector<16x32xf32>
    tpu.vector_store %arg4[%c0_115, %c0_116], %333 {strides = array<i32>} : memref<16x32xf32, #tpu.memory_space<vmem>>, vector<16x32xf32>,
    return
  }
}

</mosaic_0001>

<llo_original>
// kernel: encoder_forward.1
$region0: #{encoder_forward.1}
  #allocation0 [shape = 'u32[]', space=smem, size = 0x4, offset = 0x4, fixed_abs, tag = 'smem constant byte address 0x4 - core index']
  #allocation1 [shape = 'u32[144,128]{1,0:T(1,128)}', space=vmem, size = 0x12000, scoped, tag = 'internal scratch']
  %s0 = inlined_call_operand.vmem [shape: f32[16,32], index: 0, kind: input, shape index: {}]
  %s1 = inlined_call_operand.vmem [shape: f32[16,32], index: 1, kind: input, shape index: {}]
  %s2 = inlined_call_operand.vmem [shape: f32[384,64], index: 2, kind: input, shape index: {}]
  %s3 = inlined_call_operand.vmem [shape: f32[20,64], index: 3, kind: input, shape index: {}]
  %s4 = inlined_call_operand.vmem [shape: f32[16,32], index: 4, kind: output, shape index: {}]
  %s5 = sld [smem:[#allocation0]]
  $region26: #{encoder_forward.1} parent=0
    _
  %s7 = ssub.s32 1, %s5
  %s8 = scalar_select 0, %s7, %s5
  // Predicated region
  $region2: #{encoder_forward.1} parent=0 // pred_check
    _
  $region3: #{encoder_forward.1} parent=0 // pred_check_branch
    %10 = sbr.rel (0) target = $region5
  $region4: #{encoder_forward.1} parent=0 // pred_region
    _
  $region5: #{encoder_forward.1} parent=0 // pred_fallthru
    _
  // Predicated region
  $region6: #{encoder_forward.1} parent=0 // pred_check
    _
  $region7: #{encoder_forward.1} parent=0 // pred_check_branch
    %12 = sbr.rel (0) target = $region9
  $region8: #{encoder_forward.1} parent=0 // pred_region
    _
  $region9: #{encoder_forward.1} parent=0 // pred_fallthru
    _
  // Predicated region
  $region10: #{encoder_forward.1} parent=0 // pred_check
    _
  $region11: #{encoder_forward.1} parent=0 // pred_check_branch
    %14 = sbr.rel (0) target = $region13
  $region12: #{encoder_forward.1} parent=0 // pred_region
    _
  $region13: #{encoder_forward.1} parent=0 // pred_fallthru
    _
  // Predicated region
  $region14: #{encoder_forward.1} parent=0 // pred_check
    _
  $region15: #{encoder_forward.1} parent=0 // pred_check_branch
    %16 = sbr.rel (0) target = $region17
  $region16: #{encoder_forward.1} parent=0 // pred_region
    _
  $region17: #{encoder_forward.1} parent=0 // pred_fallthru
    _
  %v17 = vld [vmem:[%s0] sm:$0xff]
  %v18 = vld [vmem:[%s0 + $0x8] sm:$0xff]
  %v19 = vld [vmem:[%s1] sm:$0xff]
  %v20 = vld [vmem:[%s1 + $0x8] sm:$0xff]
  %v21 = vld [vmem:[%s2] sm:$0xff]
  %v22 = vld [vmem:[%s2 + $0x8] sm:$0xff]
  %v23 = vld [vmem:[%s2 + $0x10] sm:$0xff]
  %v24 = vld [vmem:[%s2 + $0x18] sm:$0xff]
  %v25 = vld [vmem:[%s2 + $0x20] sm:$0xff]
  %v26 = vld [vmem:[%s2 + $0x28] sm:$0xff]
  %v27 = vld [vmem:[%s2 + $0x30] sm:$0xff]
  %v28 = vld [vmem:[%s2 + $0x38] sm:$0xff]
  %v29 = vld [vmem:[%s2 + $0x60] sm:$0xff]
  %v30 = vld [vmem:[%s2 + $0x68] sm:$0xff]
  %v31 = vld [vmem:[%s2 + $0x70] sm:$0xff]
  %v32 = vld [vmem:[%s2 + $0x78] sm:$0xff]
  %v33 = vld [vmem:[%s2 + $0x80] sm:$0xff]
  %v34 = vld [vmem:[%s2 + $0x88] sm:$0xff]
  %v35 = vld [vmem:[%s2 + $0x90] sm:$0xff]
  %v36 = vld [vmem:[%s2 + $0x98] sm:$0xff]
  %v37 = vld [vmem:[%s2 + $0xa0] sm:$0xff]
  %v38 = vld [vmem:[%s2 + $0xa8] sm:$0xff]
  %v39 = vld [vmem:[%s2 + $0xb0] sm:$0xff]
  %v40 = vld [vmem:[%s2 + $0xb8] sm:$0xff]
  %v41 = vld [vmem:[%s3] sm:$0x1]
  %v42 = vld [vmem:[%s3 + $0x1] sm:$0x1]
  %v43 = vld [vmem:[%s3 + $0x2] sm:$0x1]
  %v44 = vld [vmem:[%s3 + $0x3] sm:$0x1]
  %v45 = vld [vmem:[%s3 + $0x4] sm:$0x1]
  %v46 = vld [vmem:[%s3 + $0x5] sm:$0x1]
  %v47 = vld [vmem:[%s3 + $0x6] sm:$0x1]
  %v48 = vld [vmem:[%s3 + $0x7] sm:$0x1]
  %v49 = vld [vmem:[%s3 + $0x8] sm:$0x1]
  %v50 = vadd.f32 %v17, %v19
  %v51 = vadd.f32 %v18, %v20
  %v52 = vlaneseq
  %v53 = vshrl.u32 %v52, 7
  %v54 = vsub.s32 0, %v53
  %v55 = vrot.slane %v41, %v54
  %vm56 = vcmask 261120
  %v58 = vsel %vm56, %v50, 0
  %v61 = vsel %vm56, %v51, 0
  %63 = vmatprep.subr.mxu0 0.0
  %64 = vmatpush1.msra.mxu0 %v21
  %65 = vmatprep.subr.mxu0 0.0
  %66 = vmatpush1.msra.mxu0 %v22
  %67 = vmatprep.subr.mxu0 0.0
  %68 = vmatpush1.msra.mxu0 %v23
  %69 = vmatprep.subr.mxu0 0.0
  %70 = vmatpush1.msra.mxu0 %v24
  %71 = vmatprep.subr.mxu0 0.0
  %72 = vmatpush1.msra.mxu0 0.0
  %73 = vmatprep.subr.mxu0 0.0
  %74 = vmatpush1.msra.mxu0 0.0
  %75 = vmatprep.subr.mxu0 0.0
  %76 = vmatpush1.msra.mxu0 0.0
  %77 = vmatprep.subr.mxu0 0.0
  %78 = vmatpush1.msra.mxu0 0.0
  %79 = vmatprep.subr.mxu0 0.0
  %80 = vmatpush1.msra.mxu0 0.0
  %81 = vmatprep.subr.mxu0 0.0
  %82 = vmatpush1.msra.mxu0 0.0
  %83 = vmatprep.subr.mxu0 0.0
  %84 = vmatpush1.msra.mxu0 0.0
  %85 = vmatprep.subr.mxu0 0.0
  %86 = vmatpush1.msra.mxu0 0.0
  %87 = vmatprep.subr.mxu0 0.0
  %88 = vmatpush1.msra.mxu0 0.0
  %89 = vmatprep.subr.mxu0 0.0
  %90 = vmatpush1.msra.mxu0 0.0
  %91 = vmatprep.subr.mxu0 0.0
  %92 = vmatpush1.msra.mxu0 0.0
  %93 = vmatprep.subr.mxu0 0.0
  %94 = vmatpush1.msra.mxu0 0.0
  %95 = vmatprep.subr.mxu0 0.0
  %96 = vmatpush1.msra.mxu0 0.0
  %97 = vmatprep.subr.mxu0 0.0
  %98 = vmatpush1.msra.mxu0 0.0
  %99 = vmatprep.subr.mxu0 0.0
  %100 = vmatpush1.msra.mxu0 0.0
  %101 = vmatprep.subr.mxu0 0.0
  %102 = vmatpush1.msra.mxu0 0.0
  %103 = vmatprep.subr.mxu0 0.0
  %104 = vmatpush1.msra.mxu0 0.0
  %105 = vmatprep.subr.mxu0 0.0
  %106 = vmatpush1.msra.mxu0 0.0
  %107 = vmatprep.subr.mxu0 0.0
  %108 = vmatpush1.msra.mxu0 0.0
  %109 = vmatprep.subr.mxu0 0.0
  %110 = vmatpush1.msra.mxu0 0.0
  %111 = vmatprep.subr.mxu0 0.0
  %112 = vmatpush1.msra.mxu0 0.0
  %113 = vmatprep.subr.mxu0 0.0
  %114 = vmatpush1.msra.mxu0 0.0
  %115 = vmatprep.subr.mxu0 0.0
  %116 = vmatpush1.msra.mxu0 0.0
  %117 = vmatprep.subr.mxu0 0.0
  %118 = vmatpush1.msra.mxu0 0.0
  %119 = vmatprep.subr.mxu0 0.0
  %120 = vmatpush1.msra.mxu0 0.0
  %121 = vmatprep.subr.mxu0 0.0
  %122 = vmatpush1.msra.mxu0 0.0
  %123 = vmatprep.subr.mxu0 0.0
  %124 = vmatpush1.msra.mxu0 0.0
  %125 = vmatprep.subr.mxu0 0.0
  %126 = vmatpush1.msra.mxu0 0.0
  %127 = vmatprep.mubr.f32.mxu0 0.0
  %128 = vmatmul.mubr.f32.gmra.mrb[0].mxu0 %v58
  %v129 = vpop.f32.mrb[0].mxu0
  %v130 = vadd.f32 %v55, %v129
  %v131 = vpop.f32.mrb[0].mxu0
  %132 = vmatprep.mubr.f32.mxu0 0.0
  %133 = vmatmul.mubr.f32.gmra.mrb[0].mxu0 %v61
  %v134 = vpop.f32.mrb[0].mxu0
  %v135 = vadd.f32 %v55, %v134
  %v136 = vpop.f32.mrb[0].mxu0
  %137 = vdwg.mxu0
  %v138 = vlaneseq
  %v139 = vshrl.u32 %v138, 7
  %v140 = vsub.s32 0, %v139
  %v141 = vrot.slane %v42, %v140
  %v143 = vsel %vm56, %v17, 0
  %v146 = vsel %vm56, %v18, 0
  %148 = vmatprep.subr.mxu0 0.0
  %149 = vmatpush1.msra.mxu0 %v25
  %150 = vmatprep.subr.mxu0 0.0
  %151 = vmatpush1.msra.mxu0 %v26
  %152 = vmatprep.subr.mxu0 0.0
  %153 = vmatpush1.msra.mxu0 %v27
  %154 = vmatprep.subr.mxu0 0.0
  %155 = vmatpush1.msra.mxu0 %v28
  %156 = vmatprep.subr.mxu0 0.0
  %157 = vmatpush1.msra.mxu0 0.0
  %158 = vmatprep.subr.mxu0 0.0
  %159 = vmatpush1.msra.mxu0 0.0
  %160 = vmatprep.subr.mxu0 0.0
  %161 = vmatpush1.msra.mxu0 0.0
  %162 = vmatprep.subr.mxu0 0.0
  %163 = vmatpush1.msra.mxu0 0.0
  %164 = vmatprep.subr.mxu0 0.0
  %165 = vmatpush1.msra.mxu0 0.0
  %166 = vmatprep.subr.mxu0 0.0
  %167 = vmatpush1.msra.mxu0 0.0
  %168 = vmatprep.subr.mxu0 0.0
  %169 = vmatpush1.msra.mxu0 0.0
  %170 = vmatprep.subr.mxu0 0.0
  %171 = vmatpush1.msra.mxu0 0.0
  %172 = vmatprep.subr.mxu0 0.0
  %173 = vmatpush1.msra.mxu0 0.0
  %174 = vmatprep.subr.mxu0 0.0
  %175 = vmatpush1.msra.mxu0 0.0
  %176 = vmatprep.subr.mxu0 0.0
  %177 = vmatpush1.msra.mxu0 0.0
  %178 = vmatprep.subr.mxu0 0.0
  %179 = vmatpush1.msra.mxu0 0.0
  %180 = vmatprep.subr.mxu0 0.0
  %181 = vmatpush1.msra.mxu0 0.0
  %182 = vmatprep.subr.mxu0 0.0
  %183 = vmatpush1.msra.mxu0 0.0
  %184 = vmatprep.subr.mxu0 0.0
  %185 = vmatpush1.msra.mxu0 0.0
  %186 = vmatprep.subr.mxu0 0.0
  %187 = vmatpush1.msra.mxu0 0.0
  %188 = vmatprep.subr.mxu0 0.0
  %189 = vmatpush1.msra.mxu0 0.0
  %190 = vmatprep.subr.mxu0 0.0
  %191 = vmatpush1.msra.mxu0 0.0
  %192 = vmatprep.subr.mxu0 0.0
  %193 = vmatpush1.msra.mxu0 0.0
  %194 = vmatprep.subr.mxu0 0.0
  %195 = vmatpush1.msra.mxu0 0.0
  %196 = vmatprep.subr.mxu0 0.0
  %197 = vmatpush1.msra.mxu0 0.0
  %198 = vmatprep.subr.mxu0 0.0
  %199 = vmatpush1.msra.mxu0 0.0
  %200 = vmatprep.subr.mxu0 0.0
  %201 = vmatpush1.msra.mxu0 0.0
  %202 = vmatprep.subr.mxu0 0.0
  %203 = vmatpush1.msra.mxu0 0.0
  %204 = vmatprep.subr.mxu0 0.0
  %205 = vmatpush1.msra.mxu0 0.0
  %206 = vmatprep.subr.mxu0 0.0
  %207 = vmatpush1.msra.mxu0 0.0
  %208 = vmatprep.subr.mxu0 0.0
  %209 = vmatpush1.msra.mxu0 0.0
  %210 = vmatprep.subr.mxu0 0.0
  %211 = vmatpush1.msra.mxu0 0.0
  %212 = vmatprep.mubr.f32.mxu0 0.0
  %213 = vmatmul.mubr.f32.gmra.mrb[0].mxu0 %v143
  %v214 = vpop.f32.mrb[0].mxu0
  %v215 = vadd.f32 %v141, %v214
  %v216 = vpop.f32.mrb[0].mxu0
  %217 = vmatprep.mubr.f32.mxu0 0.0
  %218 = vmatmul.mubr.f32.gmra.mrb[0].mxu0 %v146
  %v219 = vpop.f32.mrb[0].mxu0
  %v220 = vadd.f32 %v141, %v219
  %v221 = vpop.f32.mrb[0].mxu0
  %222 = vdwg.mxu0
  %224 = vrot.lane.b32.xlu0 %v130, 96
  %v225 = vpop.permute.xlu0 %224
  %vm226 = vcmask 64512
  %v227 = vsel %vm226, %v130, 0
  %v229 = vsel %vm226, %v225, 0
  %231 = vmatprep.subr.mxu0 0.0
  %232 = vmatpush1.xpose.msra.mxu0 %v229
  %233 = vmatprep.subr.mxu0 0.0
  %234 = vmatpush1.xpose.msra.mxu0 0.0
  %235 = vmatprep.subr.mxu0 0.0
  %236 = vmatpush1.xpose.msra.mxu0 0.0
  %237 = vmatprep.subr.mxu0 0.0
  %238 = vmatpush1.xpose.msra.mxu0 0.0
  %239 = vmatprep.subr.mxu0 0.0
  %240 = vmatpush1.xpose.msra.mxu0 0.0
  %241 = vmatprep.subr.mxu0 0.0
  %242 = vmatpush1.xpose.msra.mxu0 0.0
  %243 = vmatprep.subr.mxu0 0.0
  %244 = vmatpush1.xpose.msra.mxu0 0.0
  %245 = vmatprep.subr.mxu0 0.0
  %246 = vmatpush1.xpose.msra.mxu0 0.0
  %247 = vmatprep.subr.mxu0 0.0
  %248 = vmatpush1.xpose.msra.mxu0 0.0
  %249 = vmatprep.subr.mxu0 0.0
  %250 = vmatpush1.xpose.msra.mxu0 0.0
  %251 = vmatprep.subr.mxu0 0.0
  %252 = vmatpush1.xpose.msra.mxu0 0.0
  %253 = vmatprep.subr.mxu0 0.0
  %254 = vmatpush1.xpose.msra.mxu0 0.0
  %255 = vmatprep.subr.mxu0 0.0
  %256 = vmatpush1.xpose.msra.mxu0 0.0
  %257 = vmatprep.subr.mxu0 0.0
  %258 = vmatpush1.xpose.msra.mxu0 0.0
  %259 = vmatprep.subr.mxu0 0.0
  %260 = vmatpush1.xpose.msra.mxu0 0.0
  %261 = vmatprep.subr.mxu0 0.0
  %262 = vmatpush1.xpose.msra.mxu0 0.0
  %263 = vmatprep.subr.mxu0 0.0
  %264 = vmatpush1.xpose.msra.mxu0 0.0
  %265 = vmatprep.subr.mxu0 0.0
  %266 = vmatpush1.xpose.msra.mxu0 0.0
  %267 = vmatprep.subr.mxu0 0.0
  %268 = vmatpush1.xpose.msra.mxu0 0.0
  %269 = vmatprep.subr.mxu0 0.0
  %270 = vmatpush1.xpose.msra.mxu0 0.0
  %271 = vmatprep.subr.mxu0 0.0
  %272 = vmatpush1.xpose.msra.mxu0 0.0
  %273 = vmatprep.subr.mxu0 0.0
  %274 = vmatpush1.xpose.msra.mxu0 0.0
  %275 = vmatprep.subr.mxu0 0.0
  %276 = vmatpush1.xpose.msra.mxu0 0.0
  %277 = vmatprep.subr.mxu0 0.0
  %278 = vmatpush1.xpose.msra.mxu0 0.0
  %279 = vmatprep.subr.mxu0 0.0
  %280 = vmatpush1.xpose.msra.mxu0 0.0
  %281 = vmatprep.subr.mxu0 0.0
  %282 = vmatpush1.xpose.msra.mxu0 0.0
  %283 = vmatprep.subr.mxu0 0.0
  %284 = vmatpush1.xpose.msra.mxu0 0.0
  %285 = vmatprep.subr.mxu0 0.0
  %286 = vmatpush1.xpose.msra.mxu0 0.0
  %287 = vmatprep.subr.mxu0 0.0
  %288 = vmatpush1.xpose.msra.mxu0 0.0
  %289 = vmatprep.subr.mxu0 0.0
  %290 = vmatpush1.xpose.msra.mxu0 0.0
  %291 = vmatprep.subr.mxu0 0.0
  %292 = vmatpush1.xpose.msra.mxu0 0.0
  %293 = vmatprep.subr.mxu0 0.0
  %294 = vmatpush1.xpose.msra.mxu0 0.0
  %295 = vmatprep.mubr.f32.mxu0 0.0
  %296 = vmatmul.mubr.f32.gmra.mrb[0].mxu0 %v227
  %v297 = vpop.f32.mrb[0].mxu0
  %v298 = vadd.f32 0.0, %v297
  %v299 = vpop.f32.mrb[0].mxu0
  %300 = vdwg.mxu0
  %302 = vrot.lane.b32.xlu0 %v135, 96
  %v303 = vpop.permute.xlu0 %302
  %v304 = vsel %vm226, %v135, 0
  %v306 = vsel %vm226, %v303, 0
  %308 = vmatprep.subr.mxu0 0.0
  %309 = vmatpush1.xpose.msra.mxu0 %v306
  %310 = vmatprep.subr.mxu0 0.0
  %311 = vmatpush1.xpose.msra.mxu0 0.0
  %312 = vmatprep.subr.mxu0 0.0
  %313 = vmatpush1.xpose.msra.mxu0 0.0
  %314 = vmatprep.subr.mxu0 0.0
  %315 = vmatpush1.xpose.msra.mxu0 0.0
  %316 = vmatprep.subr.mxu0 0.0
  %317 = vmatpush1.xpose.msra.mxu0 0.0
  %318 = vmatprep.subr.mxu0 0.0
  %319 = vmatpush1.xpose.msra.mxu0 0.0
  %320 = vmatprep.subr.mxu0 0.0
  %321 = vmatpush1.xpose.msra.mxu0 0.0
  %322 = vmatprep.subr.mxu0 0.0
  %323 = vmatpush1.xpose.msra.mxu0 0.0
  %324 = vmatprep.subr.mxu0 0.0
  %325 = vmatpush1.xpose.msra.mxu0 0.0
  %326 = vmatprep.subr.mxu0 0.0
  %327 = vmatpush1.xpose.msra.mxu0 0.0
  %328 = vmatprep.subr.mxu0 0.0
  %329 = vmatpush1.xpose.msra.mxu0 0.0
  %330 = vmatprep.subr.mxu0 0.0
  %331 = vmatpush1.xpose.msra.mxu0 0.0
  %332 = vmatprep.subr.mxu0 0.0
  %333 = vmatpush1.xpose.msra.mxu0 0.0
  %334 = vmatprep.subr.mxu0 0.0
  %335 = vmatpush1.xpose.msra.mxu0 0.0
  %336 = vmatprep.subr.mxu0 0.0
  %337 = vmatpush1.xpose.msra.mxu0 0.0
  %338 = vmatprep.subr.mxu0 0.0
  %339 = vmatpush1.xpose.msra.mxu0 0.0
  %340 = vmatprep.subr.mxu0 0.0
  %341 = vmatpush1.xpose.msra.mxu0 0.0
  %342 = vmatprep.subr.mxu0 0.0
  %343 = vmatpush1.xpose.msra.mxu0 0.0
  %344 = vmatprep.subr.mxu0 0.0
  %345 = vmatpush1.xpose.msra.mxu0 0.0
  %346 = vmatprep.subr.mxu0 0.0
  %347 = vmatpush1.xpose.msra.mxu0 0.0
  %348 = vmatprep.subr.mxu0 0.0
  %349 = vmatpush1.xpose.msra.mxu0 0.0
  %350 = vmatprep.subr.mxu0 0.0
  %351 = vmatpush1.xpose.msra.mxu0 0.0
  %352 = vmatprep.subr.mxu0 0.0
  %353 = vmatpush1.xpose.msra.mxu0 0.0
  %354 = vmatprep.subr.mxu0 0.0
  %355 = vmatpush1.xpose.msra.mxu0 0.0
  %356 = vmatprep.subr.mxu0 0.0
  %357 = vmatpush1.xpose.msra.mxu0 0.0
  %358 = vmatprep.subr.mxu0 0.0
  %359 = vmatpush1.xpose.msra.mxu0 0.0
  %360 = vmatprep.subr.mxu0 0.0
  %361 = vmatpush1.xpose.msra.mxu0 0.0
  %362 = vmatprep.subr.mxu0 0.0
  %363 = vmatpush1.xpose.msra.mxu0 0.0
  %364 = vmatprep.subr.mxu0 0.0
  %365 = vmatpush1.xpose.msra.mxu0 0.0
  %366 = vmatprep.subr.mxu0 0.0
  %367 = vmatpush1.xpose.msra.mxu0 0.0
  %368 = vmatprep.subr.mxu0 0.0
  %369 = vmatpush1.xpose.msra.mxu0 0.0
  %370 = vmatprep.subr.mxu0 0.0
  %371 = vmatpush1.xpose.msra.mxu0 0.0
  %372 = vmatprep.mubr.f32.mxu0 0.0
  %373 = vmatmul.mubr.f32.gmra.mrb[0].mxu0 %v304
  %v374 = vpop.f32.mrb[0].mxu0
  %v375 = vadd.f32 0.0, %v374
  %v376 = vpop.f32.mrb[0].mxu0
  %377 = vdwg.mxu0
  %v378 = vsel %vm226, %v298, -inf
  %379 = vmax.xlane.f32.xlu0 %v378
  %v380 = vpop.xlane.xlu0 %379
  %v381 = vsel %vm226, %v375, -inf
  %382 = vmax.xlane.f32.xlu0 %v381
  %v383 = vpop.xlane.xlu0 %382
  %v384 = vsub.f32 %v298, %v380
  %v385 = vsub.f32 %v375, %v383
  %v386 = vmul.f32 %v384, 1.442695
  %v387 = vpow.pop %v386
  %v388 = vmul.f32 %v385, 1.442695
  %v389 = vpow.pop %v388
  %v390 = vsel %vm226, %v387, 0.0
  %391 = vadd.xlane.f32.xlu0 %v390
  %v392 = vpop.xlane.xlu0 %391
  %v393 = vsel %vm226, %v389, 0.0
  %394 = vadd.xlane.f32.xlu0 %v393
  %v395 = vpop.xlane.xlu0 %394
  %v396 = vrcp.pop %v392
  %v397 = vmul.f32 %v387, %v396
  %v398 = vrcp.pop %v395
  %v399 = vmul.f32 %v389, %v398
  %v401 = vsel %vm226, %v397, 0
  %403 = vmatprep.subr.mxu0 0.0
  %404 = vmatpush1.msra.mxu0 %v215
  %405 = vmatprep.subr.mxu0 0.0
  %406 = vmatpush1.msra.mxu0 0.0
  %407 = vmatprep.subr.mxu0 0.0
  %408 = vmatpush1.msra.mxu0 0.0
  %409 = vmatprep.subr.mxu0 0.0
  %410 = vmatpush1.msra.mxu0 0.0
  %411 = vmatprep.subr.mxu0 0.0
  %412 = vmatpush1.msra.mxu0 0.0
  %413 = vmatprep.subr.mxu0 0.0
  %414 = vmatpush1.msra.mxu0 0.0
  %415 = vmatprep.subr.mxu0 0.0
  %416 = vmatpush1.msra.mxu0 0.0
  %417 = vmatprep.subr.mxu0 0.0
  %418 = vmatpush1.msra.mxu0 0.0
  %419 = vmatprep.subr.mxu0 0.0
  %420 = vmatpush1.msra.mxu0 0.0
  %421 = vmatprep.subr.mxu0 0.0
  %422 = vmatpush1.msra.mxu0 0.0
  %423 = vmatprep.subr.mxu0 0.0
  %424 = vmatpush1.msra.mxu0 0.0
  %425 = vmatprep.subr.mxu0 0.0
  %426 = vmatpush1.msra.mxu0 0.0
  %427 = vmatprep.subr.mxu0 0.0
  %428 = vmatpush1.msra.mxu0 0.0
  %429 = vmatprep.subr.mxu0 0.0
  %430 = vmatpush1.msra.mxu0 0.0
  %431 = vmatprep.subr.mxu0 0.0
  %432 = vmatpush1.msra.mxu0 0.0
  %433 = vmatprep.subr.mxu0 0.0
  %434 = vmatpush1.msra.mxu0 0.0
  %435 = vmatprep.subr.mxu0 0.0
  %436 = vmatpush1.msra.mxu0 0.0
  %437 = vmatprep.subr.mxu0 0.0
  %438 = vmatpush1.msra.mxu0 0.0
  %439 = vmatprep.subr.mxu0 0.0
  %440 = vmatpush1.msra.mxu0 0.0
  %441 = vmatprep.subr.mxu0 0.0
  %442 = vmatpush1.msra.mxu0 0.0
  %443 = vmatprep.subr.mxu0 0.0
  %444 = vmatpush1.msra.mxu0 0.0
  %445 = vmatprep.subr.mxu0 0.0
  %446 = vmatpush1.msra.mxu0 0.0
  %447 = vmatprep.subr.mxu0 0.0
  %448 = vmatpush1.msra.mxu0 0.0
  %449 = vmatprep.subr.mxu0 0.0
  %450 = vmatpush1.msra.mxu0 0.0
  %451 = vmatprep.subr.mxu0 0.0
  %452 = vmatpush1.msra.mxu0 0.0
  %453 = vmatprep.subr.mxu0 0.0
  %454 = vmatpush1.msra.mxu0 0.0
  %455 = vmatprep.subr.mxu0 0.0
  %456 = vmatpush1.msra.mxu0 0.0
  %457 = vmatprep.subr.mxu0 0.0
  %458 = vmatpush1.msra.mxu0 0.0
  %459 = vmatprep.subr.mxu0 0.0
  %460 = vmatpush1.msra.mxu0 0.0
  %461 = vmatprep.subr.mxu0 0.0
  %462 = vmatpush1.msra.mxu0 0.0
  %463 = vmatprep.subr.mxu0 0.0
  %464 = vmatpush1.msra.mxu0 0.0
  %465 = vmatprep.subr.mxu0 0.0
  %466 = vmatpush1.msra.mxu0 0.0
  %467 = vmatprep.mubr.f32.mxu0 0.0
  %468 = vmatmul.mubr.f32.gmra.mrb[0].mxu0 %v401
  %v469 = vpop.f32.mrb[0].mxu0
  %v470 = vadd.f32 0.0, %v469
  %v471 = vpop.f32.mrb[0].mxu0
  %472 = vdwg.mxu0
  %v474 = vsel %vm226, %v399, 0
  %476 = vmatprep.subr.mxu0 0.0
  %477 = vmatpush1.msra.mxu0 %v220
  %478 = vmatprep.subr.mxu0 0.0
  %479 = vmatpush1.msra.mxu0 0.0
  %480 = vmatprep.subr.mxu0 0.0
  %481 = vmatpush1.msra.mxu0 0.0
  %482 = vmatprep.subr.mxu0 0.0
  %483 = vmatpush1.msra.mxu0 0.0
  %484 = vmatprep.subr.mxu0 0.0
  %485 = vmatpush1.msra.mxu0 0.0
  %486 = vmatprep.subr.mxu0 0.0
  %487 = vmatpush1.msra.mxu0 0.0
  %488 = vmatprep.subr.mxu0 0.0
  %489 = vmatpush1.msra.mxu0 0.0
  %490 = vmatprep.subr.mxu0 0.0
  %491 = vmatpush1.msra.mxu0 0.0
  %492 = vmatprep.subr.mxu0 0.0
  %493 = vmatpush1.msra.mxu0 0.0
  %494 = vmatprep.subr.mxu0 0.0
  %495 = vmatpush1.msra.mxu0 0.0
  %496 = vmatprep.subr.mxu0 0.0
  %497 = vmatpush1.msra.mxu0 0.0
  %498 = vmatprep.subr.mxu0 0.0
  %499 = vmatpush1.msra.mxu0 0.0
  %500 = vmatprep.subr.mxu0 0.0
  %501 = vmatpush1.msra.mxu0 0.0
  %502 = vmatprep.subr.mxu0 0.0
  %503 = vmatpush1.msra.mxu0 0.0
  %504 = vmatprep.subr.mxu0 0.0
  %505 = vmatpush1.msra.mxu0 0.0
  %506 = vmatprep.subr.mxu0 0.0
  %507 = vmatpush1.msra.mxu0 0.0
  %508 = vmatprep.subr.mxu0 0.0
  %509 = vmatpush1.msra.mxu0 0.0
  %510 = vmatprep.subr.mxu0 0.0
  %511 = vmatpush1.msra.mxu0 0.0
  %512 = vmatprep.subr.mxu0 0.0
  %513 = vmatpush1.msra.mxu0 0.0
  %514 = vmatprep.subr.mxu0 0.0
  %515 = vmatpush1.msra.mxu0 0.0
  %516 = vmatprep.subr.mxu0 0.0
  %517 = vmatpush1.msra.mxu0 0.0
  %518 = vmatprep.subr.mxu0 0.0
  %519 = vmatpush1.msra.mxu0 0.0
  %520 = vmatprep.subr.mxu0 0.0
  %521 = vmatpush1.msra.mxu0 0.0
  %522 = vmatprep.subr.mxu0 0.0
  %523 = vmatpush1.msra.mxu0 0.0
  %524 = vmatprep.subr.mxu0 0.0
  %525 = vmatpush1.msra.mxu0 0.0
  %526 = vmatprep.subr.mxu0 0.0
  %527 = vmatpush1.msra.mxu0 0.0
  %528 = vmatprep.subr.mxu0 0.0
  %529 = vmatpush1.msra.mxu0 0.0
  %530 = vmatprep.subr.mxu0 0.0
  %531 = vmatpush1.msra.mxu0 0.0
  %532 = vmatprep.subr.mxu0 0.0
  %533 = vmatpush1.msra.mxu0 0.0
  %534 = vmatprep.subr.mxu0 0.0
  %535 = vmatpush1.msra.mxu0 0.0
  %536 = vmatprep.subr.mxu0 0.0
  %537 = vmatpush1.msra.mxu0 0.0
  %538 = vmatprep.subr.mxu0 0.0
  %539 = vmatpush1.msra.mxu0 0.0
  %540 = vmatprep.mubr.f32.mxu0 0.0
  %541 = vmatmul.mubr.f32.gmra.mrb[0].mxu0 %v474
  %v542 = vpop.f32.mrb[0].mxu0
  %v543 = vadd.f32 0.0, %v542
  %v544 = vpop.f32.mrb[0].mxu0
  %545 = vdwg.mxu0
  %v546 = vld [vmem:[%s2 + $0x40] sm:$0xff]
  %v548 = vsel %vm226, %v470, 0
  %v551 = vsel %vm226, %v543, 0
  %553 = vmatprep.subr.mxu0 0.0
  %554 = vmatpush1.msra.mxu0 %v546
  %555 = vmatprep.subr.mxu0 0.0
  %556 = vmatpush1.msra.mxu0 0.0
  %557 = vmatprep.subr.mxu0 0.0
  %558 = vmatpush1.msra.mxu0 0.0
  %559 = vmatprep.subr.mxu0 0.0
  %560 = vmatpush1.msra.mxu0 0.0
  %561 = vmatprep.subr.mxu0 0.0
  %562 = vmatpush1.msra.mxu0 0.0
  %563 = vmatprep.subr.mxu0 0.0
  %564 = vmatpush1.msra.mxu0 0.0
  %565 = vmatprep.subr.mxu0 0.0
  %566 = vmatpush1.msra.mxu0 0.0
  %567 = vmatprep.subr.mxu0 0.0
  %568 = vmatpush1.msra.mxu0 0.0
  %569 = vmatprep.subr.mxu0 0.0
  %570 = vmatpush1.msra.mxu0 0.0
  %571 = vmatprep.subr.mxu0 0.0
  %572 = vmatpush1.msra.mxu0 0.0
  %573 = vmatprep.subr.mxu0 0.0
  %574 = vmatpush1.msra.mxu0 0.0
  %575 = vmatprep.subr.mxu0 0.0
  %576 = vmatpush1.msra.mxu0 0.0
  %577 = vmatprep.subr.mxu0 0.0
  %578 = vmatpush1.msra.mxu0 0.0
  %579 = vmatprep.subr.mxu0 0.0
  %580 = vmatpush1.msra.mxu0 0.0
  %581 = vmatprep.subr.mxu0 0.0
  %582 = vmatpush1.msra.mxu0 0.0
  %583 = vmatprep.subr.mxu0 0.0
  %584 = vmatpush1.msra.mxu0 0.0
  %585 = vmatprep.subr.mxu0 0.0
  %586 = vmatpush1.msra.mxu0 0.0
  %587 = vmatprep.subr.mxu0 0.0
  %588 = vmatpush1.msra.mxu0 0.0
  %589 = vmatprep.subr.mxu0 0.0
  %590 = vmatpush1.msra.mxu0 0.0
  %591 = vmatprep.subr.mxu0 0.0
  %592 = vmatpush1.msra.mxu0 0.0
  %593 = vmatprep.subr.mxu0 0.0
  %594 = vmatpush1.msra.mxu0 0.0
  %595 = vmatprep.subr.mxu0 0.0
  %596 = vmatpush1.msra.mxu0 0.0
  %597 = vmatprep.subr.mxu0 0.0
  %598 = vmatpush1.msra.mxu0 0.0
  %599 = vmatprep.subr.mxu0 0.0
  %600 = vmatpush1.msra.mxu0 0.0
  %601 = vmatprep.subr.mxu0 0.0
  %602 = vmatpush1.msra.mxu0 0.0
  %603 = vmatprep.subr.mxu0 0.0
  %604 = vmatpush1.msra.mxu0 0.0
  %605 = vmatprep.subr.mxu0 0.0
  %606 = vmatpush1.msra.mxu0 0.0
  %607 = vmatprep.subr.mxu0 0.0
  %608 = vmatpush1.msra.mxu0 0.0
  %609 = vmatprep.subr.mxu0 0.0
  %610 = vmatpush1.msra.mxu0 0.0
  %611 = vmatprep.subr.mxu0 0.0
  %612 = vmatpush1.msra.mxu0 0.0
  %613 = vmatprep.subr.mxu0 0.0
  %614 = vmatpush1.msra.mxu0 0.0
  %615 = vmatprep.subr.mxu0 0.0
  %616 = vmatpush1.msra.mxu0 0.0
  %617 = vmatprep.mubr.f32.mxu0 0.0
  %618 = vmatmul.mubr.f32.gmra.mrb[0].mxu0 %v548
  %v619 = vpop.f32.mrb[0].mxu0
  %v620 = vadd.f32 0.0, %v619
  %v621 = vpop.f32.mrb[0].mxu0
  %622 = vmatprep.mubr.f32.mxu0 0.0
  %623 = vmatmul.mubr.f32.gmra.mrb[0].mxu0 %v551
  %v624 = vpop.f32.mrb[0].mxu0
  %v625 = vadd.f32 0.0, %v624
  %v626 = vpop.f32.mrb[0].mxu0
  %627 = vdwg.mxu0
  %v628 = vlaneseq
  %v629 = vshrl.u32 %v628, 7
  %v630 = vsub.s32 0, %v629
  %v631 = vrot.slane %v43, %v630
  %v632 = vadd.f32 %v631, %v620
  %v633 = vadd.f32 %v631, %v625
  %634 = vrot.lane.b32.xlu0 %v130, 120
  %v635 = vpop.permute.xlu0 %634
  %636 = vrot.lane.b32.xlu0 %v130, 88
  %v637 = vpop.permute.xlu0 %636
  %v638 = vsel %vm226, %v635, 0
  %v640 = vsel %vm226, %v637, 0
  %642 = vmatprep.subr.mxu0 0.0
  %643 = vmatpush1.xpose.msra.mxu0 %v640
  %644 = vmatprep.subr.mxu0 0.0
  %645 = vmatpush1.xpose.msra.mxu0 0.0
  %646 = vmatprep.subr.mxu0 0.0
  %647 = vmatpush1.xpose.msra.mxu0 0.0
  %648 = vmatprep.subr.mxu0 0.0
  %649 = vmatpush1.xpose.msra.mxu0 0.0
  %650 = vmatprep.subr.mxu0 0.0
  %651 = vmatpush1.xpose.msra.mxu0 0.0
  %652 = vmatprep.subr.mxu0 0.0
  %653 = vmatpush1.xpose.msra.mxu0 0.0
  %654 = vmatprep.subr.mxu0 0.0
  %655 = vmatpush1.xpose.msra.mxu0 0.0
  %656 = vmatprep.subr.mxu0 0.0
  %657 = vmatpush1.xpose.msra.mxu0 0.0
  %658 = vmatprep.subr.mxu0 0.0
  %659 = vmatpush1.xpose.msra.mxu0 0.0
  %660 = vmatprep.subr.mxu0 0.0
  %661 = vmatpush1.xpose.msra.mxu0 0.0
  %662 = vmatprep.subr.mxu0 0.0
  %663 = vmatpush1.xpose.msra.mxu0 0.0
  %664 = vmatprep.subr.mxu0 0.0
  %665 = vmatpush1.xpose.msra.mxu0 0.0
  %666 = vmatprep.subr.mxu0 0.0
  %667 = vmatpush1.xpose.msra.mxu0 0.0
  %668 = vmatprep.subr.mxu0 0.0
  %669 = vmatpush1.xpose.msra.mxu0 0.0
  %670 = vmatprep.subr.mxu0 0.0
  %671 = vmatpush1.xpose.msra.mxu0 0.0
  %672 = vmatprep.subr.mxu0 0.0
  %673 = vmatpush1.xpose.msra.mxu0 0.0
  %674 = vmatprep.subr.mxu0 0.0
  %675 = vmatpush1.xpose.msra.mxu0 0.0
  %676 = vmatprep.subr.mxu0 0.0
  %677 = vmatpush1.xpose.msra.mxu0 0.0
  %678 = vmatprep.subr.mxu0 0.0
  %679 = vmatpush1.xpose.msra.mxu0 0.0
  %680 = vmatprep.subr.mxu0 0.0
  %681 = vmatpush1.xpose.msra.mxu0 0.0
  %682 = vmatprep.subr.mxu0 0.0
  %683 = vmatpush1.xpose.msra.mxu0 0.0
  %684 = vmatprep.subr.mxu0 0.0
  %685 = vmatpush1.xpose.msra.mxu0 0.0
  %686 = vmatprep.subr.mxu0 0.0
  %687 = vmatpush1.xpose.msra.mxu0 0.0
  %688 = vmatprep.subr.mxu0 0.0
  %689 = vmatpush1.xpose.msra.mxu0 0.0
  %690 = vmatprep.subr.mxu0 0.0
  %691 = vmatpush1.xpose.msra.mxu0 0.0
  %692 = vmatprep.subr.mxu0 0.0
  %693 = vmatpush1.xpose.msra.mxu0 0.0
  %694 = vmatprep.subr.mxu0 0.0
  %695 = vmatpush1.xpose.msra.mxu0 0.0
  %696 = vmatprep.subr.mxu0 0.0
  %697 = vmatpush1.xpose.msra.mxu0 0.0
  %698 = vmatprep.subr.mxu0 0.0
  %699 = vmatpush1.xpose.msra.mxu0 0.0
  %700 = vmatprep.subr.mxu0 0.0
  %701 = vmatpush1.xpose.msra.mxu0 0.0
  %702 = vmatprep.subr.mxu0 0.0
  %703 = vmatpush1.xpose.msra.mxu0 0.0
  %704 = vmatprep.subr.mxu0 0.0
  %705 = vmatpush1.xpose.msra.mxu0 0.0
  %706 = vmatprep.mubr.f32.mxu0 0.0
  %707 = vmatmul.mubr.f32.gmra.mrb[0].mxu0 %v638
  %v708 = vpop.f32.mrb[0].mxu0
  %v709 = vadd.f32 0.0, %v708
  %v710 = vpop.f32.mrb[0].mxu0
  %711 = vdwg.mxu0
  %712 = vrot.lane.b32.xlu0 %v135, 120
  %v713 = vpop.permute.xlu0 %712
  %714 = vrot.lane.b32.xlu0 %v135, 88
  %v715 = vpop.permute.xlu0 %714
  %v716 = vsel %vm226, %v713, 0
  %v718 = vsel %vm226, %v715, 0
  %720 = vmatprep.subr.mxu0 0.0
  %721 = vmatpush1.xpose.msra.mxu0 %v718
  %722 = vmatprep.subr.mxu0 0.0
  %723 = vmatpush1.xpose.msra.mxu0 0.0
  %724 = vmatprep.subr.mxu0 0.0
  %725 = vmatpush1.xpose.msra.mxu0 0.0
  %726 = vmatprep.subr.mxu0 0.0
  %727 = vmatpush1.xpose.msra.mxu0 0.0
  %728 = vmatprep.subr.mxu0 0.0
  %729 = vmatpush1.xpose.msra.mxu0 0.0
  %730 = vmatprep.subr.mxu0 0.0
  %731 = vmatpush1.xpose.msra.mxu0 0.0
  %732 = vmatprep.subr.mxu0 0.0
  %733 = vmatpush1.xpose.msra.mxu0 0.0
  %734 = vmatprep.subr.mxu0 0.0
  %735 = vmatpush1.xpose.msra.mxu0 0.0
  %736 = vmatprep.subr.mxu0 0.0
  %737 = vmatpush1.xpose.msra.mxu0 0.0
  %738 = vmatprep.subr.mxu0 0.0
  %739 = vmatpush1.xpose.msra.mxu0 0.0
  %740 = vmatprep.subr.mxu0 0.0
  %741 = vmatpush1.xpose.msra.mxu0 0.0
  %742 = vmatprep.subr.mxu0 0.0
  %743 = vmatpush1.xpose.msra.mxu0 0.0
  %744 = vmatprep.subr.mxu0 0.0
  %745 = vmatpush1.xpose.msra.mxu0 0.0
  %746 = vmatprep.subr.mxu0 0.0
  %747 = vmatpush1.xpose.msra.mxu0 0.0
  %748 = vmatprep.subr.mxu0 0.0
  %749 = vmatpush1.xpose.msra.mxu0 0.0
  %750 = vmatprep.subr.mxu0 0.0
  %751 = vmatpush1.xpose.msra.mxu0 0.0
  %752 = vmatprep.subr.mxu0 0.0
  %753 = vmatpush1.xpose.msra.mxu0 0.0
  %754 = vmatprep.subr.mxu0 0.0
  %755 = vmatpush1.xpose.msra.mxu0 0.0
  %756 = vmatprep.subr.mxu0 0.0
  %757 = vmatpush1.xpose.msra.mxu0 0.0
  %758 = vmatprep.subr.mxu0 0.0
  %759 = vmatpush1.xpose.msra.mxu0 0.0
  %760 = vmatprep.subr.mxu0 0.0
  %761 = vmatpush1.xpose.msra.mxu0 0.0
  %762 = vmatprep.subr.mxu0 0.0
  %763 = vmatpush1.xpose.msra.mxu0 0.0
  %764 = vmatprep.subr.mxu0 0.0
  %765 = vmatpush1.xpose.msra.mxu0 0.0
  %766 = vmatprep.subr.mxu0 0.0
  %767 = vmatpush1.xpose.msra.mxu0 0.0
  %768 = vmatprep.subr.mxu0 0.0
  %769 = vmatpush1.xpose.msra.mxu0 0.0
  %770 = vmatprep.subr.mxu0 0.0
  %771 = vmatpush1.xpose.msra.mxu0 0.0
  %772 = vmatprep.subr.mxu0 0.0
  %773 = vmatpush1.xpose.msra.mxu0 0.0
  %774 = vmatprep.subr.mxu0 0.0
  %775 = vmatpush1.xpose.msra.mxu0 0.0
  %776 = vmatprep.subr.mxu0 0.0
  %777 = vmatpush1.xpose.msra.mxu0 0.0
  %778 = vmatprep.subr.mxu0 0.0
  %779 = vmatpush1.xpose.msra.mxu0 0.0
  %780 = vmatprep.subr.mxu0 0.0
  %781 = vmatpush1.xpose.msra.mxu0 0.0
  %782 = vmatprep.subr.mxu0 0.0
  %783 = vmatpush1.xpose.msra.mxu0 0.0
  %784 = vmatprep.mubr.f32.mxu0 0.0
  %785 = vmatmul.mubr.f32.gmra.mrb[0].mxu0 %v716
  %v786 = vpop.f32.mrb[0].mxu0
  %v787 = vadd.f32 0.0, %v786
  %v788 = vpop.f32.mrb[0].mxu0
  %789 = vdwg.mxu0
  %v790 = vsel %vm226, %v709, -inf
  %791 = vmax.xlane.f32.xlu0 %v790
  %v792 = vpop.xlane.xlu0 %791
  %v793 = vsel %vm226, %v787, -inf
  %794 = vmax.xlane.f32.xlu0 %v793
  %v795 = vpop.xlane.xlu0 %794
  %v796 = vsub.f32 %v709, %v792
  %v797 = vsub.f32 %v787, %v795
  %v798 = vmul.f32 %v796, 1.442695
  %v799 = vpow.pop %v798
  %v800 = vmul.f32 %v797, 1.442695
  %v801 = vpow.pop %v800
  %v802 = vsel %vm226, %v799, 0.0
  %803 = vadd.xlane.f32.xlu0 %v802
  %v804 = vpop.xlane.xlu0 %803
  %v805 = vsel %vm226, %v801, 0.0
  %806 = vadd.xlane.f32.xlu0 %v805
  %v807 = vpop.xlane.xlu0 %806
  %v808 = vrcp.pop %v804
  %v809 = vmul.f32 %v799, %v808
  %v810 = vrcp.pop %v807
  %v811 = vmul.f32 %v801, %v810
  %813 = vrot.lane.b32.xlu0 %v215, 120
  %v814 = vpop.permute.xlu0 %813
  %v817 = vsel %vm226, %v809, 0
  %819 = vmatprep.subr.mxu0 0.0
  %820 = vmatpush1.msra.mxu0 %v814
  %821 = vmatprep.subr.mxu0 0.0
  %822 = vmatpush1.msra.mxu0 0.0
  %823 = vmatprep.subr.mxu0 0.0
  %824 = vmatpush1.msra.mxu0 0.0
  %825 = vmatprep.subr.mxu0 0.0
  %826 = vmatpush1.msra.mxu0 0.0
  %827 = vmatprep.subr.mxu0 0.0
  %828 = vmatpush1.msra.mxu0 0.0
  %829 = vmatprep.subr.mxu0 0.0
  %830 = vmatpush1.msra.mxu0 0.0
  %831 = vmatprep.subr.mxu0 0.0
  %832 = vmatpush1.msra.mxu0 0.0
  %833 = vmatprep.subr.mxu0 0.0
  %834 = vmatpush1.msra.mxu0 0.0
  %835 = vmatprep.subr.mxu0 0.0
  %836 = vmatpush1.msra.mxu0 0.0
  %837 = vmatprep.subr.mxu0 0.0
  %838 = vmatpush1.msra.mxu0 0.0
  %839 = vmatprep.subr.mxu0 0.0
  %840 = vmatpush1.msra.mxu0 0.0
  %841 = vmatprep.subr.mxu0 0.0
  %842 = vmatpush1.msra.mxu0 0.0
  %843 = vmatprep.subr.mxu0 0.0
  %844 = vmatpush1.msra.mxu0 0.0
  %845 = vmatprep.subr.mxu0 0.0
  %846 = vmatpush1.msra.mxu0 0.0
  %847 = vmatprep.subr.mxu0 0.0
  %848 = vmatpush1.msra.mxu0 0.0
  %849 = vmatprep.subr.mxu0 0.0
  %850 = vmatpush1.msra.mxu0 0.0
  %851 = vmatprep.subr.mxu0 0.0
  %852 = vmatpush1.msra.mxu0 0.0
  %853 = vmatprep.subr.mxu0 0.0
  %854 = vmatpush1.msra.mxu0 0.0
  %855 = vmatprep.subr.mxu0 0.0
  %856 = vmatpush1.msra.mxu0 0.0
  %857 = vmatprep.subr.mxu0 0.0
  %858 = vmatpush1.msra.mxu0 0.0
  %859 = vmatprep.subr.mxu0 0.0
  %860 = vmatpush1.msra.mxu0 0.0
  %861 = vmatprep.subr.mxu0 0.0
  %862 = vmatpush1.msra.mxu0 0.0
  %863 = vmatprep.subr.mxu0 0.0
  %864 = vmatpush1.msra.mxu0 0.0
  %865 = vmatprep.subr.mxu0 0.0
  %866 = vmatpush1.msra.mxu0 0.0
  %867 = vmatprep.subr.mxu0 0.0
  %868 = vmatpush1.msra.mxu0 0.0
  %869 = vmatprep.subr.mxu0 0.0
  %870 = vmatpush1.msra.mxu0 0.0
  %871 = vmatprep.subr.mxu0 0.0
  %872 = vmatpush1.msra.mxu0 0.0
  %873 = vmatprep.subr.mxu0 0.0
  %874 = vmatpush1.msra.mxu0 0.0
  %875 = vmatprep.subr.mxu0 0.0
  %876 = vmatpush1.msra.mxu0 0.0
  %877 = vmatprep.subr.mxu0 0.0
  %878 = vmatpush1.msra.mxu0 0.0
  %879 = vmatprep.subr.mxu0 0.0
  %880 = vmatpush1.msra.mxu0 0.0
  %881 = vmatprep.subr.mxu0 0.0
  %882 = vmatpush1.msra.mxu0 0.0
  %883 = vmatprep.mubr.f32.mxu0 0.0
  %884 = vmatmul.mubr.f32.gmra.mrb[0].mxu0 %v817
  %v885 = vpop.f32.mrb[0].mxu0
  %v886 = vadd.f32 0.0, %v885
  %v887 = vpop.f32.mrb[0].mxu0
  %888 = vdwg.mxu0
  %890 = vrot.lane.b32.xlu0 %v220, 120
  %v891 = vpop.permute.xlu0 %890
  %v894 = vsel %vm226, %v811, 0
  %896 = vmatprep.subr.mxu0 0.0
  %897 = vmatpush1.msra.mxu0 %v891
  %898 = vmatprep.subr.mxu0 0.0
  %899 = vmatpush1.msra.mxu0 0.0
  %900 = vmatprep.subr.mxu0 0.0
  %901 = vmatpush1.msra.mxu0 0.0
  %902 = vmatprep.subr.mxu0 0.0
  %903 = vmatpush1.msra.mxu0 0.0
  %904 = vmatprep.subr.mxu0 0.0
  %905 = vmatpush1.msra.mxu0 0.0
  %906 = vmatprep.subr.mxu0 0.0
  %907 = vmatpush1.msra.mxu0 0.0
  %908 = vmatprep.subr.mxu0 0.0
  %909 = vmatpush1.msra.mxu0 0.0
  %910 = vmatprep.subr.mxu0 0.0
  %911 = vmatpush1.msra.mxu0 0.0
  %912 = vmatprep.subr.mxu0 0.0
  %913 = vmatpush1.msra.mxu0 0.0
  %914 = vmatprep.subr.mxu0 0.0
  %915 = vmatpush1.msra.mxu0 0.0
  %916 = vmatprep.subr.mxu0 0.0
  %917 = vmatpush1.msra.mxu0 0.0
  %918 = vmatprep.subr.mxu0 0.0
  %919 = vmatpush1.msra.mxu0 0.0
  %920 = vmatprep.subr.mxu0 0.0
  %921 = vmatpush1.msra.mxu0 0.0
  %922 = vmatprep.subr.mxu0 0.0
  %923 = vmatpush1.msra.mxu0 0.0
  %924 = vmatprep.subr.mxu0 0.0
  %925 = vmatpush1.msra.mxu0 0.0
  %926 = vmatprep.subr.mxu0 0.0
  %927 = vmatpush1.msra.mxu0 0.0
  %928 = vmatprep.subr.mxu0 0.0
  %929 = vmatpush1.msra.mxu0 0.0
  %930 = vmatprep.subr.mxu0 0.0
  %931 = vmatpush1.msra.mxu0 0.0
  %932 = vmatprep.subr.mxu0 0.0
  %933 = vmatpush1.msra.mxu0 0.0
  %934 = vmatprep.subr.mxu0 0.0
  %935 = vmatpush1.msra.mxu0 0.0
  %936 = vmatprep.subr.mxu0 0.0
  %937 = vmatpush1.msra.mxu0 0.0
  %938 = vmatprep.subr.mxu0 0.0
  %939 = vmatpush1.msra.mxu0 0.0
  %940 = vmatprep.subr.mxu0 0.0
  %941 = vmatpush1.msra.mxu0 0.0
  %942 = vmatprep.subr.mxu0 0.0
  %943 = vmatpush1.msra.mxu0 0.0
  %944 = vmatprep.subr.mxu0 0.0
  %945 = vmatpush1.msra.mxu0 0.0
  %946 = vmatprep.subr.mxu0 0.0
  %947 = vmatpush1.msra.mxu0 0.0
  %948 = vmatprep.subr.mxu0 0.0
  %949 = vmatpush1.msra.mxu0 0.0
  %950 = vmatprep.subr.mxu0 0.0
  %951 = vmatpush1.msra.mxu0 0.0
  %952 = vmatprep.subr.mxu0 0.0
  %953 = vmatpush1.msra.mxu0 0.0
  %954 = vmatprep.subr.mxu0 0.0
  %955 = vmatpush1.msra.mxu0 0.0
  %956 = vmatprep.subr.mxu0 0.0
  %957 = vmatpush1.msra.mxu0 0.0
  %958 = vmatprep.subr.mxu0 0.0
  %959 = vmatpush1.msra.mxu0 0.0
  %960 = vmatprep.mubr.f32.mxu0 0.0
  %961 = vmatmul.mubr.f32.gmra.mrb[0].mxu0 %v894
  %v962 = vpop.f32.mrb[0].mxu0
  %v963 = vadd.f32 0.0, %v962
  %v964 = vpop.f32.mrb[0].mxu0
  %965 = vdwg.mxu0
  %v966 = vld [vmem:[%s2 + $0x48] sm:$0xff]
  %v968 = vsel %vm226, %v886, 0
  %v971 = vsel %vm226, %v963, 0
  %973 = vmatprep.subr.mxu0 0.0
  %974 = vmatpush1.msra.mxu0 %v966
  %975 = vmatprep.subr.mxu0 0.0
  %976 = vmatpush1.msra.mxu0 0.0
  %977 = vmatprep.subr.mxu0 0.0
  %978 = vmatpush1.msra.mxu0 0.0
  %979 = vmatprep.subr.mxu0 0.0
  %980 = vmatpush1.msra.mxu0 0.0
  %981 = vmatprep.subr.mxu0 0.0
  %982 = vmatpush1.msra.mxu0 0.0
  %983 = vmatprep.subr.mxu0 0.0
  %984 = vmatpush1.msra.mxu0 0.0
  %985 = vmatprep.subr.mxu0 0.0
  %986 = vmatpush1.msra.mxu0 0.0
  %987 = vmatprep.subr.mxu0 0.0
  %988 = vmatpush1.msra.mxu0 0.0
  %989 = vmatprep.subr.mxu0 0.0
  %990 = vmatpush1.msra.mxu0 0.0
  %991 = vmatprep.subr.mxu0 0.0
  %992 = vmatpush1.msra.mxu0 0.0
  %993 = vmatprep.subr.mxu0 0.0
  %994 = vmatpush1.msra.mxu0 0.0
  %995 = vmatprep.subr.mxu0 0.0
  %996 = vmatpush1.msra.mxu0 0.0
  %997 = vmatprep.subr.mxu0 0.0
  %998 = vmatpush1.msra.mxu0 0.0
  %999 = vmatprep.subr.mxu0 0.0
  %1000 = vmatpush1.msra.mxu0 0.0
  %1001 = vmatprep.subr.mxu0 0.0
  %1002 = vmatpush1.msra.mxu0 0.0
  %1003 = vmatprep.subr.mxu0 0.0
  %1004 = vmatpush1.msra.mxu0 0.0
  %1005 = vmatprep.subr.mxu0 0.0
  %1006 = vmatpush1.msra.mxu0 0.0
  %1007 = vmatprep.subr.mxu0 0.0
  %1008 = vmatpush1.msra.mxu0 0.0
  %1009 = vmatprep.subr.mxu0 0.0
  %1010 = vmatpush1.msra.mxu0 0.0
  %1011 = vmatprep.subr.mxu0 0.0
  %1012 = vmatpush1.msra.mxu0 0.0
  %1013 = vmatprep.subr.mxu0 0.0
  %1014 = vmatpush1.msra.mxu0 0.0
  %1015 = vmatprep.subr.mxu0 0.0
  %1016 = vmatpush1.msra.mxu0 0.0
  %1017 = vmatprep.subr.mxu0 0.0
  %1018 = vmatpush1.msra.mxu0 0.0
  %1019 = vmatprep.subr.mxu0 0.0
  %1020 = vmatpush1.msra.mxu0 0.0
  %1021 = vmatprep.subr.mxu0 0.0
  %1022 = vmatpush1.msra.mxu0 0.0
  %1023 = vmatprep.subr.mxu0 0.0
  %1024 = vmatpush1.msra.mxu0 0.0
  %1025 = vmatprep.subr.mxu0 0.0
  %1026 = vmatpush1.msra.mxu0 0.0
  %1027 = vmatprep.subr.mxu0 0.0
  %1028 = vmatpush1.msra.mxu0 0.0
  %1029 = vmatprep.subr.mxu0 0.0
  %1030 = vmatpush1.msra.mxu0 0.0
  %1031 = vmatprep.subr.mxu0 0.0
  %1032 = vmatpush1.msra.mxu0 0.0
  %1033 = vmatprep.subr.mxu0 0.0
  %1034 = vmatpush1.msra.mxu0 0.0
  %1035 = vmatprep.subr.mxu0 0.0
  %1036 = vmatpush1.msra.mxu0 0.0
  %1037 = vmatprep.mubr.f32.mxu0 0.0
  %1038 = vmatmul.mubr.f32.gmra.mrb[0].mxu0 %v968
  %v1039 = vpop.f32.mrb[0].mxu0
  %v1040 = vadd.f32 0.0, %v1039
  %v1041 = vpop.f32.mrb[0].mxu0
  %1042 = vmatprep.mubr.f32.mxu0 0.0
  %1043 = vmatmul.mubr.f32.gmra.mrb[0].mxu0 %v971
  %v1044 = vpop.f32.mrb[0].mxu0
  %v1045 = vadd.f32 0.0, %v1044
  %v1046 = vpop.f32.mrb[0].mxu0
  %1047 = vdwg.mxu0
  %v1048 = vadd.f32 %v632, %v1040
  %v1049 = vadd.f32 %v633, %v1045
  %1050 = vrot.lane.b32.xlu0 %v130, 112
  %v1051 = vpop.permute.xlu0 %1050
  %1052 = vrot.lane.b32.xlu0 %v130, 80
  %v1053 = vpop.permute.xlu0 %1052
  %v1054 = vsel %vm226, %v1051, 0
  %v1056 = vsel %vm226, %v1053, 0
  %1058 = vmatprep.subr.mxu0 0.0
  %1059 = vmatpush1.xpose.msra.mxu0 %v1056
  %1060 = vmatprep.subr.mxu0 0.0
  %1061 = vmatpush1.xpose.msra.mxu0 0.0
  %1062 = vmatprep.subr.mxu0 0.0
  %1063 = vmatpush1.xpose.msra.mxu0 0.0
  %1064 = vmatprep.subr.mxu0 0.0
  %1065 = vmatpush1.xpose.msra.mxu0 0.0
  %1066 = vmatprep.subr.mxu0 0.0
  %1067 = vmatpush1.xpose.msra.mxu0 0.0
  %1068 = vmatprep.subr.mxu0 0.0
  %1069 = vmatpush1.xpose.msra.mxu0 0.0
  %1070 = vmatprep.subr.mxu0 0.0
  %1071 = vmatpush1.xpose.msra.mxu0 0.0
  %1072 = vmatprep.subr.mxu0 0.0
  %1073 = vmatpush1.xpose.msra.mxu0 0.0
  %1074 = vmatprep.subr.mxu0 0.0
  %1075 = vmatpush1.xpose.msra.mxu0 0.0
  %1076 = vmatprep.subr.mxu0 0.0
  %1077 = vmatpush1.xpose.msra.mxu0 0.0
  %1078 = vmatprep.subr.mxu0 0.0
  %1079 = vmatpush1.xpose.msra.mxu0 0.0
  %1080 = vmatprep.subr.mxu0 0.0
  %1081 = vmatpush1.xpose.msra.mxu0 0.0
  %1082 = vmatprep.subr.mxu0 0.0
  %1083 = vmatpush1.xpose.msra.mxu0 0.0
  %1084 = vmatprep.subr.mxu0 0.0
  %1085 = vmatpush1.xpose.msra.mxu0 0.0
  %1086 = vmatprep.subr.mxu0 0.0
  %1087 = vmatpush1.xpose.msra.mxu0 0.0
  %1088 = vmatprep.subr.mxu0 0.0
  %1089 = vmatpush1.xpose.msra.mxu0 0.0
  %1090 = vmatprep.subr.mxu0 0.0
  %1091 = vmatpush1.xpose.msra.mxu0 0.0
  %1092 = vmatprep.subr.mxu0 0.0
  %1093 = vmatpush1.xpose.msra.mxu0 0.0
  %1094 = vmatprep.subr.mxu0 0.0
  %1095 = vmatpush1.xpose.msra.mxu0 0.0
  %1096 = vmatprep.subr.mxu0 0.0
  %1097 = vmatpush1.xpose.msra.mxu0 0.0
  %1098 = vmatprep.subr.mxu0 0.0
  %1099 = vmatpush1.xpose.msra.mxu0 0.0
  %1100 = vmatprep.subr.mxu0 0.0
  %1101 = vmatpush1.xpose.msra.mxu0 0.0
  %1102 = vmatprep.subr.mxu0 0.0
  %1103 = vmatpush1.xpose.msra.mxu0 0.0
  %1104 = vmatprep.subr.mxu0 0.0
  %1105 = vmatpush1.xpose.msra.mxu0 0.0
  %1106 = vmatprep.subr.mxu0 0.0
  %1107 = vmatpush1.xpose.msra.mxu0 0.0
  %1108 = vmatprep.subr.mxu0 0.0
  %1109 = vmatpush1.xpose.msra.mxu0 0.0
  %1110 = vmatprep.subr.mxu0 0.0
  %1111 = vmatpush1.xpose.msra.mxu0 0.0
  %1112 = vmatprep.subr.mxu0 0.0
  %1113 = vmatpush1.xpose.msra.mxu0 0.0
  %1114 = vmatprep.subr.mxu0 0.0
  %1115 = vmatpush1.xpose.msra.mxu0 0.0
  %1116 = vmatprep.subr.mxu0 0.0
  %1117 = vmatpush1.xpose.msra.mxu0 0.0
  %1118 = vmatprep.subr.mxu0 0.0
  %1119 = vmatpush1.xpose.msra.mxu0 0.0
  %1120 = vmatprep.subr.mxu0 0.0
  %1121 = vmatpush1.xpose.msra.mxu0 0.0
  %1122 = vmatprep.mubr.f32.mxu0 0.0
  %1123 = vmatmul.mubr.f32.gmra.mrb[0].mxu0 %v1054
  %v1124 = vpop.f32.mrb[0].mxu0
  %v1125 = vadd.f32 0.0, %v1124
  %v1126 = vpop.f32.mrb[0].mxu0
  %1127 = vdwg.mxu0
  %1128 = vrot.lane.b32.xlu0 %v135, 112
  %v1129 = vpop.permute.xlu0 %1128
  %1130 = vrot.lane.b32.xlu0 %v135, 80
  %v1131 = vpop.permute.xlu0 %1130
  %v1132 = vsel %vm226, %v1129, 0
  %v1134 = vsel %vm226, %v1131, 0
  %1136 = vmatprep.subr.mxu0 0.0
  %1137 = vmatpush1.xpose.msra.mxu0 %v1134
  %1138 = vmatprep.subr.mxu0 0.0
  %1139 = vmatpush1.xpose.msra.mxu0 0.0
  %1140 = vmatprep.subr.mxu0 0.0
  %1141 = vmatpush1.xpose.msra.mxu0 0.0
  %1142 = vmatprep.subr.mxu0 0.0
  %1143 = vmatpush1.xpose.msra.mxu0 0.0
  %1144 = vmatprep.subr.mxu0 0.0
  %1145 = vmatpush1.xpose.msra.mxu0 0.0
  %1146 = vmatprep.subr.mxu0 0.0
  %1147 = vmatpush1.xpose.msra.mxu0 0.0
  %1148 = vmatprep.subr.mxu0 0.0
  %1149 = vmatpush1.xpose.msra.mxu0 0.0
  %1150 = vmatprep.subr.mxu0 0.0
  %1151 = vmatpush1.xpose.msra.mxu0 0.0
  %1152 = vmatprep.subr.mxu0 0.0
  %1153 = vmatpush1.xpose.msra.mxu0 0.0
  %1154 = vmatprep.subr.mxu0 0.0
  %1155 = vmatpush1.xpose.msra.mxu0 0.0
  %1156 = vmatprep.subr.mxu0 0.0
  %1157 = vmatpush1.xpose.msra.mxu0 0.0
  %1158 = vmatprep.subr.mxu0 0.0
  %1159 = vmatpush1.xpose.msra.mxu0 0.0
  %1160 = vmatprep.subr.mxu0 0.0
  %1161 = vmatpush1.xpose.msra.mxu0 0.0
  %1162 = vmatprep.subr.mxu0 0.0
  %1163 = vmatpush1.xpose.msra.mxu0 0.0
  %1164 = vmatprep.subr.mxu0 0.0
  %1165 = vmatpush1.xpose.msra.mxu0 0.0
  %1166 = vmatprep.subr.mxu0 0.0
  %1167 = vmatpush1.xpose.msra.mxu0 0.0
  %1168 = vmatprep.subr.mxu0 0.0
  %1169 = vmatpush1.xpose.msra.mxu0 0.0
  %1170 = vmatprep.subr.mxu0 0.0
  %1171 = vmatpush1.xpose.msra.mxu0 0.0
  %1172 = vmatprep.subr.mxu0 0.0
  %1173 = vmatpush1.xpose.msra.mxu0 0.0
  %1174 = vmatprep.subr.mxu0 0.0
  %1175 = vmatpush1.xpose.msra.mxu0 0.0
  %1176 = vmatprep.subr.mxu0 0.0
  %1177 = vmatpush1.xpose.msra.mxu0 0.0
  %1178 = vmatprep.subr.mxu0 0.0
  %1179 = vmatpush1.xpose.msra.mxu0 0.0
  %1180 = vmatprep.subr.mxu0 0.0
  %1181 = vmatpush1.xpose.msra.mxu0 0.0
  %1182 = vmatprep.subr.mxu0 0.0
  %1183 = vmatpush1.xpose.msra.mxu0 0.0
  %1184 = vmatprep.subr.mxu0 0.0
  %1185 = vmatpush1.xpose.msra.mxu0 0.0
  %1186 = vmatprep.subr.mxu0 0.0
  %1187 = vmatpush1.xpose.msra.mxu0 0.0
  %1188 = vmatprep.subr.mxu0 0.0
  %1189 = vmatpush1.xpose.msra.mxu0 0.0
  %1190 = vmatprep.subr.mxu0 0.0
  %1191 = vmatpush1.xpose.msra.mxu0 0.0
  %1192 = vmatprep.subr.mxu0 0.0
  %1193 = vmatpush1.xpose.msra.mxu0 0.0
  %1194 = vmatprep.subr.mxu0 0.0
  %1195 = vmatpush1.xpose.msra.mxu0 0.0
  %1196 = vmatprep.subr.mxu0 0.0
  %1197 = vmatpush1.xpose.msra.mxu0 0.0
  %1198 = vmatprep.subr.mxu0 0.0
  %1199 = vmatpush1.xpose.msra.mxu0 0.0
  %1200 = vmatprep.mubr.f32.mxu0 0.0
  %1201 = vmatmul.mubr.f32.gmra.mrb[0].mxu0 %v1132
  %v1202 = vpop.f32.mrb[0].mxu0
  %v1203 = vadd.f32 0.0, %v1202
  %v1204 = vpop.f32.mrb[0].mxu0
  %1205 = vdwg.mxu0
  %v1206 = vsel %vm226, %v1125, -inf
  %1207 = vmax.xlane.f32.xlu0 %v1206
  %v1208 = vpop.xlane.xlu0 %1207
  %v1209 = vsel %vm226, %v1203, -inf
  %1210 = vmax.xlane.f32.xlu0 %v1209
  %v1211 = vpop.xlane.xlu0 %1210
  %v1212 = vsub.f32 %v1125, %v1208
  %v1213 = vsub.f32 %v1203, %v1211
  %v1214 = vmul.f32 %v1212, 1.442695
  %v1215 = vpow.pop %v1214
  %v1216 = vmul.f32 %v1213, 1.442695
  %v1217 = vpow.pop %v1216
  %v1218 = vsel %vm226, %v1215, 0.0
  %1219 = vadd.xlane.f32.xlu0 %v1218
  %v1220 = vpop.xlane.xlu0 %1219
  %v1221 = vsel %vm226, %v1217, 0.0
  %1222 = vadd.xlane.f32.xlu0 %v1221
  %v1223 = vpop.xlane.xlu0 %1222
  %v1224 = vrcp.pop %v1220
  %v1225 = vmul.f32 %v1215, %v1224
  %v1226 = vrcp.pop %v1223
  %v1227 = vmul.f32 %v1217, %v1226
  %1228 = vrot.lane.b32.xlu0 %v215, 112
  %v1229 = vpop.permute.xlu0 %1228
  %v1232 = vsel %vm226, %v1225, 0
  %1234 = vmatprep.subr.mxu0 0.0
  %1235 = vmatpush1.msra.mxu0 %v1229
  %1236 = vmatprep.subr.mxu0 0.0
  %1237 = vmatpush1.msra.mxu0 0.0
  %1238 = vmatprep.subr.mxu0 0.0
  %1239 = vmatpush1.msra.mxu0 0.0
  %1240 = vmatprep.subr.mxu0 0.0
  %1241 = vmatpush1.msra.mxu0 0.0
  %1242 = vmatprep.subr.mxu0 0.0
  %1243 = vmatpush1.msra.mxu0 0.0
  %1244 = vmatprep.subr.mxu0 0.0
  %1245 = vmatpush1.msra.mxu0 0.0
  %1246 = vmatprep.subr.mxu0 0.0
  %1247 = vmatpush1.msra.mxu0 0.0
  %1248 = vmatprep.subr.mxu0 0.0
  %1249 = vmatpush1.msra.mxu0 0.0
  %1250 = vmatprep.subr.mxu0 0.0
  %1251 = vmatpush1.msra.mxu0 0.0
  %1252 = vmatprep.subr.mxu0 0.0
  %1253 = vmatpush1.msra.mxu0 0.0
  %1254 = vmatprep.subr.mxu0 0.0
  %1255 = vmatpush1.msra.mxu0 0.0
  %1256 = vmatprep.subr.mxu0 0.0
  %1257 = vmatpush1.msra.mxu0 0.0
  %1258 = vmatprep.subr.mxu0 0.0
  %1259 = vmatpush1.msra.mxu0 0.0
  %1260 = vmatprep.subr.mxu0 0.0
  %1261 = vmatpush1.msra.mxu0 0.0
  %1262 = vmatprep.subr.mxu0 0.0
  %1263 = vmatpush1.msra.mxu0 0.0
  %1264 = vmatprep.subr.mxu0 0.0
  %1265 = vmatpush1.msra.mxu0 0.0
  %1266 = vmatprep.subr.mxu0 0.0
  %1267 = vmatpush1.msra.mxu0 0.0
  %1268 = vmatprep.subr.mxu0 0.0
  %1269 = vmatpush1.msra.mxu0 0.0
  %1270 = vmatprep.subr.mxu0 0.0
  %1271 = vmatpush1.msra.mxu0 0.0
  %1272 = vmatprep.subr.mxu0 0.0
  %1273 = vmatpush1.msra.mxu0 0.0
  %1274 = vmatprep.subr.mxu0 0.0
  %1275 = vmatpush1.msra.mxu0 0.0
  %1276 = vmatprep.subr.mxu0 0.0
  %1277 = vmatpush1.msra.mxu0 0.0
  %1278 = vmatprep.subr.mxu0 0.0
  %1279 = vmatpush1.msra.mxu0 0.0
  %1280 = vmatprep.subr.mxu0 0.0
  %1281 = vmatpush1.msra.mxu0 0.0
  %1282 = vmatprep.subr.mxu0 0.0
  %1283 = vmatpush1.msra.mxu0 0.0
  %1284 = vmatprep.subr.mxu0 0.0
  %1285 = vmatpush1.msra.mxu0 0.0
  %1286 = vmatprep.subr.mxu0 0.0
  %1287 = vmatpush1.msra.mxu0 0.0
  %1288 = vmatprep.subr.mxu0 0.0
  %1289 = vmatpush1.msra.mxu0 0.0
  %1290 = vmatprep.subr.mxu0 0.0
  %1291 = vmatpush1.msra.mxu0 0.0
  %1292 = vmatprep.subr.mxu0 0.0
  %1293 = vmatpush1.msra.mxu0 0.0
  %1294 = vmatprep.subr.mxu0 0.0
  %1295 = vmatpush1.msra.mxu0 0.0
  %1296 = vmatprep.subr.mxu0 0.0
  %1297 = vmatpush1.msra.mxu0 0.0
  %1298 = vmatprep.mubr.f32.mxu0 0.0
  %1299 = vmatmul.mubr.f32.gmra.mrb[0].mxu0 %v1232
  %v1300 = vpop.f32.mrb[0].mxu0
  %v1301 = vadd.f32 0.0, %v1300
  %v1302 = vpop.f32.mrb[0].mxu0
  %1303 = vdwg.mxu0
  %1304 = vrot.lane.b32.xlu0 %v220, 112
  %v1305 = vpop.permute.xlu0 %1304
  %v1308 = vsel %vm226, %v1227, 0
  %1310 = vmatprep.subr.mxu0 0.0
  %1311 = vmatpush1.msra.mxu0 %v1305
  %1312 = vmatprep.subr.mxu0 0.0
  %1313 = vmatpush1.msra.mxu0 0.0
  %1314 = vmatprep.subr.mxu0 0.0
  %1315 = vmatpush1.msra.mxu0 0.0
  %1316 = vmatprep.subr.mxu0 0.0
  %1317 = vmatpush1.msra.mxu0 0.0
  %1318 = vmatprep.subr.mxu0 0.0
  %1319 = vmatpush1.msra.mxu0 0.0
  %1320 = vmatprep.subr.mxu0 0.0
  %1321 = vmatpush1.msra.mxu0 0.0
  %1322 = vmatprep.subr.mxu0 0.0
  %1323 = vmatpush1.msra.mxu0 0.0
  %1324 = vmatprep.subr.mxu0 0.0
  %1325 = vmatpush1.msra.mxu0 0.0
  %1326 = vmatprep.subr.mxu0 0.0
  %1327 = vmatpush1.msra.mxu0 0.0
  %1328 = vmatprep.subr.mxu0 0.0
  %1329 = vmatpush1.msra.mxu0 0.0
  %1330 = vmatprep.subr.mxu0 0.0
  %1331 = vmatpush1.msra.mxu0 0.0
  %1332 = vmatprep.subr.mxu0 0.0
  %1333 = vmatpush1.msra.mxu0 0.0
  %1334 = vmatprep.subr.mxu0 0.0
  %1335 = vmatpush1.msra.mxu0 0.0
  %1336 = vmatprep.subr.mxu0 0.0
  %1337 = vmatpush1.msra.mxu0 0.0
  %1338 = vmatprep.subr.mxu0 0.0
  %1339 = vmatpush1.msra.mxu0 0.0
  %1340 = vmatprep.subr.mxu0 0.0
  %1341 = vmatpush1.msra.mxu0 0.0
  %1342 = vmatprep.subr.mxu0 0.0
  %1343 = vmatpush1.msra.mxu0 0.0
  %1344 = vmatprep.subr.mxu0 0.0
  %1345 = vmatpush1.msra.mxu0 0.0
  %1346 = vmatprep.subr.mxu0 0.0
  %1347 = vmatpush1.msra.mxu0 0.0
  %1348 = vmatprep.subr.mxu0 0.0
  %1349 = vmatpush1.msra.mxu0 0.0
  %1350 = vmatprep.subr.mxu0 0.0
  %1351 = vmatpush1.msra.mxu0 0.0
  %1352 = vmatprep.subr.mxu0 0.0
  %1353 = vmatpush1.msra.mxu0 0.0
  %1354 = vmatprep.subr.mxu0 0.0
  %1355 = vmatpush1.msra.mxu0 0.0
  %1356 = vmatprep.subr.mxu0 0.0
  %1357 = vmatpush1.msra.mxu0 0.0
  %1358 = vmatprep.subr.mxu0 0.0
  %1359 = vmatpush1.msra.mxu0 0.0
  %1360 = vmatprep.subr.mxu0 0.0
  %1361 = vmatpush1.msra.mxu0 0.0
  %1362 = vmatprep.subr.mxu0 0.0
  %1363 = vmatpush1.msra.mxu0 0.0
  %1364 = vmatprep.subr.mxu0 0.0
  %1365 = vmatpush1.msra.mxu0 0.0
  %1366 = vmatprep.subr.mxu0 0.0
  %1367 = vmatpush1.msra.mxu0 0.0
  %1368 = vmatprep.subr.mxu0 0.0
  %1369 = vmatpush1.msra.mxu0 0.0
  %1370 = vmatprep.subr.mxu0 0.0
  %1371 = vmatpush1.msra.mxu0 0.0
  %1372 = vmatprep.subr.mxu0 0.0
  %1373 = vmatpush1.msra.mxu0 0.0
  %1374 = vmatprep.mubr.f32.mxu0 0.0
  %1375 = vmatmul.mubr.f32.gmra.mrb[0].mxu0 %v1308
  %v1376 = vpop.f32.mrb[0].mxu0
  %v1377 = vadd.f32 0.0, %v1376
  %v1378 = vpop.f32.mrb[0].mxu0
  %1379 = vdwg.mxu0
  %v1380 = vld [vmem:[%s2 + $0x50] sm:$0xff]
  %v1382 = vsel %vm226, %v1301, 0
  %v1385 = vsel %vm226, %v1377, 0
  %1387 = vmatprep.subr.mxu0 0.0
  %1388 = vmatpush1.msra.mxu0 %v1380
  %1389 = vmatprep.subr.mxu0 0.0
  %1390 = vmatpush1.msra.mxu0 0.0
  %1391 = vmatprep.subr.mxu0 0.0
  %1392 = vmatpush1.msra.mxu0 0.0
  %1393 = vmatprep.subr.mxu0 0.0
  %1394 = vmatpush1.msra.mxu0 0.0
  %1395 = vmatprep.subr.mxu0 0.0
  %1396 = vmatpush1.msra.mxu0 0.0
  %1397 = vmatprep.subr.mxu0 0.0
  %1398 = vmatpush1.msra.mxu0 0.0
  %1399 = vmatprep.subr.mxu0 0.0
  %1400 = vmatpush1.msra.mxu0 0.0
  %1401 = vmatprep.subr.mxu0 0.0
  %1402 = vmatpush1.msra.mxu0 0.0
  %1403 = vmatprep.subr.mxu0 0.0
  %1404 = vmatpush1.msra.mxu0 0.0
  %1405 = vmatprep.subr.mxu0 0.0
  %1406 = vmatpush1.msra.mxu0 0.0
  %1407 = vmatprep.subr.mxu0 0.0
  %1408 = vmatpush1.msra.mxu0 0.0
  %1409 = vmatprep.subr.mxu0 0.0
  %1410 = vmatpush1.msra.mxu0 0.0
  %1411 = vmatprep.subr.mxu0 0.0
  %1412 = vmatpush1.msra.mxu0 0.0
  %1413 = vmatprep.subr.mxu0 0.0
  %1414 = vmatpush1.msra.mxu0 0.0
  %1415 = vmatprep.subr.mxu0 0.0
  %1416 = vmatpush1.msra.mxu0 0.0
  %1417 = vmatprep.subr.mxu0 0.0
  %1418 = vmatpush1.msra.mxu0 0.0
  %1419 = vmatprep.subr.mxu0 0.0
  %1420 = vmatpush1.msra.mxu0 0.0
  %1421 = vmatprep.subr.mxu0 0.0
  %1422 = vmatpush1.msra.mxu0 0.0
  %1423 = vmatprep.subr.mxu0 0.0
  %1424 = vmatpush1.msra.mxu0 0.0
  %1425 = vmatprep.subr.mxu0 0.0
  %1426 = vmatpush1.msra.mxu0 0.0
  %1427 = vmatprep.subr.mxu0 0.0
  %1428 = vmatpush1.msra.mxu0 0.0
  %1429 = vmatprep.subr.mxu0 0.0
  %1430 = vmatpush1.msra.mxu0 0.0
  %1431 = vmatprep.subr.mxu0 0.0
  %1432 = vmatpush1.msra.mxu0 0.0
  %1433 = vmatprep.subr.mxu0 0.0
  %1434 = vmatpush1.msra.mxu0 0.0
  %1435 = vmatprep.subr.mxu0 0.0
  %1436 = vmatpush1.msra.mxu0 0.0
  %1437 = vmatprep.subr.mxu0 0.0
  %1438 = vmatpush1.msra.mxu0 0.0
  %1439 = vmatprep.subr.mxu0 0.0
  %1440 = vmatpush1.msra.mxu0 0.0
  %1441 = vmatprep.subr.mxu0 0.0
  %1442 = vmatpush1.msra.mxu0 0.0
  %1443 = vmatprep.subr.mxu0 0.0
  %1444 = vmatpush1.msra.mxu0 0.0
  %1445 = vmatprep.subr.mxu0 0.0
  %1446 = vmatpush1.msra.mxu0 0.0
  %1447 = vmatprep.subr.mxu0 0.0
  %1448 = vmatpush1.msra.mxu0 0.0
  %1449 = vmatprep.subr.mxu0 0.0
  %1450 = vmatpush1.msra.mxu0 0.0
  %1451 = vmatprep.mubr.f32.mxu0 0.0
  %1452 = vmatmul.mubr.f32.gmra.mrb[0].mxu0 %v1382
  %v1453 = vpop.f32.mrb[0].mxu0
  %v1454 = vadd.f32 0.0, %v1453
  %v1455 = vpop.f32.mrb[0].mxu0
  %1456 = vmatprep.mubr.f32.mxu0 0.0
  %1457 = vmatmul.mubr.f32.gmra.mrb[0].mxu0 %v1385
  %v1458 = vpop.f32.mrb[0].mxu0
  %v1459 = vadd.f32 0.0, %v1458
  %v1460 = vpop.f32.mrb[0].mxu0
  %1461 = vdwg.mxu0
  %v1462 = vadd.f32 %v1048, %v1454
  %v1463 = vadd.f32 %v1049, %v1459
  %1464 = vrot.lane.b32.xlu0 %v130, 104
  %v1465 = vpop.permute.xlu0 %1464
  %1466 = vrot.lane.b32.xlu0 %v130, 72
  %v1467 = vpop.permute.xlu0 %1466
  %v1468 = vsel %vm226, %v1465, 0
  %v1470 = vsel %vm226, %v1467, 0
  %1472 = vmatprep.subr.mxu0 0.0
  %1473 = vmatpush1.xpose.msra.mxu0 %v1470
  %1474 = vmatprep.subr.mxu0 0.0
  %1475 = vmatpush1.xpose.msra.mxu0 0.0
  %1476 = vmatprep.subr.mxu0 0.0
  %1477 = vmatpush1.xpose.msra.mxu0 0.0
  %1478 = vmatprep.subr.mxu0 0.0
  %1479 = vmatpush1.xpose.msra.mxu0 0.0
  %1480 = vmatprep.subr.mxu0 0.0
  %1481 = vmatpush1.xpose.msra.mxu0 0.0
  %1482 = vmatprep.subr.mxu0 0.0
  %1483 = vmatpush1.xpose.msra.mxu0 0.0
  %1484 = vmatprep.subr.mxu0 0.0
  %1485 = vmatpush1.xpose.msra.mxu0 0.0
  %1486 = vmatprep.subr.mxu0 0.0
  %1487 = vmatpush1.xpose.msra.mxu0 0.0
  %1488 = vmatprep.subr.mxu0 0.0
  %1489 = vmatpush1.xpose.msra.mxu0 0.0
  %1490 = vmatprep.subr.mxu0 0.0
  %1491 = vmatpush1.xpose.msra.mxu0 0.0
  %1492 = vmatprep.subr.mxu0 0.0
  %1493 = vmatpush1.xpose.msra.mxu0 0.0
  %1494 = vmatprep.subr.mxu0 0.0
  %1495 = vmatpush1.xpose.msra.mxu0 0.0
  %1496 = vmatprep.subr.mxu0 0.0
  %1497 = vmatpush1.xpose.msra.mxu0 0.0
  %1498 = vmatprep.subr.mxu0 0.0
  %1499 = vmatpush1.xpose.msra.mxu0 0.0
  %1500 = vmatprep.subr.mxu0 0.0
  %1501 = vmatpush1.xpose.msra.mxu0 0.0
  %1502 = vmatprep.subr.mxu0 0.0
  %1503 = vmatpush1.xpose.msra.mxu0 0.0
  %1504 = vmatprep.subr.mxu0 0.0
  %1505 = vmatpush1.xpose.msra.mxu0 0.0
  %1506 = vmatprep.subr.mxu0 0.0
  %1507 = vmatpush1.xpose.msra.mxu0 0.0
  %1508 = vmatprep.subr.mxu0 0.0
  %1509 = vmatpush1.xpose.msra.mxu0 0.0
  %1510 = vmatprep.subr.mxu0 0.0
  %1511 = vmatpush1.xpose.msra.mxu0 0.0
  %1512 = vmatprep.subr.mxu0 0.0
  %1513 = vmatpush1.xpose.msra.mxu0 0.0
  %1514 = vmatprep.subr.mxu0 0.0
  %1515 = vmatpush1.xpose.msra.mxu0 0.0
  %1516 = vmatprep.subr.mxu0 0.0
  %1517 = vmatpush1.xpose.msra.mxu0 0.0
  %1518 = vmatprep.subr.mxu0 0.0
  %1519 = vmatpush1.xpose.msra.mxu0 0.0
  %1520 = vmatprep.subr.mxu0 0.0
  %1521 = vmatpush1.xpose.msra.mxu0 0.0
  %1522 = vmatprep.subr.mxu0 0.0
  %1523 = vmatpush1.xpose.msra.mxu0 0.0
  %1524 = vmatprep.subr.mxu0 0.0
  %1525 = vmatpush1.xpose.msra.mxu0 0.0
  %1526 = vmatprep.subr.mxu0 0.0
  %1527 = vmatpush1.xpose.msra.mxu0 0.0
  %1528 = vmatprep.subr.mxu0 0.0
  %1529 = vmatpush1.xpose.msra.mxu0 0.0
  %1530 = vmatprep.subr.mxu0 0.0
  %1531 = vmatpush1.xpose.msra.mxu0 0.0
  %1532 = vmatprep.subr.mxu0 0.0
  %1533 = vmatpush1.xpose.msra.mxu0 0.0
  %1534 = vmatprep.subr.mxu0 0.0
  %1535 = vmatpush1.xpose.msra.mxu0 0.0
  %1536 = vmatprep.mubr.f32.mxu0 0.0
  %1537 = vmatmul.mubr.f32.gmra.mrb[0].mxu0 %v1468
  %v1538 = vpop.f32.mrb[0].mxu0
  %v1539 = vadd.f32 0.0, %v1538
  %v1540 = vpop.f32.mrb[0].mxu0
  %1541 = vdwg.mxu0
  %1542 = vrot.lane.b32.xlu0 %v135, 104
  %v1543 = vpop.permute.xlu0 %1542
  %1544 = vrot.lane.b32.xlu0 %v135, 72
  %v1545 = vpop.permute.xlu0 %1544
  %v1546 = vsel %vm226, %v1543, 0
  %v1548 = vsel %vm226, %v1545, 0
  %1550 = vmatprep.subr.mxu0 0.0
  %1551 = vmatpush1.xpose.msra.mxu0 %v1548
  %1552 = vmatprep.subr.mxu0 0.0
  %1553 = vmatpush1.xpose.msra.mxu0 0.0
  %1554 = vmatprep.subr.mxu0 0.0
  %1555 = vmatpush1.xpose.msra.mxu0 0.0
  %1556 = vmatprep.subr.mxu0 0.0
  %1557 = vmatpush1.xpose.msra.mxu0 0.0
  %1558 = vmatprep.subr.mxu0 0.0
  %1559 = vmatpush1.xpose.msra.mxu0 0.0
  %1560 = vmatprep.subr.mxu0 0.0
  %1561 = vmatpush1.xpose.msra.mxu0 0.0
  %1562 = vmatprep.subr.mxu0 0.0
  %1563 = vmatpush1.xpose.msra.mxu0 0.0
  %1564 = vmatprep.subr.mxu0 0.0
  %1565 = vmatpush1.xpose.msra.mxu0 0.0
  %1566 = vmatprep.subr.mxu0 0.0
  %1567 = vmatpush1.xpose.msra.mxu0 0.0
  %1568 = vmatprep.subr.mxu0 0.0
  %1569 = vmatpush1.xpose.msra.mxu0 0.0
  %1570 = vmatprep.subr.mxu0 0.0
  %1571 = vmatpush1.xpose.msra.mxu0 0.0
  %1572 = vmatprep.subr.mxu0 0.0
  %1573 = vmatpush1.xpose.msra.mxu0 0.0
  %1574 = vmatprep.subr.mxu0 0.0
  %1575 = vmatpush1.xpose.msra.mxu0 0.0
  %1576 = vmatprep.subr.mxu0 0.0
  %1577 = vmatpush1.xpose.msra.mxu0 0.0
  %1578 = vmatprep.subr.mxu0 0.0
  %1579 = vmatpush1.xpose.msra.mxu0 0.0
  %1580 = vmatprep.subr.mxu0 0.0
  %1581 = vmatpush1.xpose.msra.mxu0 0.0
  %1582 = vmatprep.subr.mxu0 0.0
  %1583 = vmatpush1.xpose.msra.mxu0 0.0
  %1584 = vmatprep.subr.mxu0 0.0
  %1585 = vmatpush1.xpose.msra.mxu0 0.0
  %1586 = vmatprep.subr.mxu0 0.0
  %1587 = vmatpush1.xpose.msra.mxu0 0.0
  %1588 = vmatprep.subr.mxu0 0.0
  %1589 = vmatpush1.xpose.msra.mxu0 0.0
  %1590 = vmatprep.subr.mxu0 0.0
  %1591 = vmatpush1.xpose.msra.mxu0 0.0
  %1592 = vmatprep.subr.mxu0 0.0
  %1593 = vmatpush1.xpose.msra.mxu0 0.0
  %1594 = vmatprep.subr.mxu0 0.0
  %1595 = vmatpush1.xpose.msra.mxu0 0.0
  %1596 = vmatprep.subr.mxu0 0.0
  %1597 = vmatpush1.xpose.msra.mxu0 0.0
  %1598 = vmatprep.subr.mxu0 0.0
  %1599 = vmatpush1.xpose.msra.mxu0 0.0
  %1600 = vmatprep.subr.mxu0 0.0
  %1601 = vmatpush1.xpose.msra.mxu0 0.0
  %1602 = vmatprep.subr.mxu0 0.0
  %1603 = vmatpush1.xpose.msra.mxu0 0.0
  %1604 = vmatprep.subr.mxu0 0.0
  %1605 = vmatpush1.xpose.msra.mxu0 0.0
  %1606 = vmatprep.subr.mxu0 0.0
  %1607 = vmatpush1.xpose.msra.mxu0 0.0
  %1608 = vmatprep.subr.mxu0 0.0
  %1609 = vmatpush1.xpose.msra.mxu0 0.0
  %1610 = vmatprep.subr.mxu0 0.0
  %1611 = vmatpush1.xpose.msra.mxu0 0.0
  %1612 = vmatprep.subr.mxu0 0.0
  %1613 = vmatpush1.xpose.msra.mxu0 0.0
  %1614 = vmatprep.mubr.f32.mxu0 0.0
  %1615 = vmatmul.mubr.f32.gmra.mrb[0].mxu0 %v1546
  %v1616 = vpop.f32.mrb[0].mxu0
  %v1617 = vadd.f32 0.0, %v1616
  %v1618 = vpop.f32.mrb[0].mxu0
  %1619 = vdwg.mxu0
  %v1620 = vsel %vm226, %v1539, -inf
  %1621 = vmax.xlane.f32.xlu0 %v1620
  %v1622 = vpop.xlane.xlu0 %1621
  %v1623 = vsel %vm226, %v1617, -inf
  %1624 = vmax.xlane.f32.xlu0 %v1623
  %v1625 = vpop.xlane.xlu0 %1624
  %v1626 = vsub.f32 %v1539, %v1622
  %v1627 = vsub.f32 %v1617, %v1625
  %v1628 = vmul.f32 %v1626, 1.442695
  %v1629 = vpow.pop %v1628
  %v1630 = vmul.f32 %v1627, 1.442695
  %v1631 = vpow.pop %v1630
  %v1632 = vsel %vm226, %v1629, 0.0
  %1633 = vadd.xlane.f32.xlu0 %v1632
  %v1634 = vpop.xlane.xlu0 %1633
  %v1635 = vsel %vm226, %v1631, 0.0
  %1636 = vadd.xlane.f32.xlu0 %v1635
  %v1637 = vpop.xlane.xlu0 %1636
  %v1638 = vrcp.pop %v1634
  %v1639 = vmul.f32 %v1629, %v1638
  %v1640 = vrcp.pop %v1637
  %v1641 = vmul.f32 %v1631, %v1640
  %1642 = vrot.lane.b32.xlu0 %v215, 104
  %v1643 = vpop.permute.xlu0 %1642
  %v1646 = vsel %vm226, %v1639, 0
  %1648 = vmatprep.subr.mxu0 0.0
  %1649 = vmatpush1.msra.mxu0 %v1643
  %1650 = vmatprep.subr.mxu0 0.0
  %1651 = vmatpush1.msra.mxu0 0.0
  %1652 = vmatprep.subr.mxu0 0.0
  %1653 = vmatpush1.msra.mxu0 0.0
  %1654 = vmatprep.subr.mxu0 0.0
  %1655 = vmatpush1.msra.mxu0 0.0
  %1656 = vmatprep.subr.mxu0 0.0
  %1657 = vmatpush1.msra.mxu0 0.0
  %1658 = vmatprep.subr.mxu0 0.0
  %1659 = vmatpush1.msra.mxu0 0.0
  %1660 = vmatprep.subr.mxu0 0.0
  %1661 = vmatpush1.msra.mxu0 0.0
  %1662 = vmatprep.subr.mxu0 0.0
  %1663 = vmatpush1.msra.mxu0 0.0
  %1664 = vmatprep.subr.mxu0 0.0
  %1665 = vmatpush1.msra.mxu0 0.0
  %1666 = vmatprep.subr.mxu0 0.0
  %1667 = vmatpush1.msra.mxu0 0.0
  %1668 = vmatprep.subr.mxu0 0.0
  %1669 = vmatpush1.msra.mxu0 0.0
  %1670 = vmatprep.subr.mxu0 0.0
  %1671 = vmatpush1.msra.mxu0 0.0
  %1672 = vmatprep.subr.mxu0 0.0
  %1673 = vmatpush1.msra.mxu0 0.0
  %1674 = vmatprep.subr.mxu0 0.0
  %1675 = vmatpush1.msra.mxu0 0.0
  %1676 = vmatprep.subr.mxu0 0.0
  %1677 = vmatpush1.msra.mxu0 0.0
  %1678 = vmatprep.subr.mxu0 0.0
  %1679 = vmatpush1.msra.mxu0 0.0
  %1680 = vmatprep.subr.mxu0 0.0
  %1681 = vmatpush1.msra.mxu0 0.0
  %1682 = vmatprep.subr.mxu0 0.0
  %1683 = vmatpush1.msra.mxu0 0.0
  %1684 = vmatprep.subr.mxu0 0.0
  %1685 = vmatpush1.msra.mxu0 0.0
  %1686 = vmatprep.subr.mxu0 0.0
  %1687 = vmatpush1.msra.mxu0 0.0
  %1688 = vmatprep.subr.mxu0 0.0
  %1689 = vmatpush1.msra.mxu0 0.0
  %1690 = vmatprep.subr.mxu0 0.0
  %1691 = vmatpush1.msra.mxu0 0.0
  %1692 = vmatprep.subr.mxu0 0.0
  %1693 = vmatpush1.msra.mxu0 0.0
  %1694 = vmatprep.subr.mxu0 0.0
  %1695 = vmatpush1.msra.mxu0 0.0
  %1696 = vmatprep.subr.mxu0 0.0
  %1697 = vmatpush1.msra.mxu0 0.0
  %1698 = vmatprep.subr.mxu0 0.0
  %1699 = vmatpush1.msra.mxu0 0.0
  %1700 = vmatprep.subr.mxu0 0.0
  %1701 = vmatpush1.msra.mxu0 0.0
  %1702 = vmatprep.subr.mxu0 0.0
  %1703 = vmatpush1.msra.mxu0 0.0
  %1704 = vmatprep.subr.mxu0 0.0
  %1705 = vmatpush1.msra.mxu0 0.0
  %1706 = vmatprep.subr.mxu0 0.0
  %1707 = vmatpush1.msra.mxu0 0.0
  %1708 = vmatprep.subr.mxu0 0.0
  %1709 = vmatpush1.msra.mxu0 0.0
  %1710 = vmatprep.subr.mxu0 0.0
  %1711 = vmatpush1.msra.mxu0 0.0
  %1712 = vmatprep.mubr.f32.mxu0 0.0
  %1713 = vmatmul.mubr.f32.gmra.mrb[0].mxu0 %v1646
  %v1714 = vpop.f32.mrb[0].mxu0
  %v1715 = vadd.f32 0.0, %v1714
  %v1716 = vpop.f32.mrb[0].mxu0
  %1717 = vdwg.mxu0
  %1718 = vrot.lane.b32.xlu0 %v220, 104
  %v1719 = vpop.permute.xlu0 %1718
  %v1722 = vsel %vm226, %v1641, 0
  %1724 = vmatprep.subr.mxu0 0.0
  %1725 = vmatpush1.msra.mxu0 %v1719
  %1726 = vmatprep.subr.mxu0 0.0
  %1727 = vmatpush1.msra.mxu0 0.0
  %1728 = vmatprep.subr.mxu0 0.0
  %1729 = vmatpush1.msra.mxu0 0.0
  %1730 = vmatprep.subr.mxu0 0.0
  %1731 = vmatpush1.msra.mxu0 0.0
  %1732 = vmatprep.subr.mxu0 0.0
  %1733 = vmatpush1.msra.mxu0 0.0
  %1734 = vmatprep.subr.mxu0 0.0
  %1735 = vmatpush1.msra.mxu0 0.0
  %1736 = vmatprep.subr.mxu0 0.0
  %1737 = vmatpush1.msra.mxu0 0.0
  %1738 = vmatprep.subr.mxu0 0.0
  %1739 = vmatpush1.msra.mxu0 0.0
  %1740 = vmatprep.subr.mxu0 0.0
  %1741 = vmatpush1.msra.mxu0 0.0
  %1742 = vmatprep.subr.mxu0 0.0
  %1743 = vmatpush1.msra.mxu0 0.0
  %1744 = vmatprep.subr.mxu0 0.0
  %1745 = vmatpush1.msra.mxu0 0.0
  %1746 = vmatprep.subr.mxu0 0.0
  %1747 = vmatpush1.msra.mxu0 0.0
  %1748 = vmatprep.subr.mxu0 0.0
  %1749 = vmatpush1.msra.mxu0 0.0
  %1750 = vmatprep.subr.mxu0 0.0
  %1751 = vmatpush1.msra.mxu0 0.0
  %1752 = vmatprep.subr.mxu0 0.0
  %1753 = vmatpush1.msra.mxu0 0.0
  %1754 = vmatprep.subr.mxu0 0.0
  %1755 = vmatpush1.msra.mxu0 0.0
  %1756 = vmatprep.subr.mxu0 0.0
  %1757 = vmatpush1.msra.mxu0 0.0
  %1758 = vmatprep.subr.mxu0 0.0
  %1759 = vmatpush1.msra.mxu0 0.0
  %1760 = vmatprep.subr.mxu0 0.0
  %1761 = vmatpush1.msra.mxu0 0.0
  %1762 = vmatprep.subr.mxu0 0.0
  %1763 = vmatpush1.msra.mxu0 0.0
  %1764 = vmatprep.subr.mxu0 0.0
  %1765 = vmatpush1.msra.mxu0 0.0
  %1766 = vmatprep.subr.mxu0 0.0
  %1767 = vmatpush1.msra.mxu0 0.0
  %1768 = vmatprep.subr.mxu0 0.0
  %1769 = vmatpush1.msra.mxu0 0.0
  %1770 = vmatprep.subr.mxu0 0.0
  %1771 = vmatpush1.msra.mxu0 0.0
  %1772 = vmatprep.subr.mxu0 0.0
  %1773 = vmatpush1.msra.mxu0 0.0
  %1774 = vmatprep.subr.mxu0 0.0
  %1775 = vmatpush1.msra.mxu0 0.0
  %1776 = vmatprep.subr.mxu0 0.0
  %1777 = vmatpush1.msra.mxu0 0.0
  %1778 = vmatprep.subr.mxu0 0.0
  %1779 = vmatpush1.msra.mxu0 0.0
  %1780 = vmatprep.subr.mxu0 0.0
  %1781 = vmatpush1.msra.mxu0 0.0
  %1782 = vmatprep.subr.mxu0 0.0
  %1783 = vmatpush1.msra.mxu0 0.0
  %1784 = vmatprep.subr.mxu0 0.0
  %1785 = vmatpush1.msra.mxu0 0.0
  %1786 = vmatprep.subr.mxu0 0.0
  %1787 = vmatpush1.msra.mxu0 0.0
  %1788 = vmatprep.mubr.f32.mxu0 0.0
  %1789 = vmatmul.mubr.f32.gmra.mrb[0].mxu0 %v1722
  %v1790 = vpop.f32.mrb[0].mxu0
  %v1791 = vadd.f32 0.0, %v1790
  %v1792 = vpop.f32.mrb[0].mxu0
  %1793 = vdwg.mxu0
  %v1794 = vld [vmem:[%s2 + $0x58] sm:$0xff]
  %v1796 = vsel %vm226, %v1715, 0
  %v1799 = vsel %vm226, %v1791, 0
  %1801 = vmatprep.subr.mxu0 0.0
  %1802 = vmatpush1.msra.mxu0 %v1794
  %1803 = vmatprep.subr.mxu0 0.0
  %1804 = vmatpush1.msra.mxu0 0.0
  %1805 = vmatprep.subr.mxu0 0.0
  %1806 = vmatpush1.msra.mxu0 0.0
  %1807 = vmatprep.subr.mxu0 0.0
  %1808 = vmatpush1.msra.mxu0 0.0
  %1809 = vmatprep.subr.mxu0 0.0
  %1810 = vmatpush1.msra.mxu0 0.0
  %1811 = vmatprep.subr.mxu0 0.0
  %1812 = vmatpush1.msra.mxu0 0.0
  %1813 = vmatprep.subr.mxu0 0.0
  %1814 = vmatpush1.msra.mxu0 0.0
  %1815 = vmatprep.subr.mxu0 0.0
  %1816 = vmatpush1.msra.mxu0 0.0
  %1817 = vmatprep.subr.mxu0 0.0
  %1818 = vmatpush1.msra.mxu0 0.0
  %1819 = vmatprep.subr.mxu0 0.0
  %1820 = vmatpush1.msra.mxu0 0.0
  %1821 = vmatprep.subr.mxu0 0.0
  %1822 = vmatpush1.msra.mxu0 0.0
  %1823 = vmatprep.subr.mxu0 0.0
  %1824 = vmatpush1.msra.mxu0 0.0
  %1825 = vmatprep.subr.mxu0 0.0
  %1826 = vmatpush1.msra.mxu0 0.0
  %1827 = vmatprep.subr.mxu0 0.0
  %1828 = vmatpush1.msra.mxu0 0.0
  %1829 = vmatprep.subr.mxu0 0.0
  %1830 = vmatpush1.msra.mxu0 0.0
  %1831 = vmatprep.subr.mxu0 0.0
  %1832 = vmatpush1.msra.mxu0 0.0
  %1833 = vmatprep.subr.mxu0 0.0
  %1834 = vmatpush1.msra.mxu0 0.0
  %1835 = vmatprep.subr.mxu0 0.0
  %1836 = vmatpush1.msra.mxu0 0.0
  %1837 = vmatprep.subr.mxu0 0.0
  %1838 = vmatpush1.msra.mxu0 0.0
  %1839 = vmatprep.subr.mxu0 0.0
  %1840 = vmatpush1.msra.mxu0 0.0
  %1841 = vmatprep.subr.mxu0 0.0
  %1842 = vmatpush1.msra.mxu0 0.0
  %1843 = vmatprep.subr.mxu0 0.0
  %1844 = vmatpush1.msra.mxu0 0.0
  %1845 = vmatprep.subr.mxu0 0.0
  %1846 = vmatpush1.msra.mxu0 0.0
  %1847 = vmatprep.subr.mxu0 0.0
  %1848 = vmatpush1.msra.mxu0 0.0
  %1849 = vmatprep.subr.mxu0 0.0
  %1850 = vmatpush1.msra.mxu0 0.0
  %1851 = vmatprep.subr.mxu0 0.0
  %1852 = vmatpush1.msra.mxu0 0.0
  %1853 = vmatprep.subr.mxu0 0.0
  %1854 = vmatpush1.msra.mxu0 0.0
  %1855 = vmatprep.subr.mxu0 0.0
  %1856 = vmatpush1.msra.mxu0 0.0
  %1857 = vmatprep.subr.mxu0 0.0
  %1858 = vmatpush1.msra.mxu0 0.0
  %1859 = vmatprep.subr.mxu0 0.0
  %1860 = vmatpush1.msra.mxu0 0.0
  %1861 = vmatprep.subr.mxu0 0.0
  %1862 = vmatpush1.msra.mxu0 0.0
  %1863 = vmatprep.subr.mxu0 0.0
  %1864 = vmatpush1.msra.mxu0 0.0
  %1865 = vmatprep.mubr.f32.mxu0 0.0
  %1866 = vmatmul.mubr.f32.gmra.mrb[0].mxu0 %v1796
  %v1867 = vpop.f32.mrb[0].mxu0
  %v1868 = vadd.f32 0.0, %v1867
  %v1869 = vpop.f32.mrb[0].mxu0
  %1870 = vmatprep.mubr.f32.mxu0 0.0
  %1871 = vmatmul.mubr.f32.gmra.mrb[0].mxu0 %v1799
  %v1872 = vpop.f32.mrb[0].mxu0
  %v1873 = vadd.f32 0.0, %v1872
  %v1874 = vpop.f32.mrb[0].mxu0
  %1875 = vdwg.mxu0
  %v1876 = vadd.f32 %v1462, %v1868
  %v1877 = vadd.f32 %v1463, %v1873
  %v1878 = vadd.f32 %v17, %v1876
  %v1879 = vadd.f32 %v18, %v1877
  %v1880 = vsel %vm56, %v1878, 0.0
  %1881 = vadd.xlane.f32.xlu0 %v1880
  %v1882 = vpop.xlane.xlu0 %1881
  %v1883 = vsel %vm56, %v1879, 0.0
  %1884 = vadd.xlane.f32.xlu0 %v1883
  %v1885 = vpop.xlane.xlu0 %1884
  %v1886 = vrcp.pop 32.0
  %v1887 = vmul.f32 %v1882, %v1886
  %v1888 = vmul.f32 %v1885, %v1886
  %v1889 = vsub.f32 %v1878, %v1887
  %v1890 = vsub.f32 %v1879, %v1888
  %v1891 = vmul.f32 %v1889, %v1889
  %v1892 = vmul.f32 %v1890, %v1890
  %v1893 = vsel %vm56, %v1891, 0.0
  %1894 = vadd.xlane.f32.xlu0 %v1893
  %v1895 = vpop.xlane.xlu0 %1894
  %v1896 = vsel %vm56, %v1892, 0.0
  %1897 = vadd.xlane.f32.xlu0 %v1896
  %v1898 = vpop.xlane.xlu0 %1897
  %v1899 = vmul.f32 %v1895, %v1886
  %v1900 = vmul.f32 %v1898, %v1886
  %v1901 = vadd.f32 %v1899, 1e-05
  %v1902 = vadd.f32 %v1900, 1e-05
  %v1903 = vrsqrt.pop %v1901
  %v1904 = vrsqrt.pop %v1902
  %v1905 = vmul.f32 %v1889, %v1903
  %v1906 = vmul.f32 %v1890, %v1904
  %v1907 = vlaneseq
  %v1908 = vshrl.u32 %v1907, 7
  %v1909 = vsub.s32 0, %v1908
  %v1910 = vrot.slane %v46, %v1909
  %v1911 = vmul.f32 %v1905, %v1910
  %v1912 = vmul.f32 %v1906, %v1910
  %v1913 = vlaneseq
  %v1914 = vshrl.u32 %v1913, 7
  %v1915 = vsub.s32 0, %v1914
  %v1916 = vrot.slane %v47, %v1915
  %v1917 = vadd.f32 %v1911, %v1916
  %v1918 = vadd.f32 %v1912, %v1916
  %v1919 = vlaneseq
  %v1920 = vshrl.u32 %v1919, 7
  %v1921 = vsub.s32 0, %v1920
  %v1922 = vrot.slane %v44, %v1921
  %v1924 = vsel %vm56, %v1917, 0
  %v1927 = vsel %vm56, %v1918, 0
  %1929 = vmatprep.subr.mxu0 0.0
  %1930 = vmatpush1.msra.mxu0 %v29
  %1931 = vmatprep.subr.mxu0 0.0
  %1932 = vmatpush1.msra.mxu0 %v30
  %1933 = vmatprep.subr.mxu0 0.0
  %1934 = vmatpush1.msra.mxu0 %v31
  %1935 = vmatprep.subr.mxu0 0.0
  %1936 = vmatpush1.msra.mxu0 %v32
  %1937 = vmatprep.subr.mxu0 0.0
  %1938 = vmatpush1.msra.mxu0 0.0
  %1939 = vmatprep.subr.mxu0 0.0
  %1940 = vmatpush1.msra.mxu0 0.0
  %1941 = vmatprep.subr.mxu0 0.0
  %1942 = vmatpush1.msra.mxu0 0.0
  %1943 = vmatprep.subr.mxu0 0.0
  %1944 = vmatpush1.msra.mxu0 0.0
  %1945 = vmatprep.subr.mxu0 0.0
  %1946 = vmatpush1.msra.mxu0 0.0
  %1947 = vmatprep.subr.mxu0 0.0
  %1948 = vmatpush1.msra.mxu0 0.0
  %1949 = vmatprep.subr.mxu0 0.0
  %1950 = vmatpush1.msra.mxu0 0.0
  %1951 = vmatprep.subr.mxu0 0.0
  %1952 = vmatpush1.msra.mxu0 0.0
  %1953 = vmatprep.subr.mxu0 0.0
  %1954 = vmatpush1.msra.mxu0 0.0
  %1955 = vmatprep.subr.mxu0 0.0
  %1956 = vmatpush1.msra.mxu0 0.0
  %1957 = vmatprep.subr.mxu0 0.0
  %1958 = vmatpush1.msra.mxu0 0.0
  %1959 = vmatprep.subr.mxu0 0.0
  %1960 = vmatpush1.msra.mxu0 0.0
  %1961 = vmatprep.subr.mxu0 0.0
  %1962 = vmatpush1.msra.mxu0 0.0
  %1963 = vmatprep.subr.mxu0 0.0
  %1964 = vmatpush1.msra.mxu0 0.0
  %1965 = vmatprep.subr.mxu0 0.0
  %1966 = vmatpush1.msra.mxu0 0.0
  %1967 = vmatprep.subr.mxu0 0.0
  %1968 = vmatpush1.msra.mxu0 0.0
  %1969 = vmatprep.subr.mxu0 0.0
  %1970 = vmatpush1.msra.mxu0 0.0
  %1971 = vmatprep.subr.mxu0 0.0
  %1972 = vmatpush1.msra.mxu0 0.0
  %1973 = vmatprep.subr.mxu0 0.0
  %1974 = vmatpush1.msra.mxu0 0.0
  %1975 = vmatprep.subr.mxu0 0.0
  %1976 = vmatpush1.msra.mxu0 0.0
  %1977 = vmatprep.subr.mxu0 0.0
  %1978 = vmatpush1.msra.mxu0 0.0
  %1979 = vmatprep.subr.mxu0 0.0
  %1980 = vmatpush1.msra.mxu0 0.0
  %1981 = vmatprep.subr.mxu0 0.0
  %1982 = vmatpush1.msra.mxu0 0.0
  %1983 = vmatprep.subr.mxu0 0.0
  %1984 = vmatpush1.msra.mxu0 0.0
  %1985 = vmatprep.subr.mxu0 0.0
  %1986 = vmatpush1.msra.mxu0 0.0
  %1987 = vmatprep.subr.mxu0 0.0
  %1988 = vmatpush1.msra.mxu0 0.0
  %1989 = vmatprep.subr.mxu0 0.0
  %1990 = vmatpush1.msra.mxu0 0.0
  %1991 = vmatprep.subr.mxu0 0.0
  %1992 = vmatpush1.msra.mxu0 0.0
  %1993 = vmatprep.mubr.f32.mxu0 0.0
  %1994 = vmatmul.mubr.f32.gmra.mrb[0].mxu0 %v1924
  %v1995 = vpop.f32.mrb[0].mxu0
  %v1996 = vadd.f32 %v1922, %v1995
  %v1997 = vpop.f32.mrb[0].mxu0
  %1998 = vmatprep.mubr.f32.mxu0 0.0
  %1999 = vmatmul.mubr.f32.gmra.mrb[0].mxu0 %v1927
  %v2000 = vpop.f32.mrb[0].mxu0
  %v2001 = vadd.f32 %v1922, %v2000
  %v2002 = vpop.f32.mrb[0].mxu0
  %2003 = vdwg.mxu0
  %v2004 = vmax.f32 %v1996, 0.0
  %v2005 = vmax.f32 %v2001, 0.0
  %v2006 = vlaneseq
  %v2007 = vshrl.u32 %v2006, 7
  %v2008 = vsub.s32 0, %v2007
  %v2009 = vrot.slane %v45, %v2008
  %vm2010 = vcmask 523264
  %v2012 = vsel %vm2010, %v2004, 0
  %v2015 = vsel %vm2010, %v2005, 0
  %2017 = vmatprep.subr.mxu0 0.0
  %2018 = vmatpush1.msra.mxu0 %v33
  %2019 = vmatprep.subr.mxu0 0.0
  %2020 = vmatpush1.msra.mxu0 %v34
  %2021 = vmatprep.subr.mxu0 0.0
  %2022 = vmatpush1.msra.mxu0 %v35
  %2023 = vmatprep.subr.mxu0 0.0
  %2024 = vmatpush1.msra.mxu0 %v36
  %2025 = vmatprep.subr.mxu0 0.0
  %2026 = vmatpush1.msra.mxu0 %v37
  %2027 = vmatprep.subr.mxu0 0.0
  %2028 = vmatpush1.msra.mxu0 %v38
  %2029 = vmatprep.subr.mxu0 0.0
  %2030 = vmatpush1.msra.mxu0 %v39
  %2031 = vmatprep.subr.mxu0 0.0
  %2032 = vmatpush1.msra.mxu0 %v40
  %2033 = vmatprep.subr.mxu0 0.0
  %2034 = vmatpush1.msra.mxu0 0.0
  %2035 = vmatprep.subr.mxu0 0.0
  %2036 = vmatpush1.msra.mxu0 0.0
  %2037 = vmatprep.subr.mxu0 0.0
  %2038 = vmatpush1.msra.mxu0 0.0
  %2039 = vmatprep.subr.mxu0 0.0
  %2040 = vmatpush1.msra.mxu0 0.0
  %2041 = vmatprep.subr.mxu0 0.0
  %2042 = vmatpush1.msra.mxu0 0.0
  %2043 = vmatprep.subr.mxu0 0.0
  %2044 = vmatpush1.msra.mxu0 0.0
  %2045 = vmatprep.subr.mxu0 0.0
  %2046 = vmatpush1.msra.mxu0 0.0
  %2047 = vmatprep.subr.mxu0 0.0
  %2048 = vmatpush1.msra.mxu0 0.0
  %2049 = vmatprep.subr.mxu0 0.0
  %2050 = vmatpush1.msra.mxu0 0.0
  %2051 = vmatprep.subr.mxu0 0.0
  %2052 = vmatpush1.msra.mxu0 0.0
  %2053 = vmatprep.subr.mxu0 0.0
  %2054 = vmatpush1.msra.mxu0 0.0
  %2055 = vmatprep.subr.mxu0 0.0
  %2056 = vmatpush1.msra.mxu0 0.0
  %2057 = vmatprep.subr.mxu0 0.0
  %2058 = vmatpush1.msra.mxu0 0.0
  %2059 = vmatprep.subr.mxu0 0.0
  %2060 = vmatpush1.msra.mxu0 0.0
  %2061 = vmatprep.subr.mxu0 0.0
  %2062 = vmatpush1.msra.mxu0 0.0
  %2063 = vmatprep.subr.mxu0 0.0
  %2064 = vmatpush1.msra.mxu0 0.0
  %2065 = vmatprep.subr.mxu0 0.0
  %2066 = vmatpush1.msra.mxu0 0.0
  %2067 = vmatprep.subr.mxu0 0.0
  %2068 = vmatpush1.msra.mxu0 0.0
  %2069 = vmatprep.subr.mxu0 0.0
  %2070 = vmatpush1.msra.mxu0 0.0
  %2071 = vmatprep.subr.mxu0 0.0
  %2072 = vmatpush1.msra.mxu0 0.0
  %2073 = vmatprep.subr.mxu0 0.0
  %2074 = vmatpush1.msra.mxu0 0.0
  %2075 = vmatprep.subr.mxu0 0.0
  %2076 = vmatpush1.msra.mxu0 0.0
  %2077 = vmatprep.subr.mxu0 0.0
  %2078 = vmatpush1.msra.mxu0 0.0
  %2079 = vmatprep.subr.mxu0 0.0
  %2080 = vmatpush1.msra.mxu0 0.0
  %2081 = vmatprep.mubr.f32.mxu0 0.0
  %2082 = vmatmul.mubr.f32.gmra.mrb[0].mxu0 %v2012
  %v2083 = vpop.f32.mrb[0].mxu0
  %v2084 = vadd.f32 %v2009, %v2083
  %v2085 = vpop.f32.mrb[0].mxu0
  %2086 = vmatprep.mubr.f32.mxu0 0.0
  %2087 = vmatmul.mubr.f32.gmra.mrb[0].mxu0 %v2015
  %v2088 = vpop.f32.mrb[0].mxu0
  %v2089 = vadd.f32 %v2009, %v2088
  %v2090 = vpop.f32.mrb[0].mxu0
  %2091 = vdwg.mxu0
  %v2092 = vadd.f32 %v1917, %v2084
  %v2093 = vadd.f32 %v1918, %v2089
  %v2094 = vsel %vm56, %v2092, 0.0
  %2095 = vadd.xlane.f32.xlu0 %v2094
  %v2096 = vpop.xlane.xlu0 %2095
  %v2097 = vsel %vm56, %v2093, 0.0
  %2098 = vadd.xlane.f32.xlu0 %v2097
  %v2099 = vpop.xlane.xlu0 %2098
  %v2100 = vmul.f32 %v2096, %v1886
  %v2101 = vmul.f32 %v2099, %v1886
  %v2102 = vsub.f32 %v2092, %v2100
  %v2103 = vsub.f32 %v2093, %v2101
  %v2104 = vmul.f32 %v2102, %v2102
  %v2105 = vmul.f32 %v2103, %v2103
  %v2106 = vsel %vm56, %v2104, 0.0
  %2107 = vadd.xlane.f32.xlu0 %v2106
  %v2108 = vpop.xlane.xlu0 %2107
  %v2109 = vsel %vm56, %v2105, 0.0
  %2110 = vadd.xlane.f32.xlu0 %v2109
  %v2111 = vpop.xlane.xlu0 %2110
  %v2112 = vmul.f32 %v2108, %v1886
  %v2113 = vmul.f32 %v2111, %v1886
  %v2114 = vadd.f32 %v2112, 1e-05
  %v2115 = vadd.f32 %v2113, 1e-05
  %v2116 = vrsqrt.pop %v2114
  %v2117 = vrsqrt.pop %v2115
  %v2118 = vmul.f32 %v2102, %v2116
  %v2119 = vmul.f32 %v2103, %v2117
  %v2120 = vlaneseq
  %v2121 = vshrl.u32 %v2120, 7
  %v2122 = vsub.s32 0, %v2121
  %v2123 = vrot.slane %v48, %v2122
  %v2124 = vmul.f32 %v2118, %v2123
  %v2125 = vmul.f32 %v2119, %v2123
  %v2126 = vlaneseq
  %v2127 = vshrl.u32 %v2126, 7
  %v2128 = vsub.s32 0, %v2127
  %v2129 = vrot.slane %v49, %v2128
  %v2130 = vadd.f32 %v2124, %v2129
  %v2131 = vadd.f32 %v2125, %v2129
  %v2132 = vld [vmem:[%s2 + $0xc0] sm:$0xff]
  %v2133 = vld [vmem:[%s2 + $0xc8] sm:$0xff]
  %v2134 = vld [vmem:[%s2 + $0xd0] sm:$0xff]
  %v2135 = vld [vmem:[%s2 + $0xd8] sm:$0xff]
  %v2136 = vld [vmem:[%s2 + $0xe0] sm:$0xff]
  %v2137 = vld [vmem:[%s2 + $0xe8] sm:$0xff]
  %v2138 = vld [vmem:[%s2 + $0xf0] sm:$0xff]
  %v2139 = vld [vmem:[%s2 + $0xf8] sm:$0xff]
  %v2140 = vld [vmem:[%s2 + $0x120] sm:$0xff]
  %v2141 = vld [vmem:[%s2 + $0x128] sm:$0xff]
  %v2142 = vld [vmem:[%s2 + $0x130] sm:$0xff]
  %v2143 = vld [vmem:[%s2 + $0x138] sm:$0xff]
  %v2144 = vld [vmem:[%s2 + $0x140] sm:$0xff]
  %v2145 = vld [vmem:[%s2 + $0x148] sm:$0xff]
  %v2146 = vld [vmem:[%s2 + $0x150] sm:$0xff]
  %v2147 = vld [vmem:[%s2 + $0x158] sm:$0xff]
  %v2148 = vld [vmem:[%s2 + $0x160] sm:$0xff]
  %v2149 = vld [vmem:[%s2 + $0x168] sm:$0xff]
  %v2150 = vld [vmem:[%s2 + $0x170] sm:$0xff]
  %v2151 = vld [vmem:[%s2 + $0x178] sm:$0xff]
  %v2152 = vld [vmem:[%s3 + $0x9] sm:$0x1]
  %v2153 = vld [vmem:[%s3 + $0xa] sm:$0x1]
  %v2154 = vld [vmem:[%s3 + $0xb] sm:$0x1]
  %v2155 = vld [vmem:[%s3 + $0xc] sm:$0x1]
  %v2156 = vld [vmem:[%s3 + $0xd] sm:$0x1]
  %v2157 = vld [vmem:[%s3 + $0xe] sm:$0x1]
  %v2158 = vld [vmem:[%s3 + $0xf] sm:$0x1]
  %v2159 = vld [vmem:[%s3 + $0x10] sm:$0x1]
  %v2160 = vld [vmem:[%s3 + $0x11] sm:$0x1]
  %v2161 = vadd.f32 %v2130, %v19
  %v2162 = vadd.f32 %v2131, %v20
  %v2163 = vlaneseq
  %v2164 = vshrl.u32 %v2163, 7
  %v2165 = vsub.s32 0, %v2164
  %v2166 = vrot.slane %v2152, %v2165
  %v2168 = vsel %vm56, %v2161, 0
  %v2171 = vsel %vm56, %v2162, 0
  %2173 = vmatprep.subr.mxu0 0.0
  %2174 = vmatpush1.msra.mxu0 %v2132
  %2175 = vmatprep.subr.mxu0 0.0
  %2176 = vmatpush1.msra.mxu0 %v2133
  %2177 = vmatprep.subr.mxu0 0.0
  %2178 = vmatpush1.msra.mxu0 %v2134
  %2179 = vmatprep.subr.mxu0 0.0
  %2180 = vmatpush1.msra.mxu0 %v2135
  %2181 = vmatprep.subr.mxu0 0.0
  %2182 = vmatpush1.msra.mxu0 0.0
  %2183 = vmatprep.subr.mxu0 0.0
  %2184 = vmatpush1.msra.mxu0 0.0
  %2185 = vmatprep.subr.mxu0 0.0
  %2186 = vmatpush1.msra.mxu0 0.0
  %2187 = vmatprep.subr.mxu0 0.0
  %2188 = vmatpush1.msra.mxu0 0.0
  %2189 = vmatprep.subr.mxu0 0.0
  %2190 = vmatpush1.msra.mxu0 0.0
  %2191 = vmatprep.subr.mxu0 0.0
  %2192 = vmatpush1.msra.mxu0 0.0
  %2193 = vmatprep.subr.mxu0 0.0
  %2194 = vmatpush1.msra.mxu0 0.0
  %2195 = vmatprep.subr.mxu0 0.0
  %2196 = vmatpush1.msra.mxu0 0.0
  %2197 = vmatprep.subr.mxu0 0.0
  %2198 = vmatpush1.msra.mxu0 0.0
  %2199 = vmatprep.subr.mxu0 0.0
  %2200 = vmatpush1.msra.mxu0 0.0
  %2201 = vmatprep.subr.mxu0 0.0
  %2202 = vmatpush1.msra.mxu0 0.0
  %2203 = vmatprep.subr.mxu0 0.0
  %2204 = vmatpush1.msra.mxu0 0.0
  %2205 = vmatprep.subr.mxu0 0.0
  %2206 = vmatpush1.msra.mxu0 0.0
  %2207 = vmatprep.subr.mxu0 0.0
  %2208 = vmatpush1.msra.mxu0 0.0
  %2209 = vmatprep.subr.mxu0 0.0
  %2210 = vmatpush1.msra.mxu0 0.0
  %2211 = vmatprep.subr.mxu0 0.0
  %2212 = vmatpush1.msra.mxu0 0.0
  %2213 = vmatprep.subr.mxu0 0.0
  %2214 = vmatpush1.msra.mxu0 0.0
  %2215 = vmatprep.subr.mxu0 0.0
  %2216 = vmatpush1.msra.mxu0 0.0
  %2217 = vmatprep.subr.mxu0 0.0
  %2218 = vmatpush1.msra.mxu0 0.0
  %2219 = vmatprep.subr.mxu0 0.0
  %2220 = vmatpush1.msra.mxu0 0.0
  %2221 = vmatprep.subr.mxu0 0.0
  %2222 = vmatpush1.msra.mxu0 0.0
  %2223 = vmatprep.subr.mxu0 0.0
  %2224 = vmatpush1.msra.mxu0 0.0
  %2225 = vmatprep.subr.mxu0 0.0
  %2226 = vmatpush1.msra.mxu0 0.0
  %2227 = vmatprep.subr.mxu0 0.0
  %2228 = vmatpush1.msra.mxu0 0.0
  %2229 = vmatprep.subr.mxu0 0.0
  %2230 = vmatpush1.msra.mxu0 0.0
  %2231 = vmatprep.subr.mxu0 0.0
  %2232 = vmatpush1.msra.mxu0 0.0
  %2233 = vmatprep.subr.mxu0 0.0
  %2234 = vmatpush1.msra.mxu0 0.0
  %2235 = vmatprep.subr.mxu0 0.0
  %2236 = vmatpush1.msra.mxu0 0.0
  %2237 = vmatprep.mubr.f32.mxu0 0.0
  %2238 = vmatmul.mubr.f32.gmra.mrb[0].mxu0 %v2168
  %v2239 = vpop.f32.mrb[0].mxu0
  %v2240 = vadd.f32 %v2166, %v2239
  %v2241 = vpop.f32.mrb[0].mxu0
  %2242 = vmatprep.mubr.f32.mxu0 0.0
  %2243 = vmatmul.mubr.f32.gmra.mrb[0].mxu0 %v2171
  %v2244 = vpop.f32.mrb[0].mxu0
  %v2245 = vadd.f32 %v2166, %v2244
  %v2246 = vpop.f32.mrb[0].mxu0
  %2247 = vdwg.mxu0
  %v2248 = vlaneseq
  %v2249 = vshrl.u32 %v2248, 7
  %v2250 = vsub.s32 0, %v2249
  %v2251 = vrot.slane %v2153, %v2250
  %v2253 = vsel %vm56, %v2130, 0
  %v2256 = vsel %vm56, %v2131, 0
  %2258 = vmatprep.subr.mxu0 0.0
  %2259 = vmatpush1.msra.mxu0 %v2136
  %2260 = vmatprep.subr.mxu0 0.0
  %2261 = vmatpush1.msra.mxu0 %v2137
  %2262 = vmatprep.subr.mxu0 0.0
  %2263 = vmatpush1.msra.mxu0 %v2138
  %2264 = vmatprep.subr.mxu0 0.0
  %2265 = vmatpush1.msra.mxu0 %v2139
  %2266 = vmatprep.subr.mxu0 0.0
  %2267 = vmatpush1.msra.mxu0 0.0
  %2268 = vmatprep.subr.mxu0 0.0
  %2269 = vmatpush1.msra.mxu0 0.0
  %2270 = vmatprep.subr.mxu0 0.0
  %2271 = vmatpush1.msra.mxu0 0.0
  %2272 = vmatprep.subr.mxu0 0.0
  %2273 = vmatpush1.msra.mxu0 0.0
  %2274 = vmatprep.subr.mxu0 0.0
  %2275 = vmatpush1.msra.mxu0 0.0
  %2276 = vmatprep.subr.mxu0 0.0
  %2277 = vmatpush1.msra.mxu0 0.0
  %2278 = vmatprep.subr.mxu0 0.0
  %2279 = vmatpush1.msra.mxu0 0.0
  %2280 = vmatprep.subr.mxu0 0.0
  %2281 = vmatpush1.msra.mxu0 0.0
  %2282 = vmatprep.subr.mxu0 0.0
  %2283 = vmatpush1.msra.mxu0 0.0
  %2284 = vmatprep.subr.mxu0 0.0
  %2285 = vmatpush1.msra.mxu0 0.0
  %2286 = vmatprep.subr.mxu0 0.0
  %2287 = vmatpush1.msra.mxu0 0.0
  %2288 = vmatprep.subr.mxu0 0.0
  %2289 = vmatpush1.msra.mxu0 0.0
  %2290 = vmatprep.subr.mxu0 0.0
  %2291 = vmatpush1.msra.mxu0 0.0
  %2292 = vmatprep.subr.mxu0 0.0
  %2293 = vmatpush1.msra.mxu0 0.0
  %2294 = vmatprep.subr.mxu0 0.0
  %2295 = vmatpush1.msra.mxu0 0.0
  %2296 = vmatprep.subr.mxu0 0.0
  %2297 = vmatpush1.msra.mxu0 0.0
  %2298 = vmatprep.subr.mxu0 0.0
  %2299 = vmatpush1.msra.mxu0 0.0
  %2300 = vmatprep.subr.mxu0 0.0
  %2301 = vmatpush1.msra.mxu0 0.0
  %2302 = vmatprep.subr.mxu0 0.0
  %2303 = vmatpush1.msra.mxu0 0.0
  %2304 = vmatprep.subr.mxu0 0.0
  %2305 = vmatpush1.msra.mxu0 0.0
  %2306 = vmatprep.subr.mxu0 0.0
  %2307 = vmatpush1.msra.mxu0 0.0
  %2308 = vmatprep.subr.mxu0 0.0
  %2309 = vmatpush1.msra.mxu0 0.0
  %2310 = vmatprep.subr.mxu0 0.0
  %2311 = vmatpush1.msra.mxu0 0.0
  %2312 = vmatprep.subr.mxu0 0.0
  %2313 = vmatpush1.msra.mxu0 0.0
  %2314 = vmatprep.subr.mxu0 0.0
  %2315 = vmatpush1.msra.mxu0 0.0
  %2316 = vmatprep.subr.mxu0 0.0
  %2317 = vmatpush1.msra.mxu0 0.0
  %2318 = vmatprep.subr.mxu0 0.0
  %2319 = vmatpush1.msra.mxu0 0.0
  %2320 = vmatprep.subr.mxu0 0.0
  %2321 = vmatpush1.msra.mxu0 0.0
  %2322 = vmatprep.mubr.f32.mxu0 0.0
  %2323 = vmatmul.mubr.f32.gmra.mrb[0].mxu0 %v2253
  %v2324 = vpop.f32.mrb[0].mxu0
  %v2325 = vadd.f32 %v2251, %v2324
  %v2326 = vpop.f32.mrb[0].mxu0
  %2327 = vmatprep.mubr.f32.mxu0 0.0
  %2328 = vmatmul.mubr.f32.gmra.mrb[0].mxu0 %v2256
  %v2329 = vpop.f32.mrb[0].mxu0
  %v2330 = vadd.f32 %v2251, %v2329
  %v2331 = vpop.f32.mrb[0].mxu0
  %2332 = vdwg.mxu0
  %2334 = vrot.lane.b32.xlu0 %v2240, 96
  %v2335 = vpop.permute.xlu0 %2334
  %v2336 = vsel %vm226, %v2240, 0
  %v2338 = vsel %vm226, %v2335, 0
  %2340 = vmatprep.subr.mxu0 0.0
  %2341 = vmatpush1.xpose.msra.mxu0 %v2338
  %2342 = vmatprep.subr.mxu0 0.0
  %2343 = vmatpush1.xpose.msra.mxu0 0.0
  %2344 = vmatprep.subr.mxu0 0.0
  %2345 = vmatpush1.xpose.msra.mxu0 0.0
  %2346 = vmatprep.subr.mxu0 0.0
  %2347 = vmatpush1.xpose.msra.mxu0 0.0
  %2348 = vmatprep.subr.mxu0 0.0
  %2349 = vmatpush1.xpose.msra.mxu0 0.0
  %2350 = vmatprep.subr.mxu0 0.0
  %2351 = vmatpush1.xpose.msra.mxu0 0.0
  %2352 = vmatprep.subr.mxu0 0.0
  %2353 = vmatpush1.xpose.msra.mxu0 0.0
  %2354 = vmatprep.subr.mxu0 0.0
  %2355 = vmatpush1.xpose.msra.mxu0 0.0
  %2356 = vmatprep.subr.mxu0 0.0
  %2357 = vmatpush1.xpose.msra.mxu0 0.0
  %2358 = vmatprep.subr.mxu0 0.0
  %2359 = vmatpush1.xpose.msra.mxu0 0.0
  %2360 = vmatprep.subr.mxu0 0.0
  %2361 = vmatpush1.xpose.msra.mxu0 0.0
  %2362 = vmatprep.subr.mxu0 0.0
  %2363 = vmatpush1.xpose.msra.mxu0 0.0
  %2364 = vmatprep.subr.mxu0 0.0
  %2365 = vmatpush1.xpose.msra.mxu0 0.0
  %2366 = vmatprep.subr.mxu0 0.0
  %2367 = vmatpush1.xpose.msra.mxu0 0.0
  %2368 = vmatprep.subr.mxu0 0.0
  %2369 = vmatpush1.xpose.msra.mxu0 0.0
  %2370 = vmatprep.subr.mxu0 0.0
  %2371 = vmatpush1.xpose.msra.mxu0 0.0
  %2372 = vmatprep.subr.mxu0 0.0
  %2373 = vmatpush1.xpose.msra.mxu0 0.0
  %2374 = vmatprep.subr.mxu0 0.0
  %2375 = vmatpush1.xpose.msra.mxu0 0.0
  %2376 = vmatprep.subr.mxu0 0.0
  %2377 = vmatpush1.xpose.msra.mxu0 0.0
  %2378 = vmatprep.subr.mxu0 0.0
  %2379 = vmatpush1.xpose.msra.mxu0 0.0
  %2380 = vmatprep.subr.mxu0 0.0
  %2381 = vmatpush1.xpose.msra.mxu0 0.0
  %2382 = vmatprep.subr.mxu0 0.0
  %2383 = vmatpush1.xpose.msra.mxu0 0.0
  %2384 = vmatprep.subr.mxu0 0.0
  %2385 = vmatpush1.xpose.msra.mxu0 0.0
  %2386 = vmatprep.subr.mxu0 0.0
  %2387 = vmatpush1.xpose.msra.mxu0 0.0
  %2388 = vmatprep.subr.mxu0 0.0
  %2389 = vmatpush1.xpose.msra.mxu0 0.0
  %2390 = vmatprep.subr.mxu0 0.0
  %2391 = vmatpush1.xpose.msra.mxu0 0.0
  %2392 = vmatprep.subr.mxu0 0.0
  %2393 = vmatpush1.xpose.msra.mxu0 0.0
  %2394 = vmatprep.subr.mxu0 0.0
  %2395 = vmatpush1.xpose.msra.mxu0 0.0
  %2396 = vmatprep.subr.mxu0 0.0
  %2397 = vmatpush1.xpose.msra.mxu0 0.0
  %2398 = vmatprep.subr.mxu0 0.0
  %2399 = vmatpush1.xpose.msra.mxu0 0.0
  %2400 = vmatprep.subr.mxu0 0.0
  %2401 = vmatpush1.xpose.msra.mxu0 0.0
  %2402 = vmatprep.subr.mxu0 0.0
  %2403 = vmatpush1.xpose.msra.mxu0 0.0
  %2404 = vmatprep.mubr.f32.mxu0 0.0
  %2405 = vmatmul.mubr.f32.gmra.mrb[0].mxu0 %v2336
  %v2406 = vpop.f32.mrb[0].mxu0
  %v2407 = vadd.f32 0.0, %v2406
  %v2408 = vpop.f32.mrb[0].mxu0
  %2409 = vdwg.mxu0
  %2411 = vrot.lane.b32.xlu0 %v2245, 96
  %v2412 = vpop.permute.xlu0 %2411
  %v2413 = vsel %vm226, %v2245, 0
  %v2415 = vsel %vm226, %v2412, 0
  %2417 = vmatprep.subr.mxu0 0.0
  %2418 = vmatpush1.xpose.msra.mxu0 %v2415
  %2419 = vmatprep.subr.mxu0 0.0
  %2420 = vmatpush1.xpose.msra.mxu0 0.0
  %2421 = vmatprep.subr.mxu0 0.0
  %2422 = vmatpush1.xpose.msra.mxu0 0.0
  %2423 = vmatprep.subr.mxu0 0.0
  %2424 = vmatpush1.xpose.msra.mxu0 0.0
  %2425 = vmatprep.subr.mxu0 0.0
  %2426 = vmatpush1.xpose.msra.mxu0 0.0
  %2427 = vmatprep.subr.mxu0 0.0
  %2428 = vmatpush1.xpose.msra.mxu0 0.0
  %2429 = vmatprep.subr.mxu0 0.0
  %2430 = vmatpush1.xpose.msra.mxu0 0.0
  %2431 = vmatprep.subr.mxu0 0.0
  %2432 = vmatpush1.xpose.msra.mxu0 0.0
  %2433 = vmatprep.subr.mxu0 0.0
  %2434 = vmatpush1.xpose.msra.mxu0 0.0
  %2435 = vmatprep.subr.mxu0 0.0
  %2436 = vmatpush1.xpose.msra.mxu0 0.0
  %2437 = vmatprep.subr.mxu0 0.0
  %2438 = vmatpush1.xpose.msra.mxu0 0.0
  %2439 = vmatprep.subr.mxu0 0.0
  %2440 = vmatpush1.xpose.msra.mxu0 0.0
  %2441 = vmatprep.subr.mxu0 0.0
  %2442 = vmatpush1.xpose.msra.mxu0 0.0
  %2443 = vmatprep.subr.mxu0 0.0
  %2444 = vmatpush1.xpose.msra.mxu0 0.0
  %2445 = vmatprep.subr.mxu0 0.0
  %2446 = vmatpush1.xpose.msra.mxu0 0.0
  %2447 = vmatprep.subr.mxu0 0.0
  %2448 = vmatpush1.xpose.msra.mxu0 0.0
  %2449 = vmatprep.subr.mxu0 0.0
  %2450 = vmatpush1.xpose.msra.mxu0 0.0
  %2451 = vmatprep.subr.mxu0 0.0
  %2452 = vmatpush1.xpose.msra.mxu0 0.0
  %2453 = vmatprep.subr.mxu0 0.0
  %2454 = vmatpush1.xpose.msra.mxu0 0.0
  %2455 = vmatprep.subr.mxu0 0.0
  %2456 = vmatpush1.xpose.msra.mxu0 0.0
  %2457 = vmatprep.subr.mxu0 0.0
  %2458 = vmatpush1.xpose.msra.mxu0 0.0
  %2459 = vmatprep.subr.mxu0 0.0
  %2460 = vmatpush1.xpose.msra.mxu0 0.0
  %2461 = vmatprep.subr.mxu0 0.0
  %2462 = vmatpush1.xpose.msra.mxu0 0.0
  %2463 = vmatprep.subr.mxu0 0.0
  %2464 = vmatpush1.xpose.msra.mxu0 0.0
  %2465 = vmatprep.subr.mxu0 0.0
  %2466 = vmatpush1.xpose.msra.mxu0 0.0
  %2467 = vmatprep.subr.mxu0 0.0
  %2468 = vmatpush1.xpose.msra.mxu0 0.0
  %2469 = vmatprep.subr.mxu0 0.0
  %2470 = vmatpush1.xpose.msra.mxu0 0.0
  %2471 = vmatprep.subr.mxu0 0.0
  %2472 = vmatpush1.xpose.msra.mxu0 0.0
  %2473 = vmatprep.subr.mxu0 0.0
  %2474 = vmatpush1.xpose.msra.mxu0 0.0
  %2475 = vmatprep.subr.mxu0 0.0
  %2476 = vmatpush1.xpose.msra.mxu0 0.0
  %2477 = vmatprep.subr.mxu0 0.0
  %2478 = vmatpush1.xpose.msra.mxu0 0.0
  %2479 = vmatprep.subr.mxu0 0.0
  %2480 = vmatpush1.xpose.msra.mxu0 0.0
  %2481 = vmatprep.mubr.f32.mxu0 0.0
  %2482 = vmatmul.mubr.f32.gmra.mrb[0].mxu0 %v2413
  %v2483 = vpop.f32.mrb[0].mxu0
  %v2484 = vadd.f32 0.0, %v2483
  %v2485 = vpop.f32.mrb[0].mxu0
  %2486 = vdwg.mxu0
  %v2487 = vsel %vm226, %v2407, -inf
  %2488 = vmax.xlane.f32.xlu0 %v2487
  %v2489 = vpop.xlane.xlu0 %2488
  %v2490 = vsel %vm226, %v2484, -inf
  %2491 = vmax.xlane.f32.xlu0 %v2490
  %v2492 = vpop.xlane.xlu0 %2491
  %v2493 = vsub.f32 %v2407, %v2489
  %v2494 = vsub.f32 %v2484, %v2492
  %v2495 = vmul.f32 %v2493, 1.442695
  %v2496 = vpow.pop %v2495
  %v2497 = vmul.f32 %v2494, 1.442695
  %v2498 = vpow.pop %v2497
  %v2499 = vsel %vm226, %v2496, 0.0
  %2500 = vadd.xlane.f32.xlu0 %v2499
  %v2501 = vpop.xlane.xlu0 %2500
  %v2502 = vsel %vm226, %v2498, 0.0
  %2503 = vadd.xlane.f32.xlu0 %v2502
  %v2504 = vpop.xlane.xlu0 %2503
  %v2505 = vrcp.pop %v2501
  %v2506 = vmul.f32 %v2496, %v2505
  %v2507 = vrcp.pop %v2504
  %v2508 = vmul.f32 %v2498, %v2507
  %v2510 = vsel %vm226, %v2506, 0
  %2512 = vmatprep.subr.mxu0 0.0
  %2513 = vmatpush1.msra.mxu0 %v2325
  %2514 = vmatprep.subr.mxu0 0.0
  %2515 = vmatpush1.msra.mxu0 0.0
  %2516 = vmatprep.subr.mxu0 0.0
  %2517 = vmatpush1.msra.mxu0 0.0
  %2518 = vmatprep.subr.mxu0 0.0
  %2519 = vmatpush1.msra.mxu0 0.0
  %2520 = vmatprep.subr.mxu0 0.0
  %2521 = vmatpush1.msra.mxu0 0.0
  %2522 = vmatprep.subr.mxu0 0.0
  %2523 = vmatpush1.msra.mxu0 0.0
  %2524 = vmatprep.subr.mxu0 0.0
  %2525 = vmatpush1.msra.mxu0 0.0
  %2526 = vmatprep.subr.mxu0 0.0
  %2527 = vmatpush1.msra.mxu0 0.0
  %2528 = vmatprep.subr.mxu0 0.0
  %2529 = vmatpush1.msra.mxu0 0.0
  %2530 = vmatprep.subr.mxu0 0.0
  %2531 = vmatpush1.msra.mxu0 0.0
  %2532 = vmatprep.subr.mxu0 0.0
  %2533 = vmatpush1.msra.mxu0 0.0
  %2534 = vmatprep.subr.mxu0 0.0
  %2535 = vmatpush1.msra.mxu0 0.0
  %2536 = vmatprep.subr.mxu0 0.0
  %2537 = vmatpush1.msra.mxu0 0.0
  %2538 = vmatprep.subr.mxu0 0.0
  %2539 = vmatpush1.msra.mxu0 0.0
  %2540 = vmatprep.subr.mxu0 0.0
  %2541 = vmatpush1.msra.mxu0 0.0
  %2542 = vmatprep.subr.mxu0 0.0
  %2543 = vmatpush1.msra.mxu0 0.0
  %2544 = vmatprep.subr.mxu0 0.0
  %2545 = vmatpush1.msra.mxu0 0.0
  %2546 = vmatprep.subr.mxu0 0.0
  %2547 = vmatpush1.msra.mxu0 0.0
  %2548 = vmatprep.subr.mxu0 0.0
  %2549 = vmatpush1.msra.mxu0 0.0
  %2550 = vmatprep.subr.mxu0 0.0
  %2551 = vmatpush1.msra.mxu0 0.0
  %2552 = vmatprep.subr.mxu0 0.0
  %2553 = vmatpush1.msra.mxu0 0.0
  %2554 = vmatprep.subr.mxu0 0.0
  %2555 = vmatpush1.msra.mxu0 0.0
  %2556 = vmatprep.subr.mxu0 0.0
  %2557 = vmatpush1.msra.mxu0 0.0
  %2558 = vmatprep.subr.mxu0 0.0
  %2559 = vmatpush1.msra.mxu0 0.0
  %2560 = vmatprep.subr.mxu0 0.0
  %2561 = vmatpush1.msra.mxu0 0.0
  %2562 = vmatprep.subr.mxu0 0.0
  %2563 = vmatpush1.msra.mxu0 0.0
  %2564 = vmatprep.subr.mxu0 0.0
  %2565 = vmatpush1.msra.mxu0 0.0
  %2566 = vmatprep.subr.mxu0 0.0
  %2567 = vmatpush1.msra.mxu0 0.0
  %2568 = vmatprep.subr.mxu0 0.0
  %2569 = vmatpush1.msra.mxu0 0.0
  %2570 = vmatprep.subr.mxu0 0.0
  %2571 = vmatpush1.msra.mxu0 0.0
  %2572 = vmatprep.subr.mxu0 0.0
  %2573 = vmatpush1.msra.mxu0 0.0
  %2574 = vmatprep.subr.mxu0 0.0
  %2575 = vmatpush1.msra.mxu0 0.0
  %2576 = vmatprep.mubr.f32.mxu0 0.0
  %2577 = vmatmul.mubr.f32.gmra.mrb[0].mxu0 %v2510
  %v2578 = vpop.f32.mrb[0].mxu0
  %v2579 = vadd.f32 0.0, %v2578
  %v2580 = vpop.f32.mrb[0].mxu0
  %2581 = vdwg.mxu0
  %v2583 = vsel %vm226, %v2508, 0
  %2585 = vmatprep.subr.mxu0 0.0
  %2586 = vmatpush1.msra.mxu0 %v2330
  %2587 = vmatprep.subr.mxu0 0.0
  %2588 = vmatpush1.msra.mxu0 0.0
  %2589 = vmatprep.subr.mxu0 0.0
  %2590 = vmatpush1.msra.mxu0 0.0
  %2591 = vmatprep.subr.mxu0 0.0
  %2592 = vmatpush1.msra.mxu0 0.0
  %2593 = vmatprep.subr.mxu0 0.0
  %2594 = vmatpush1.msra.mxu0 0.0
  %2595 = vmatprep.subr.mxu0 0.0
  %2596 = vmatpush1.msra.mxu0 0.0
  %2597 = vmatprep.subr.mxu0 0.0
  %2598 = vmatpush1.msra.mxu0 0.0
  %2599 = vmatprep.subr.mxu0 0.0
  %2600 = vmatpush1.msra.mxu0 0.0
  %2601 = vmatprep.subr.mxu0 0.0
  %2602 = vmatpush1.msra.mxu0 0.0
  %2603 = vmatprep.subr.mxu0 0.0
  %2604 = vmatpush1.msra.mxu0 0.0
  %2605 = vmatprep.subr.mxu0 0.0
  %2606 = vmatpush1.msra.mxu0 0.0
  %2607 = vmatprep.subr.mxu0 0.0
  %2608 = vmatpush1.msra.mxu0 0.0
  %2609 = vmatprep.subr.mxu0 0.0
  %2610 = vmatpush1.msra.mxu0 0.0
  %2611 = vmatprep.subr.mxu0 0.0
  %2612 = vmatpush1.msra.mxu0 0.0
  %2613 = vmatprep.subr.mxu0 0.0
  %2614 = vmatpush1.msra.mxu0 0.0
  %2615 = vmatprep.subr.mxu0 0.0
  %2616 = vmatpush1.msra.mxu0 0.0
  %2617 = vmatprep.subr.mxu0 0.0
  %2618 = vmatpush1.msra.mxu0 0.0
  %2619 = vmatprep.subr.mxu0 0.0
  %2620 = vmatpush1.msra.mxu0 0.0
  %2621 = vmatprep.subr.mxu0 0.0
  %2622 = vmatpush1.msra.mxu0 0.0
  %2623 = vmatprep.subr.mxu0 0.0
  %2624 = vmatpush1.msra.mxu0 0.0
  %2625 = vmatprep.subr.mxu0 0.0
  %2626 = vmatpush1.msra.mxu0 0.0
  %2627 = vmatprep.subr.mxu0 0.0
  %2628 = vmatpush1.msra.mxu0 0.0
  %2629 = vmatprep.subr.mxu0 0.0
  %2630 = vmatpush1.msra.mxu0 0.0
  %2631 = vmatprep.subr.mxu0 0.0
  %2632 = vmatpush1.msra.mxu0 0.0
  %2633 = vmatprep.subr.mxu0 0.0
  %2634 = vmatpush1.msra.mxu0 0.0
  %2635 = vmatprep.subr.mxu0 0.0
  %2636 = vmatpush1.msra.mxu0 0.0
  %2637 = vmatprep.subr.mxu0 0.0
  %2638 = vmatpush1.msra.mxu0 0.0
  %2639 = vmatprep.subr.mxu0 0.0
  %2640 = vmatpush1.msra.mxu0 0.0
  %2641 = vmatprep.subr.mxu0 0.0
  %2642 = vmatpush1.msra.mxu0 0.0
  %2643 = vmatprep.subr.mxu0 0.0
  %2644 = vmatpush1.msra.mxu0 0.0
  %2645 = vmatprep.subr.mxu0 0.0
  %2646 = vmatpush1.msra.mxu0 0.0
  %2647 = vmatprep.subr.mxu0 0.0
  %2648 = vmatpush1.msra.mxu0 0.0
  %2649 = vmatprep.mubr.f32.mxu0 0.0
  %2650 = vmatmul.mubr.f32.gmra.mrb[0].mxu0 %v2583
  %v2651 = vpop.f32.mrb[0].mxu0
  %v2652 = vadd.f32 0.0, %v2651
  %v2653 = vpop.f32.mrb[0].mxu0
  %2654 = vdwg.mxu0
  %v2655 = vld [vmem:[%s2 + $0x100] sm:$0xff]
  %v2657 = vsel %vm226, %v2579, 0
  %v2660 = vsel %vm226, %v2652, 0
  %2662 = vmatprep.subr.mxu0 0.0
  %2663 = vmatpush1.msra.mxu0 %v2655
  %2664 = vmatprep.subr.mxu0 0.0
  %2665 = vmatpush1.msra.mxu0 0.0
  %2666 = vmatprep.subr.mxu0 0.0
  %2667 = vmatpush1.msra.mxu0 0.0
  %2668 = vmatprep.subr.mxu0 0.0
  %2669 = vmatpush1.msra.mxu0 0.0
  %2670 = vmatprep.subr.mxu0 0.0
  %2671 = vmatpush1.msra.mxu0 0.0
  %2672 = vmatprep.subr.mxu0 0.0
  %2673 = vmatpush1.msra.mxu0 0.0
  %2674 = vmatprep.subr.mxu0 0.0
  %2675 = vmatpush1.msra.mxu0 0.0
  %2676 = vmatprep.subr.mxu0 0.0
  %2677 = vmatpush1.msra.mxu0 0.0
  %2678 = vmatprep.subr.mxu0 0.0
  %2679 = vmatpush1.msra.mxu0 0.0
  %2680 = vmatprep.subr.mxu0 0.0
  %2681 = vmatpush1.msra.mxu0 0.0
  %2682 = vmatprep.subr.mxu0 0.0
  %2683 = vmatpush1.msra.mxu0 0.0
  %2684 = vmatprep.subr.mxu0 0.0
  %2685 = vmatpush1.msra.mxu0 0.0
  %2686 = vmatprep.subr.mxu0 0.0
  %2687 = vmatpush1.msra.mxu0 0.0
  %2688 = vmatprep.subr.mxu0 0.0
  %2689 = vmatpush1.msra.mxu0 0.0
  %2690 = vmatprep.subr.mxu0 0.0
  %2691 = vmatpush1.msra.mxu0 0.0
  %2692 = vmatprep.subr.mxu0 0.0
  %2693 = vmatpush1.msra.mxu0 0.0
  %2694 = vmatprep.subr.mxu0 0.0
  %2695 = vmatpush1.msra.mxu0 0.0
  %2696 = vmatprep.subr.mxu0 0.0
  %2697 = vmatpush1.msra.mxu0 0.0
  %2698 = vmatprep.subr.mxu0 0.0
  %2699 = vmatpush1.msra.mxu0 0.0
  %2700 = vmatprep.subr.mxu0 0.0
  %2701 = vmatpush1.msra.mxu0 0.0
  %2702 = vmatprep.subr.mxu0 0.0
  %2703 = vmatpush1.msra.mxu0 0.0
  %2704 = vmatprep.subr.mxu0 0.0
  %2705 = vmatpush1.msra.mxu0 0.0
  %2706 = vmatprep.subr.mxu0 0.0
  %2707 = vmatpush1.msra.mxu0 0.0
  %2708 = vmatprep.subr.mxu0 0.0
  %2709 = vmatpush1.msra.mxu0 0.0
  %2710 = vmatprep.subr.mxu0 0.0
  %2711 = vmatpush1.msra.mxu0 0.0
  %2712 = vmatprep.subr.mxu0 0.0
  %2713 = vmatpush1.msra.mxu0 0.0
  %2714 = vmatprep.subr.mxu0 0.0
  %2715 = vmatpush1.msra.mxu0 0.0
  %2716 = vmatprep.subr.mxu0 0.0
  %2717 = vmatpush1.msra.mxu0 0.0
  %2718 = vmatprep.subr.mxu0 0.0
  %2719 = vmatpush1.msra.mxu0 0.0
  %2720 = vmatprep.subr.mxu0 0.0
  %2721 = vmatpush1.msra.mxu0 0.0
  %2722 = vmatprep.subr.mxu0 0.0
  %2723 = vmatpush1.msra.mxu0 0.0
  %2724 = vmatprep.subr.mxu0 0.0
  %2725 = vmatpush1.msra.mxu0 0.0
  %2726 = vmatprep.mubr.f32.mxu0 0.0
  %2727 = vmatmul.mubr.f32.gmra.mrb[0].mxu0 %v2657
  %v2728 = vpop.f32.mrb[0].mxu0
  %v2729 = vadd.f32 0.0, %v2728
  %v2730 = vpop.f32.mrb[0].mxu0
  %2731 = vmatprep.mubr.f32.mxu0 0.0
  %2732 = vmatmul.mubr.f32.gmra.mrb[0].mxu0 %v2660
  %v2733 = vpop.f32.mrb[0].mxu0
  %v2734 = vadd.f32 0.0, %v2733
  %v2735 = vpop.f32.mrb[0].mxu0
  %2736 = vdwg.mxu0
  %v2737 = vlaneseq
  %v2738 = vshrl.u32 %v2737, 7
  %v2739 = vsub.s32 0, %v2738
  %v2740 = vrot.slane %v2154, %v2739
  %v2741 = vadd.f32 %v2740, %v2729
  %v2742 = vadd.f32 %v2740, %v2734
  %2743 = vrot.lane.b32.xlu0 %v2240, 120
  %v2744 = vpop.permute.xlu0 %2743
  %2745 = vrot.lane.b32.xlu0 %v2240, 88
  %v2746 = vpop.permute.xlu0 %2745
  %v2747 = vsel %vm226, %v2744, 0
  %v2749 = vsel %vm226, %v2746, 0
  %2751 = vmatprep.subr.mxu0 0.0
  %2752 = vmatpush1.xpose.msra.mxu0 %v2749
  %2753 = vmatprep.subr.mxu0 0.0
  %2754 = vmatpush1.xpose.msra.mxu0 0.0
  %2755 = vmatprep.subr.mxu0 0.0
  %2756 = vmatpush1.xpose.msra.mxu0 0.0
  %2757 = vmatprep.subr.mxu0 0.0
  %2758 = vmatpush1.xpose.msra.mxu0 0.0
  %2759 = vmatprep.subr.mxu0 0.0
  %2760 = vmatpush1.xpose.msra.mxu0 0.0
  %2761 = vmatprep.subr.mxu0 0.0
  %2762 = vmatpush1.xpose.msra.mxu0 0.0
  %2763 = vmatprep.subr.mxu0 0.0
  %2764 = vmatpush1.xpose.msra.mxu0 0.0
  %2765 = vmatprep.subr.mxu0 0.0
  %2766 = vmatpush1.xpose.msra.mxu0 0.0
  %2767 = vmatprep.subr.mxu0 0.0
  %2768 = vmatpush1.xpose.msra.mxu0 0.0
  %2769 = vmatprep.subr.mxu0 0.0
  %2770 = vmatpush1.xpose.msra.mxu0 0.0
  %2771 = vmatprep.subr.mxu0 0.0
  %2772 = vmatpush1.xpose.msra.mxu0 0.0
  %2773 = vmatprep.subr.mxu0 0.0
  %2774 = vmatpush1.xpose.msra.mxu0 0.0
  %2775 = vmatprep.subr.mxu0 0.0
  %2776 = vmatpush1.xpose.msra.mxu0 0.0
  %2777 = vmatprep.subr.mxu0 0.0
  %2778 = vmatpush1.xpose.msra.mxu0 0.0
  %2779 = vmatprep.subr.mxu0 0.0
  %2780 = vmatpush1.xpose.msra.mxu0 0.0
  %2781 = vmatprep.subr.mxu0 0.0
  %2782 = vmatpush1.xpose.msra.mxu0 0.0
  %2783 = vmatprep.subr.mxu0 0.0
  %2784 = vmatpush1.xpose.msra.mxu0 0.0
  %2785 = vmatprep.subr.mxu0 0.0
  %2786 = vmatpush1.xpose.msra.mxu0 0.0
  %2787 = vmatprep.subr.mxu0 0.0
  %2788 = vmatpush1.xpose.msra.mxu0 0.0
  %2789 = vmatprep.subr.mxu0 0.0
  %2790 = vmatpush1.xpose.msra.mxu0 0.0
  %2791 = vmatprep.subr.mxu0 0.0
  %2792 = vmatpush1.xpose.msra.mxu0 0.0
  %2793 = vmatprep.subr.mxu0 0.0
  %2794 = vmatpush1.xpose.msra.mxu0 0.0
  %2795 = vmatprep.subr.mxu0 0.0
  %2796 = vmatpush1.xpose.msra.mxu0 0.0
  %2797 = vmatprep.subr.mxu0 0.0
  %2798 = vmatpush1.xpose.msra.mxu0 0.0
  %2799 = vmatprep.subr.mxu0 0.0
  %2800 = vmatpush1.xpose.msra.mxu0 0.0
  %2801 = vmatprep.subr.mxu0 0.0
  %2802 = vmatpush1.xpose.msra.mxu0 0.0
  %2803 = vmatprep.subr.mxu0 0.0
  %2804 = vmatpush1.xpose.msra.mxu0 0.0
  %2805 = vmatprep.subr.mxu0 0.0
  %2806 = vmatpush1.xpose.msra.mxu0 0.0
  %2807 = vmatprep.subr.mxu0 0.0
  %2808 = vmatpush1.xpose.msra.mxu0 0.0
  %2809 = vmatprep.subr.mxu0 0.0
  %2810 = vmatpush1.xpose.msra.mxu0 0.0
  %2811 = vmatprep.subr.mxu0 0.0
  %2812 = vmatpush1.xpose.msra.mxu0 0.0
  %2813 = vmatprep.subr.mxu0 0.0
  %2814 = vmatpush1.xpose.msra.mxu0 0.0
  %2815 = vmatprep.mubr.f32.mxu0 0.0
  %2816 = vmatmul.mubr.f32.gmra.mrb[0].mxu0 %v2747
  %v2817 = vpop.f32.mrb[0].mxu0
  %v2818 = vadd.f32 0.0, %v2817
  %v2819 = vpop.f32.mrb[0].mxu0
  %2820 = vdwg.mxu0
  %2821 = vrot.lane.b32.xlu0 %v2245, 120
  %v2822 = vpop.permute.xlu0 %2821
  %2823 = vrot.lane.b32.xlu0 %v2245, 88
  %v2824 = vpop.permute.xlu0 %2823
  %v2825 = vsel %vm226, %v2822, 0
  %v2827 = vsel %vm226, %v2824, 0
  %2829 = vmatprep.subr.mxu0 0.0
  %2830 = vmatpush1.xpose.msra.mxu0 %v2827
  %2831 = vmatprep.subr.mxu0 0.0
  %2832 = vmatpush1.xpose.msra.mxu0 0.0
  %2833 = vmatprep.subr.mxu0 0.0
  %2834 = vmatpush1.xpose.msra.mxu0 0.0
  %2835 = vmatprep.subr.mxu0 0.0
  %2836 = vmatpush1.xpose.msra.mxu0 0.0
  %2837 = vmatprep.subr.mxu0 0.0
  %2838 = vmatpush1.xpose.msra.mxu0 0.0
  %2839 = vmatprep.subr.mxu0 0.0
  %2840 = vmatpush1.xpose.msra.mxu0 0.0
  %2841 = vmatprep.subr.mxu0 0.0
  %2842 = vmatpush1.xpose.msra.mxu0 0.0
  %2843 = vmatprep.subr.mxu0 0.0
  %2844 = vmatpush1.xpose.msra.mxu0 0.0
  %2845 = vmatprep.subr.mxu0 0.0
  %2846 = vmatpush1.xpose.msra.mxu0 0.0
  %2847 = vmatprep.subr.mxu0 0.0
  %2848 = vmatpush1.xpose.msra.mxu0 0.0
  %2849 = vmatprep.subr.mxu0 0.0
  %2850 = vmatpush1.xpose.msra.mxu0 0.0
  %2851 = vmatprep.subr.mxu0 0.0
  %2852 = vmatpush1.xpose.msra.mxu0 0.0
  %2853 = vmatprep.subr.mxu0 0.0
  %2854 = vmatpush1.xpose.msra.mxu0 0.0
  %2855 = vmatprep.subr.mxu0 0.0
  %2856 = vmatpush1.xpose.msra.mxu0 0.0
  %2857 = vmatprep.subr.mxu0 0.0
  %2858 = vmatpush1.xpose.msra.mxu0 0.0
  %2859 = vmatprep.subr.mxu0 0.0
  %2860 = vmatpush1.xpose.msra.mxu0 0.0
  %2861 = vmatprep.subr.mxu0 0.0
  %2862 = vmatpush1.xpose.msra.mxu0 0.0
  %2863 = vmatprep.subr.mxu0 0.0
  %2864 = vmatpush1.xpose.msra.mxu0 0.0
  %2865 = vmatprep.subr.mxu0 0.0
  %2866 = vmatpush1.xpose.msra.mxu0 0.0
  %2867 = vmatprep.subr.mxu0 0.0
  %2868 = vmatpush1.xpose.msra.mxu0 0.0
  %2869 = vmatprep.subr.mxu0 0.0
  %2870 = vmatpush1.xpose.msra.mxu0 0.0
  %2871 = vmatprep.subr.mxu0 0.0
  %2872 = vmatpush1.xpose.msra.mxu0 0.0
  %2873 = vmatprep.subr.mxu0 0.0
  %2874 = vmatpush1.xpose.msra.mxu0 0.0
  %2875 = vmatprep.subr.mxu0 0.0
  %2876 = vmatpush1.xpose.msra.mxu0 0.0
  %2877 = vmatprep.subr.mxu0 0.0
  %2878 = vmatpush1.xpose.msra.mxu0 0.0
  %2879 = vmatprep.subr.mxu0 0.0
  %2880 = vmatpush1.xpose.msra.mxu0 0.0
  %2881 = vmatprep.subr.mxu0 0.0
  %2882 = vmatpush1.xpose.msra.mxu0 0.0
  %2883 = vmatprep.subr.mxu0 0.0
  %2884 = vmatpush1.xpose.msra.mxu0 0.0
  %2885 = vmatprep.subr.mxu0 0.0
  %2886 = vmatpush1.xpose.msra.mxu0 0.0
  %2887 = vmatprep.subr.mxu0 0.0
  %2888 = vmatpush1.xpose.msra.mxu0 0.0
  %2889 = vmatprep.subr.mxu0 0.0
  %2890 = vmatpush1.xpose.msra.mxu0 0.0
  %2891 = vmatprep.subr.mxu0 0.0
  %2892 = vmatpush1.xpose.msra.mxu0 0.0
  %2893 = vmatprep.mubr.f32.mxu0 0.0
  %2894 = vmatmul.mubr.f32.gmra.mrb[0].mxu0 %v2825
  %v2895 = vpop.f32.mrb[0].mxu0
  %v2896 = vadd.f32 0.0, %v2895
  %v2897 = vpop.f32.mrb[0].mxu0
  %2898 = vdwg.mxu0
  %v2899 = vsel %vm226, %v2818, -inf
  %2900 = vmax.xlane.f32.xlu0 %v2899
  %v2901 = vpop.xlane.xlu0 %2900
  %v2902 = vsel %vm226, %v2896, -inf
  %2903 = vmax.xlane.f32.xlu0 %v2902
  %v2904 = vpop.xlane.xlu0 %2903
  %v2905 = vsub.f32 %v2818, %v2901
  %v2906 = vsub.f32 %v2896, %v2904
  %v2907 = vmul.f32 %v2905, 1.442695
  %v2908 = vpow.pop %v2907
  %v2909 = vmul.f32 %v2906, 1.442695
  %v2910 = vpow.pop %v2909
  %v2911 = vsel %vm226, %v2908, 0.0
  %2912 = vadd.xlane.f32.xlu0 %v2911
  %v2913 = vpop.xlane.xlu0 %2912
  %v2914 = vsel %vm226, %v2910, 0.0
  %2915 = vadd.xlane.f32.xlu0 %v2914
  %v2916 = vpop.xlane.xlu0 %2915
  %v2917 = vrcp.pop %v2913
  %v2918 = vmul.f32 %v2908, %v2917
  %v2919 = vrcp.pop %v2916
  %v2920 = vmul.f32 %v2910, %v2919
  %2922 = vrot.lane.b32.xlu0 %v2325, 120
  %v2923 = vpop.permute.xlu0 %2922
  %v2926 = vsel %vm226, %v2918, 0
  %2928 = vmatprep.subr.mxu0 0.0
  %2929 = vmatpush1.msra.mxu0 %v2923
  %2930 = vmatprep.subr.mxu0 0.0
  %2931 = vmatpush1.msra.mxu0 0.0
  %2932 = vmatprep.subr.mxu0 0.0
  %2933 = vmatpush1.msra.mxu0 0.0
  %2934 = vmatprep.subr.mxu0 0.0
  %2935 = vmatpush1.msra.mxu0 0.0
  %2936 = vmatprep.subr.mxu0 0.0
  %2937 = vmatpush1.msra.mxu0 0.0
  %2938 = vmatprep.subr.mxu0 0.0
  %2939 = vmatpush1.msra.mxu0 0.0
  %2940 = vmatprep.subr.mxu0 0.0
  %2941 = vmatpush1.msra.mxu0 0.0
  %2942 = vmatprep.subr.mxu0 0.0
  %2943 = vmatpush1.msra.mxu0 0.0
  %2944 = vmatprep.subr.mxu0 0.0
  %2945 = vmatpush1.msra.mxu0 0.0
  %2946 = vmatprep.subr.mxu0 0.0
  %2947 = vmatpush1.msra.mxu0 0.0
  %2948 = vmatprep.subr.mxu0 0.0
  %2949 = vmatpush1.msra.mxu0 0.0
  %2950 = vmatprep.subr.mxu0 0.0
  %2951 = vmatpush1.msra.mxu0 0.0
  %2952 = vmatprep.subr.mxu0 0.0
  %2953 = vmatpush1.msra.mxu0 0.0
  %2954 = vmatprep.subr.mxu0 0.0
  %2955 = vmatpush1.msra.mxu0 0.0
  %2956 = vmatprep.subr.mxu0 0.0
  %2957 = vmatpush1.msra.mxu0 0.0
  %2958 = vmatprep.subr.mxu0 0.0
  %2959 = vmatpush1.msra.mxu0 0.0
  %2960 = vmatprep.subr.mxu0 0.0
  %2961 = vmatpush1.msra.mxu0 0.0
  %2962 = vmatprep.subr.mxu0 0.0
  %2963 = vmatpush1.msra.mxu0 0.0
  %2964 = vmatprep.subr.mxu0 0.0
  %2965 = vmatpush1.msra.mxu0 0.0
  %2966 = vmatprep.subr.mxu0 0.0
  %2967 = vmatpush1.msra.mxu0 0.0
  %2968 = vmatprep.subr.mxu0 0.0
  %2969 = vmatpush1.msra.mxu0 0.0
  %2970 = vmatprep.subr.mxu0 0.0
  %2971 = vmatpush1.msra.mxu0 0.0
  %2972 = vmatprep.subr.mxu0 0.0
  %2973 = vmatpush1.msra.mxu0 0.0
  %2974 = vmatprep.subr.mxu0 0.0
  %2975 = vmatpush1.msra.mxu0 0.0
  %2976 = vmatprep.subr.mxu0 0.0
  %2977 = vmatpush1.msra.mxu0 0.0
  %2978 = vmatprep.subr.mxu0 0.0
  %2979 = vmatpush1.msra.mxu0 0.0
  %2980 = vmatprep.subr.mxu0 0.0
  %2981 = vmatpush1.msra.mxu0 0.0
  %2982 = vmatprep.subr.mxu0 0.0
  %2983 = vmatpush1.msra.mxu0 0.0
  %2984 = vmatprep.subr.mxu0 0.0
  %2985 = vmatpush1.msra.mxu0 0.0
  %2986 = vmatprep.subr.mxu0 0.0
  %2987 = vmatpush1.msra.mxu0 0.0
  %2988 = vmatprep.subr.mxu0 0.0
  %2989 = vmatpush1.msra.mxu0 0.0
  %2990 = vmatprep.subr.mxu0 0.0
  %2991 = vmatpush1.msra.mxu0 0.0
  %2992 = vmatprep.mubr.f32.mxu0 0.0
  %2993 = vmatmul.mubr.f32.gmra.mrb[0].mxu0 %v2926
  %v2994 = vpop.f32.mrb[0].mxu0
  %v2995 = vadd.f32 0.0, %v2994
  %v2996 = vpop.f32.mrb[0].mxu0
  %2997 = vdwg.mxu0
  %2999 = vrot.lane.b32.xlu0 %v2330, 120
  %v3000 = vpop.permute.xlu0 %2999
  %v3003 = vsel %vm226, %v2920, 0
  %3005 = vmatprep.subr.mxu0 0.0
  %3006 = vmatpush1.msra.mxu0 %v3000
  %3007 = vmatprep.subr.mxu0 0.0
  %3008 = vmatpush1.msra.mxu0 0.0
  %3009 = vmatprep.subr.mxu0 0.0
  %3010 = vmatpush1.msra.mxu0 0.0
  %3011 = vmatprep.subr.mxu0 0.0
  %3012 = vmatpush1.msra.mxu0 0.0
  %3013 = vmatprep.subr.mxu0 0.0
  %3014 = vmatpush1.msra.mxu0 0.0
  %3015 = vmatprep.subr.mxu0 0.0
  %3016 = vmatpush1.msra.mxu0 0.0
  %3017 = vmatprep.subr.mxu0 0.0
  %3018 = vmatpush1.msra.mxu0 0.0
  %3019 = vmatprep.subr.mxu0 0.0
  %3020 = vmatpush1.msra.mxu0 0.0
  %3021 = vmatprep.subr.mxu0 0.0
  %3022 = vmatpush1.msra.mxu0 0.0
  %3023 = vmatprep.subr.mxu0 0.0
  %3024 = vmatpush1.msra.mxu0 0.0
  %3025 = vmatprep.subr.mxu0 0.0
  %3026 = vmatpush1.msra.mxu0 0.0
  %3027 = vmatprep.subr.mxu0 0.0
  %3028 = vmatpush1.msra.mxu0 0.0
  %3029 = vmatprep.subr.mxu0 0.0
  %3030 = vmatpush1.msra.mxu0 0.0
  %3031 = vmatprep.subr.mxu0 0.0
  %3032 = vmatpush1.msra.mxu0 0.0
  %3033 = vmatprep.subr.mxu0 0.0
  %3034 = vmatpush1.msra.mxu0 0.0
  %3035 = vmatprep.subr.mxu0 0.0
  %3036 = vmatpush1.msra.mxu0 0.0
  %3037 = vmatprep.subr.mxu0 0.0
  %3038 = vmatpush1.msra.mxu0 0.0
  %3039 = vmatprep.subr.mxu0 0.0
  %3040 = vmatpush1.msra.mxu0 0.0
  %3041 = vmatprep.subr.mxu0 0.0
  %3042 = vmatpush1.msra.mxu0 0.0
  %3043 = vmatprep.subr.mxu0 0.0
  %3044 = vmatpush1.msra.mxu0 0.0
  %3045 = vmatprep.subr.mxu0 0.0
  %3046 = vmatpush1.msra.mxu0 0.0
  %3047 = vmatprep.subr.mxu0 0.0
  %3048 = vmatpush1.msra.mxu0 0.0
  %3049 = vmatprep.subr.mxu0 0.0
  %3050 = vmatpush1.msra.mxu0 0.0
  %3051 = vmatprep.subr.mxu0 0.0
  %3052 = vmatpush1.msra.mxu0 0.0
  %3053 = vmatprep.subr.mxu0 0.0
  %3054 = vmatpush1.msra.mxu0 0.0
  %3055 = vmatprep.subr.mxu0 0.0
  %3056 = vmatpush1.msra.mxu0 0.0
  %3057 = vmatprep.subr.mxu0 0.0
  %3058 = vmatpush1.msra.mxu0 0.0
  %3059 = vmatprep.subr.mxu0 0.0
  %3060 = vmatpush1.msra.mxu0 0.0
  %3061 = vmatprep.subr.mxu0 0.0
  %3062 = vmatpush1.msra.mxu0 0.0
  %3063 = vmatprep.subr.mxu0 0.0
  %3064 = vmatpush1.msra.mxu0 0.0
  %3065 = vmatprep.subr.mxu0 0.0
  %3066 = vmatpush1.msra.mxu0 0.0
  %3067 = vmatprep.subr.mxu0 0.0
  %3068 = vmatpush1.msra.mxu0 0.0
  %3069 = vmatprep.mubr.f32.mxu0 0.0
  %3070 = vmatmul.mubr.f32.gmra.mrb[0].mxu0 %v3003
  %v3071 = vpop.f32.mrb[0].mxu0
  %v3072 = vadd.f32 0.0, %v3071
  %v3073 = vpop.f32.mrb[0].mxu0
  %3074 = vdwg.mxu0
  %v3075 = vld [vmem:[%s2 + $0x108] sm:$0xff]
  %v3077 = vsel %vm226, %v2995, 0
  %v3080 = vsel %vm226, %v3072, 0
  %3082 = vmatprep.subr.mxu0 0.0
  %3083 = vmatpush1.msra.mxu0 %v3075
  %3084 = vmatprep.subr.mxu0 0.0
  %3085 = vmatpush1.msra.mxu0 0.0
  %3086 = vmatprep.subr.mxu0 0.0
  %3087 = vmatpush1.msra.mxu0 0.0
  %3088 = vmatprep.subr.mxu0 0.0
  %3089 = vmatpush1.msra.mxu0 0.0
  %3090 = vmatprep.subr.mxu0 0.0
  %3091 = vmatpush1.msra.mxu0 0.0
  %3092 = vmatprep.subr.mxu0 0.0
  %3093 = vmatpush1.msra.mxu0 0.0
  %3094 = vmatprep.subr.mxu0 0.0
  %3095 = vmatpush1.msra.mxu0 0.0
  %3096 = vmatprep.subr.mxu0 0.0
  %3097 = vmatpush1.msra.mxu0 0.0
  %3098 = vmatprep.subr.mxu0 0.0
  %3099 = vmatpush1.msra.mxu0 0.0
  %3100 = vmatprep.subr.mxu0 0.0
  %3101 = vmatpush1.msra.mxu0 0.0
  %3102 = vmatprep.subr.mxu0 0.0
  %3103 = vmatpush1.msra.mxu0 0.0
  %3104 = vmatprep.subr.mxu0 0.0
  %3105 = vmatpush1.msra.mxu0 0.0
  %3106 = vmatprep.subr.mxu0 0.0
  %3107 = vmatpush1.msra.mxu0 0.0
  %3108 = vmatprep.subr.mxu0 0.0
  %3109 = vmatpush1.msra.mxu0 0.0
  %3110 = vmatprep.subr.mxu0 0.0
  %3111 = vmatpush1.msra.mxu0 0.0
  %3112 = vmatprep.subr.mxu0 0.0
  %3113 = vmatpush1.msra.mxu0 0.0
  %3114 = vmatprep.subr.mxu0 0.0
  %3115 = vmatpush1.msra.mxu0 0.0
  %3116 = vmatprep.subr.mxu0 0.0
  %3117 = vmatpush1.msra.mxu0 0.0
  %3118 = vmatprep.subr.mxu0 0.0
  %3119 = vmatpush1.msra.mxu0 0.0
  %3120 = vmatprep.subr.mxu0 0.0
  %3121 = vmatpush1.msra.mxu0 0.0
  %3122 = vmatprep.subr.mxu0 0.0
  %3123 = vmatpush1.msra.mxu0 0.0
  %3124 = vmatprep.subr.mxu0 0.0
  %3125 = vmatpush1.msra.mxu0 0.0
  %3126 = vmatprep.subr.mxu0 0.0
  %3127 = vmatpush1.msra.mxu0 0.0
  %3128 = vmatprep.subr.mxu0 0.0
  %3129 = vmatpush1.msra.mxu0 0.0
  %3130 = vmatprep.subr.mxu0 0.0
  %3131 = vmatpush1.msra.mxu0 0.0
  %3132 = vmatprep.subr.mxu0 0.0
  %3133 = vmatpush1.msra.mxu0 0.0
  %3134 = vmatprep.subr.mxu0 0.0
  %3135 = vmatpush1.msra.mxu0 0.0
  %3136 = vmatprep.subr.mxu0 0.0
  %3137 = vmatpush1.msra.mxu0 0.0
  %3138 = vmatprep.subr.mxu0 0.0
  %3139 = vmatpush1.msra.mxu0 0.0
  %3140 = vmatprep.subr.mxu0 0.0
  %3141 = vmatpush1.msra.mxu0 0.0
  %3142 = vmatprep.subr.mxu0 0.0
  %3143 = vmatpush1.msra.mxu0 0.0
  %3144 = vmatprep.subr.mxu0 0.0
  %3145 = vmatpush1.msra.mxu0 0.0
  %3146 = vmatprep.mubr.f32.mxu0 0.0
  %3147 = vmatmul.mubr.f32.gmra.mrb[0].mxu0 %v3077
  %v3148 = vpop.f32.mrb[0].mxu0
  %v3149 = vadd.f32 0.0, %v3148
  %v3150 = vpop.f32.mrb[0].mxu0
  %3151 = vmatprep.mubr.f32.mxu0 0.0
  %3152 = vmatmul.mubr.f32.gmra.mrb[0].mxu0 %v3080
  %v3153 = vpop.f32.mrb[0].mxu0
  %v3154 = vadd.f32 0.0, %v3153
  %v3155 = vpop.f32.mrb[0].mxu0
  %3156 = vdwg.mxu0
  %v3157 = vadd.f32 %v2741, %v3149
  %v3158 = vadd.f32 %v2742, %v3154
  %3159 = vrot.lane.b32.xlu0 %v2240, 112
  %v3160 = vpop.permute.xlu0 %3159
  %3161 = vrot.lane.b32.xlu0 %v2240, 80
  %v3162 = vpop.permute.xlu0 %3161
  %v3163 = vsel %vm226, %v3160, 0
  %v3165 = vsel %vm226, %v3162, 0
  %3167 = vmatprep.subr.mxu0 0.0
  %3168 = vmatpush1.xpose.msra.mxu0 %v3165
  %3169 = vmatprep.subr.mxu0 0.0
  %3170 = vmatpush1.xpose.msra.mxu0 0.0
  %3171 = vmatprep.subr.mxu0 0.0
  %3172 = vmatpush1.xpose.msra.mxu0 0.0
  %3173 = vmatprep.subr.mxu0 0.0
  %3174 = vmatpush1.xpose.msra.mxu0 0.0
  %3175 = vmatprep.subr.mxu0 0.0
  %3176 = vmatpush1.xpose.msra.mxu0 0.0
  %3177 = vmatprep.subr.mxu0 0.0
  %3178 = vmatpush1.xpose.msra.mxu0 0.0
  %3179 = vmatprep.subr.mxu0 0.0
  %3180 = vmatpush1.xpose.msra.mxu0 0.0
  %3181 = vmatprep.subr.mxu0 0.0
  %3182 = vmatpush1.xpose.msra.mxu0 0.0
  %3183 = vmatprep.subr.mxu0 0.0
  %3184 = vmatpush1.xpose.msra.mxu0 0.0
  %3185 = vmatprep.subr.mxu0 0.0
  %3186 = vmatpush1.xpose.msra.mxu0 0.0
  %3187 = vmatprep.subr.mxu0 0.0
  %3188 = vmatpush1.xpose.msra.mxu0 0.0
  %3189 = vmatprep.subr.mxu0 0.0
  %3190 = vmatpush1.xpose.msra.mxu0 0.0
  %3191 = vmatprep.subr.mxu0 0.0
  %3192 = vmatpush1.xpose.msra.mxu0 0.0
  %3193 = vmatprep.subr.mxu0 0.0
  %3194 = vmatpush1.xpose.msra.mxu0 0.0
  %3195 = vmatprep.subr.mxu0 0.0
  %3196 = vmatpush1.xpose.msra.mxu0 0.0
  %3197 = vmatprep.subr.mxu0 0.0
  %3198 = vmatpush1.xpose.msra.mxu0 0.0
  %3199 = vmatprep.subr.mxu0 0.0
  %3200 = vmatpush1.xpose.msra.mxu0 0.0
  %3201 = vmatprep.subr.mxu0 0.0
  %3202 = vmatpush1.xpose.msra.mxu0 0.0
  %3203 = vmatprep.subr.mxu0 0.0
  %3204 = vmatpush1.xpose.msra.mxu0 0.0
  %3205 = vmatprep.subr.mxu0 0.0
  %3206 = vmatpush1.xpose.msra.mxu0 0.0
  %3207 = vmatprep.subr.mxu0 0.0
  %3208 = vmatpush1.xpose.msra.mxu0 0.0
  %3209 = vmatprep.subr.mxu0 0.0
  %3210 = vmatpush1.xpose.msra.mxu0 0.0
  %3211 = vmatprep.subr.mxu0 0.0
  %3212 = vmatpush1.xpose.msra.mxu0 0.0
  %3213 = vmatprep.subr.mxu0 0.0
  %3214 = vmatpush1.xpose.msra.mxu0 0.0
  %3215 = vmatprep.subr.mxu0 0.0
  %3216 = vmatpush1.xpose.msra.mxu0 0.0
  %3217 = vmatprep.subr.mxu0 0.0
  %3218 = vmatpush1.xpose.msra.mxu0 0.0
  %3219 = vmatprep.subr.mxu0 0.0
  %3220 = vmatpush1.xpose.msra.mxu0 0.0
  %3221 = vmatprep.subr.mxu0 0.0
  %3222 = vmatpush1.xpose.msra.mxu0 0.0
  %3223 = vmatprep.subr.mxu0 0.0
  %3224 = vmatpush1.xpose.msra.mxu0 0.0
  %3225 = vmatprep.subr.mxu0 0.0
  %3226 = vmatpush1.xpose.msra.mxu0 0.0
  %3227 = vmatprep.subr.mxu0 0.0
  %3228 = vmatpush1.xpose.msra.mxu0 0.0
  %3229 = vmatprep.subr.mxu0 0.0
  %3230 = vmatpush1.xpose.msra.mxu0 0.0
  %3231 = vmatprep.mubr.f32.mxu0 0.0
  %3232 = vmatmul.mubr.f32.gmra.mrb[0].mxu0 %v3163
  %v3233 = vpop.f32.mrb[0].mxu0
  %v3234 = vadd.f32 0.0, %v3233
  %v3235 = vpop.f32.mrb[0].mxu0
  %3236 = vdwg.mxu0
  %3237 = vrot.lane.b32.xlu0 %v2245, 112
  %v3238 = vpop.permute.xlu0 %3237
  %3239 = vrot.lane.b32.xlu0 %v2245, 80
  %v3240 = vpop.permute.xlu0 %3239
  %v3241 = vsel %vm226, %v3238, 0
  %v3243 = vsel %vm226, %v3240, 0
  %3245 = vmatprep.subr.mxu0 0.0
  %3246 = vmatpush1.xpose.msra.mxu0 %v3243
  %3247 = vmatprep.subr.mxu0 0.0
  %3248 = vmatpush1.xpose.msra.mxu0 0.0
  %3249 = vmatprep.subr.mxu0 0.0
  %3250 = vmatpush1.xpose.msra.mxu0 0.0
  %3251 = vmatprep.subr.mxu0 0.0
  %3252 = vmatpush1.xpose.msra.mxu0 0.0
  %3253 = vmatprep.subr.mxu0 0.0
  %3254 = vmatpush1.xpose.msra.mxu0 0.0
  %3255 = vmatprep.subr.mxu0 0.0
  %3256 = vmatpush1.xpose.msra.mxu0 0.0
  %3257 = vmatprep.subr.mxu0 0.0
  %3258 = vmatpush1.xpose.msra.mxu0 0.0
  %3259 = vmatprep.subr.mxu0 0.0
  %3260 = vmatpush1.xpose.msra.mxu0 0.0
  %3261 = vmatprep.subr.mxu0 0.0
  %3262 = vmatpush1.xpose.msra.mxu0 0.0
  %3263 = vmatprep.subr.mxu0 0.0
  %3264 = vmatpush1.xpose.msra.mxu0 0.0
  %3265 = vmatprep.subr.mxu0 0.0
  %3266 = vmatpush1.xpose.msra.mxu0 0.0
  %3267 = vmatprep.subr.mxu0 0.0
  %3268 = vmatpush1.xpose.msra.mxu0 0.0
  %3269 = vmatprep.subr.mxu0 0.0
  %3270 = vmatpush1.xpose.msra.mxu0 0.0
  %3271 = vmatprep.subr.mxu0 0.0
  %3272 = vmatpush1.xpose.msra.mxu0 0.0
  %3273 = vmatprep.subr.mxu0 0.0
  %3274 = vmatpush1.xpose.msra.mxu0 0.0
  %3275 = vmatprep.subr.mxu0 0.0
  %3276 = vmatpush1.xpose.msra.mxu0 0.0
  %3277 = vmatprep.subr.mxu0 0.0
  %3278 = vmatpush1.xpose.msra.mxu0 0.0
  %3279 = vmatprep.subr.mxu0 0.0
  %3280 = vmatpush1.xpose.msra.mxu0 0.0
  %3281 = vmatprep.subr.mxu0 0.0
  %3282 = vmatpush1.xpose.msra.mxu0 0.0
  %3283 = vmatprep.subr.mxu0 0.0
  %3284 = vmatpush1.xpose.msra.mxu0 0.0
  %3285 = vmatprep.subr.mxu0 0.0
  %3286 = vmatpush1.xpose.msra.mxu0 0.0
  %3287 = vmatprep.subr.mxu0 0.0
  %3288 = vmatpush1.xpose.msra.mxu0 0.0
  %3289 = vmatprep.subr.mxu0 0.0
  %3290 = vmatpush1.xpose.msra.mxu0 0.0
  %3291 = vmatprep.subr.mxu0 0.0
  %3292 = vmatpush1.xpose.msra.mxu0 0.0
  %3293 = vmatprep.subr.mxu0 0.0
  %3294 = vmatpush1.xpose.msra.mxu0 0.0
  %3295 = vmatprep.subr.mxu0 0.0
  %3296 = vmatpush1.xpose.msra.mxu0 0.0
  %3297 = vmatprep.subr.mxu0 0.0
  %3298 = vmatpush1.xpose.msra.mxu0 0.0
  %3299 = vmatprep.subr.mxu0 0.0
  %3300 = vmatpush1.xpose.msra.mxu0 0.0
  %3301 = vmatprep.subr.mxu0 0.0
  %3302 = vmatpush1.xpose.msra.mxu0 0.0
  %3303 = vmatprep.subr.mxu0 0.0
  %3304 = vmatpush1.xpose.msra.mxu0 0.0
  %3305 = vmatprep.subr.mxu0 0.0
  %3306 = vmatpush1.xpose.msra.mxu0 0.0
  %3307 = vmatprep.subr.mxu0 0.0
  %3308 = vmatpush1.xpose.msra.mxu0 0.0
  %3309 = vmatprep.mubr.f32.mxu0 0.0
  %3310 = vmatmul.mubr.f32.gmra.mrb[0].mxu0 %v3241
  %v3311 = vpop.f32.mrb[0].mxu0
  %v3312 = vadd.f32 0.0, %v3311
  %v3313 = vpop.f32.mrb[0].mxu0
  %3314 = vdwg.mxu0
  %v3315 = vsel %vm226, %v3234, -inf
  %3316 = vmax.xlane.f32.xlu0 %v3315
  %v3317 = vpop.xlane.xlu0 %3316
  %v3318 = vsel %vm226, %v3312, -inf
  %3319 = vmax.xlane.f32.xlu0 %v3318
  %v3320 = vpop.xlane.xlu0 %3319
  %v3321 = vsub.f32 %v3234, %v3317
  %v3322 = vsub.f32 %v3312, %v3320
  %v3323 = vmul.f32 %v3321, 1.442695
  %v3324 = vpow.pop %v3323
  %v3325 = vmul.f32 %v3322, 1.442695
  %v3326 = vpow.pop %v3325
  %v3327 = vsel %vm226, %v3324, 0.0
  %3328 = vadd.xlane.f32.xlu0 %v3327
  %v3329 = vpop.xlane.xlu0 %3328
  %v3330 = vsel %vm226, %v3326, 0.0
  %3331 = vadd.xlane.f32.xlu0 %v3330
  %v3332 = vpop.xlane.xlu0 %3331
  %v3333 = vrcp.pop %v3329
  %v3334 = vmul.f32 %v3324, %v3333
  %v3335 = vrcp.pop %v3332
  %v3336 = vmul.f32 %v3326, %v3335
  %3337 = vrot.lane.b32.xlu0 %v2325, 112
  %v3338 = vpop.permute.xlu0 %3337
  %v3341 = vsel %vm226, %v3334, 0
  %3343 = vmatprep.subr.mxu0 0.0
  %3344 = vmatpush1.msra.mxu0 %v3338
  %3345 = vmatprep.subr.mxu0 0.0
  %3346 = vmatpush1.msra.mxu0 0.0
  %3347 = vmatprep.subr.mxu0 0.0
  %3348 = vmatpush1.msra.mxu0 0.0
  %3349 = vmatprep.subr.mxu0 0.0
  %3350 = vmatpush1.msra.mxu0 0.0
  %3351 = vmatprep.subr.mxu0 0.0
  %3352 = vmatpush1.msra.mxu0 0.0
  %3353 = vmatprep.subr.mxu0 0.0
  %3354 = vmatpush1.msra.mxu0 0.0
  %3355 = vmatprep.subr.mxu0 0.0
  %3356 = vmatpush1.msra.mxu0 0.0
  %3357 = vmatprep.subr.mxu0 0.0
  %3358 = vmatpush1.msra.mxu0 0.0
  %3359 = vmatprep.subr.mxu0 0.0
  %3360 = vmatpush1.msra.mxu0 0.0
  %3361 = vmatprep.subr.mxu0 0.0
  %3362 = vmatpush1.msra.mxu0 0.0
  %3363 = vmatprep.subr.mxu0 0.0
  %3364 = vmatpush1.msra.mxu0 0.0
  %3365 = vmatprep.subr.mxu0 0.0
  %3366 = vmatpush1.msra.mxu0 0.0
  %3367 = vmatprep.subr.mxu0 0.0
  %3368 = vmatpush1.msra.mxu0 0.0
  %3369 = vmatprep.subr.mxu0 0.0
  %3370 = vmatpush1.msra.mxu0 0.0
  %3371 = vmatprep.subr.mxu0 0.0
  %3372 = vmatpush1.msra.mxu0 0.0
  %3373 = vmatprep.subr.mxu0 0.0
  %3374 = vmatpush1.msra.mxu0 0.0
  %3375 = vmatprep.subr.mxu0 0.0
  %3376 = vmatpush1.msra.mxu0 0.0
  %3377 = vmatprep.subr.mxu0 0.0
  %3378 = vmatpush1.msra.mxu0 0.0
  %3379 = vmatprep.subr.mxu0 0.0
  %3380 = vmatpush1.msra.mxu0 0.0
  %3381 = vmatprep.subr.mxu0 0.0
  %3382 = vmatpush1.msra.mxu0 0.0
  %3383 = vmatprep.subr.mxu0 0.0
  %3384 = vmatpush1.msra.mxu0 0.0
  %3385 = vmatprep.subr.mxu0 0.0
  %3386 = vmatpush1.msra.mxu0 0.0
  %3387 = vmatprep.subr.mxu0 0.0
  %3388 = vmatpush1.msra.mxu0 0.0
  %3389 = vmatprep.subr.mxu0 0.0
  %3390 = vmatpush1.msra.mxu0 0.0
  %3391 = vmatprep.subr.mxu0 0.0
  %3392 = vmatpush1.msra.mxu0 0.0
  %3393 = vmatprep.subr.mxu0 0.0
  %3394 = vmatpush1.msra.mxu0 0.0
  %3395 = vmatprep.subr.mxu0 0.0
  %3396 = vmatpush1.msra.mxu0 0.0
  %3397 = vmatprep.subr.mxu0 0.0
  %3398 = vmatpush1.msra.mxu0 0.0
  %3399 = vmatprep.subr.mxu0 0.0
  %3400 = vmatpush1.msra.mxu0 0.0
  %3401 = vmatprep.subr.mxu0 0.0
  %3402 = vmatpush1.msra.mxu0 0.0
  %3403 = vmatprep.subr.mxu0 0.0
  %3404 = vmatpush1.msra.mxu0 0.0
  %3405 = vmatprep.subr.mxu0 0.0
  %3406 = vmatpush1.msra.mxu0 0.0
  %3407 = vmatprep.mubr.f32.mxu0 0.0
  %3408 = vmatmul.mubr.f32.gmra.mrb[0].mxu0 %v3341
  %v3409 = vpop.f32.mrb[0].mxu0
  %v3410 = vadd.f32 0.0, %v3409
  %v3411 = vpop.f32.mrb[0].mxu0
  %3412 = vdwg.mxu0
  %3413 = vrot.lane.b32.xlu0 %v2330, 112
  %v3414 = vpop.permute.xlu0 %3413
  %v3417 = vsel %vm226, %v3336, 0
  %3419 = vmatprep.subr.mxu0 0.0
  %3420 = vmatpush1.msra.mxu0 %v3414
  %3421 = vmatprep.subr.mxu0 0.0
  %3422 = vmatpush1.msra.mxu0 0.0
  %3423 = vmatprep.subr.mxu0 0.0
  %3424 = vmatpush1.msra.mxu0 0.0
  %3425 = vmatprep.subr.mxu0 0.0
  %3426 = vmatpush1.msra.mxu0 0.0
  %3427 = vmatprep.subr.mxu0 0.0
  %3428 = vmatpush1.msra.mxu0 0.0
  %3429 = vmatprep.subr.mxu0 0.0
  %3430 = vmatpush1.msra.mxu0 0.0
  %3431 = vmatprep.subr.mxu0 0.0
  %3432 = vmatpush1.msra.mxu0 0.0
  %3433 = vmatprep.subr.mxu0 0.0
  %3434 = vmatpush1.msra.mxu0 0.0
  %3435 = vmatprep.subr.mxu0 0.0
  %3436 = vmatpush1.msra.mxu0 0.0
  %3437 = vmatprep.subr.mxu0 0.0
  %3438 = vmatpush1.msra.mxu0 0.0
  %3439 = vmatprep.subr.mxu0 0.0
  %3440 = vmatpush1.msra.mxu0 0.0
  %3441 = vmatprep.subr.mxu0 0.0
  %3442 = vmatpush1.msra.mxu0 0.0
  %3443 = vmatprep.subr.mxu0 0.0
  %3444 = vmatpush1.msra.mxu0 0.0
  %3445 = vmatprep.subr.mxu0 0.0
  %3446 = vmatpush1.msra.mxu0 0.0
  %3447 = vmatprep.subr.mxu0 0.0
  %3448 = vmatpush1.msra.mxu0 0.0
  %3449 = vmatprep.subr.mxu0 0.0
  %3450 = vmatpush1.msra.mxu0 0.0
  %3451 = vmatprep.subr.mxu0 0.0
  %3452 = vmatpush1.msra.mxu0 0.0
  %3453 = vmatprep.subr.mxu0 0.0
  %3454 = vmatpush1.msra.mxu0 0.0
  %3455 = vmatprep.subr.mxu0 0.0
  %3456 = vmatpush1.msra.mxu0 0.0
  %3457 = vmatprep.subr.mxu0 0.0
  %3458 = vmatpush1.msra.mxu0 0.0
  %3459 = vmatprep.subr.mxu0 0.0
  %3460 = vmatpush1.msra.mxu0 0.0
  %3461 = vmatprep.subr.mxu0 0.0
  %3462 = vmatpush1.msra.mxu0 0.0
  %3463 = vmatprep.subr.mxu0 0.0
  %3464 = vmatpush1.msra.mxu0 0.0
  %3465 = vmatprep.subr.mxu0 0.0
  %3466 = vmatpush1.msra.mxu0 0.0
  %3467 = vmatprep.subr.mxu0 0.0
  %3468 = vmatpush1.msra.mxu0 0.0
  %3469 = vmatprep.subr.mxu0 0.0
  %3470 = vmatpush1.msra.mxu0 0.0
  %3471 = vmatprep.subr.mxu0 0.0
  %3472 = vmatpush1.msra.mxu0 0.0
  %3473 = vmatprep.subr.mxu0 0.0
  %3474 = vmatpush1.msra.mxu0 0.0
  %3475 = vmatprep.subr.mxu0 0.0
  %3476 = vmatpush1.msra.mxu0 0.0
  %3477 = vmatprep.subr.mxu0 0.0
  %3478 = vmatpush1.msra.mxu0 0.0
  %3479 = vmatprep.subr.mxu0 0.0
  %3480 = vmatpush1.msra.mxu0 0.0
  %3481 = vmatprep.subr.mxu0 0.0
  %3482 = vmatpush1.msra.mxu0 0.0
  %3483 = vmatprep.mubr.f32.mxu0 0.0
  %3484 = vmatmul.mubr.f32.gmra.mrb[0].mxu0 %v3417
  %v3485 = vpop.f32.mrb[0].mxu0
  %v3486 = vadd.f32 0.0, %v3485
  %v3487 = vpop.f32.mrb[0].mxu0
  %3488 = vdwg.mxu0
  %v3489 = vld [vmem:[%s2 + $0x110] sm:$0xff]
  %v3491 = vsel %vm226, %v3410, 0
  %v3494 = vsel %vm226, %v3486, 0
  %3496 = vmatprep.subr.mxu0 0.0
  %3497 = vmatpush1.msra.mxu0 %v3489
  %3498 = vmatprep.subr.mxu0 0.0
  %3499 = vmatpush1.msra.mxu0 0.0
  %3500 = vmatprep.subr.mxu0 0.0
  %3501 = vmatpush1.msra.mxu0 0.0
  %3502 = vmatprep.subr.mxu0 0.0
  %3503 = vmatpush1.msra.mxu0 0.0
  %3504 = vmatprep.subr.mxu0 0.0
  %3505 = vmatpush1.msra.mxu0 0.0
  %3506 = vmatprep.subr.mxu0 0.0
  %3507 = vmatpush1.msra.mxu0 0.0
  %3508 = vmatprep.subr.mxu0 0.0
  %3509 = vmatpush1.msra.mxu0 0.0
  %3510 = vmatprep.subr.mxu0 0.0
  %3511 = vmatpush1.msra.mxu0 0.0
  %3512 = vmatprep.subr.mxu0 0.0
  %3513 = vmatpush1.msra.mxu0 0.0
  %3514 = vmatprep.subr.mxu0 0.0
  %3515 = vmatpush1.msra.mxu0 0.0
  %3516 = vmatprep.subr.mxu0 0.0
  %3517 = vmatpush1.msra.mxu0 0.0
  %3518 = vmatprep.subr.mxu0 0.0
  %3519 = vmatpush1.msra.mxu0 0.0
  %3520 = vmatprep.subr.mxu0 0.0
  %3521 = vmatpush1.msra.mxu0 0.0
  %3522 = vmatprep.subr.mxu0 0.0
  %3523 = vmatpush1.msra.mxu0 0.0
  %3524 = vmatprep.subr.mxu0 0.0
  %3525 = vmatpush1.msra.mxu0 0.0
  %3526 = vmatprep.subr.mxu0 0.0
  %3527 = vmatpush1.msra.mxu0 0.0
  %3528 = vmatprep.subr.mxu0 0.0
  %3529 = vmatpush1.msra.mxu0 0.0
  %3530 = vmatprep.subr.mxu0 0.0
  %3531 = vmatpush1.msra.mxu0 0.0
  %3532 = vmatprep.subr.mxu0 0.0
  %3533 = vmatpush1.msra.mxu0 0.0
  %3534 = vmatprep.subr.mxu0 0.0
  %3535 = vmatpush1.msra.mxu0 0.0
  %3536 = vmatprep.subr.mxu0 0.0
  %3537 = vmatpush1.msra.mxu0 0.0
  %3538 = vmatprep.subr.mxu0 0.0
  %3539 = vmatpush1.msra.mxu0 0.0
  %3540 = vmatprep.subr.mxu0 0.0
  %3541 = vmatpush1.msra.mxu0 0.0
  %3542 = vmatprep.subr.mxu0 0.0
  %3543 = vmatpush1.msra.mxu0 0.0
  %3544 = vmatprep.subr.mxu0 0.0
  %3545 = vmatpush1.msra.mxu0 0.0
  %3546 = vmatprep.subr.mxu0 0.0
  %3547 = vmatpush1.msra.mxu0 0.0
  %3548 = vmatprep.subr.mxu0 0.0
  %3549 = vmatpush1.msra.mxu0 0.0
  %3550 = vmatprep.subr.mxu0 0.0
  %3551 = vmatpush1.msra.mxu0 0.0
  %3552 = vmatprep.subr.mxu0 0.0
  %3553 = vmatpush1.msra.mxu0 0.0
  %3554 = vmatprep.subr.mxu0 0.0
  %3555 = vmatpush1.msra.mxu0 0.0
  %3556 = vmatprep.subr.mxu0 0.0
  %3557 = vmatpush1.msra.mxu0 0.0
  %3558 = vmatprep.subr.mxu0 0.0
  %3559 = vmatpush1.msra.mxu0 0.0
  %3560 = vmatprep.mubr.f32.mxu0 0.0
  %3561 = vmatmul.mubr.f32.gmra.mrb[0].mxu0 %v3491
  %v3562 = vpop.f32.mrb[0].mxu0
  %v3563 = vadd.f32 0.0, %v3562
  %v3564 = vpop.f32.mrb[0].mxu0
  %3565 = vmatprep.mubr.f32.mxu0 0.0
  %3566 = vmatmul.mubr.f32.gmra.mrb[0].mxu0 %v3494
  %v3567 = vpop.f32.mrb[0].mxu0
  %v3568 = vadd.f32 0.0, %v3567
  %v3569 = vpop.f32.mrb[0].mxu0
  %3570 = vdwg.mxu0
  %v3571 = vadd.f32 %v3157, %v3563
  %v3572 = vadd.f32 %v3158, %v3568
  %3573 = vrot.lane.b32.xlu0 %v2240, 104
  %v3574 = vpop.permute.xlu0 %3573
  %3575 = vrot.lane.b32.xlu0 %v2240, 72
  %v3576 = vpop.permute.xlu0 %3575
  %v3577 = vsel %vm226, %v3574, 0
  %v3579 = vsel %vm226, %v3576, 0
  %3581 = vmatprep.subr.mxu0 0.0
  %3582 = vmatpush1.xpose.msra.mxu0 %v3579
  %3583 = vmatprep.subr.mxu0 0.0
  %3584 = vmatpush1.xpose.msra.mxu0 0.0
  %3585 = vmatprep.subr.mxu0 0.0
  %3586 = vmatpush1.xpose.msra.mxu0 0.0
  %3587 = vmatprep.subr.mxu0 0.0
  %3588 = vmatpush1.xpose.msra.mxu0 0.0
  %3589 = vmatprep.subr.mxu0 0.0
  %3590 = vmatpush1.xpose.msra.mxu0 0.0
  %3591 = vmatprep.subr.mxu0 0.0
  %3592 = vmatpush1.xpose.msra.mxu0 0.0
  %3593 = vmatprep.subr.mxu0 0.0
  %3594 = vmatpush1.xpose.msra.mxu0 0.0
  %3595 = vmatprep.subr.mxu0 0.0
  %3596 = vmatpush1.xpose.msra.mxu0 0.0
  %3597 = vmatprep.subr.mxu0 0.0
  %3598 = vmatpush1.xpose.msra.mxu0 0.0
  %3599 = vmatprep.subr.mxu0 0.0
  %3600 = vmatpush1.xpose.msra.mxu0 0.0
  %3601 = vmatprep.subr.mxu0 0.0
  %3602 = vmatpush1.xpose.msra.mxu0 0.0
  %3603 = vmatprep.subr.mxu0 0.0
  %3604 = vmatpush1.xpose.msra.mxu0 0.0
  %3605 = vmatprep.subr.mxu0 0.0
  %3606 = vmatpush1.xpose.msra.mxu0 0.0
  %3607 = vmatprep.subr.mxu0 0.0
  %3608 = vmatpush1.xpose.msra.mxu0 0.0
  %3609 = vmatprep.subr.mxu0 0.0
  %3610 = vmatpush1.xpose.msra.mxu0 0.0
  %3611 = vmatprep.subr.mxu0 0.0
  %3612 = vmatpush1.xpose.msra.mxu0 0.0
  %3613 = vmatprep.subr.mxu0 0.0
  %3614 = vmatpush1.xpose.msra.mxu0 0.0
  %3615 = vmatprep.subr.mxu0 0.0
  %3616 = vmatpush1.xpose.msra.mxu0 0.0
  %3617 = vmatprep.subr.mxu0 0.0
  %3618 = vmatpush1.xpose.msra.mxu0 0.0
  %3619 = vmatprep.subr.mxu0 0.0
  %3620 = vmatpush1.xpose.msra.mxu0 0.0
  %3621 = vmatprep.subr.mxu0 0.0
  %3622 = vmatpush1.xpose.msra.mxu0 0.0
  %3623 = vmatprep.subr.mxu0 0.0
  %3624 = vmatpush1.xpose.msra.mxu0 0.0
  %3625 = vmatprep.subr.mxu0 0.0
  %3626 = vmatpush1.xpose.msra.mxu0 0.0
  %3627 = vmatprep.subr.mxu0 0.0
  %3628 = vmatpush1.xpose.msra.mxu0 0.0
  %3629 = vmatprep.subr.mxu0 0.0
  %3630 = vmatpush1.xpose.msra.mxu0 0.0
  %3631 = vmatprep.subr.mxu0 0.0
  %3632 = vmatpush1.xpose.msra.mxu0 0.0
  %3633 = vmatprep.subr.mxu0 0.0
  %3634 = vmatpush1.xpose.msra.mxu0 0.0
  %3635 = vmatprep.subr.mxu0 0.0
  %3636 = vmatpush1.xpose.msra.mxu0 0.0
  %3637 = vmatprep.subr.mxu0 0.0
  %3638 = vmatpush1.xpose.msra.mxu0 0.0
  %3639 = vmatprep.subr.mxu0 0.0
  %3640 = vmatpush1.xpose.msra.mxu0 0.0
  %3641 = vmatprep.subr.mxu0 0.0
  %3642 = vmatpush1.xpose.msra.mxu0 0.0
  %3643 = vmatprep.subr.mxu0 0.0
  %3644 = vmatpush1.xpose.msra.mxu0 0.0
  %3645 = vmatprep.mubr.f32.mxu0 0.0
  %3646 = vmatmul.mubr.f32.gmra.mrb[0].mxu0 %v3577
  %v3647 = vpop.f32.mrb[0].mxu0
  %v3648 = vadd.f32 0.0, %v3647
  %v3649 = vpop.f32.mrb[0].mxu0
  %3650 = vdwg.mxu0
  %3651 = vrot.lane.b32.xlu0 %v2245, 104
  %v3652 = vpop.permute.xlu0 %3651
  %3653 = vrot.lane.b32.xlu0 %v2245, 72
  %v3654 = vpop.permute.xlu0 %3653
  %v3655 = vsel %vm226, %v3652, 0
  %v3657 = vsel %vm226, %v3654, 0
  %3659 = vmatprep.subr.mxu0 0.0
  %3660 = vmatpush1.xpose.msra.mxu0 %v3657
  %3661 = vmatprep.subr.mxu0 0.0
  %3662 = vmatpush1.xpose.msra.mxu0 0.0
  %3663 = vmatprep.subr.mxu0 0.0
  %3664 = vmatpush1.xpose.msra.mxu0 0.0
  %3665 = vmatprep.subr.mxu0 0.0
  %3666 = vmatpush1.xpose.msra.mxu0 0.0
  %3667 = vmatprep.subr.mxu0 0.0
  %3668 = vmatpush1.xpose.msra.mxu0 0.0
  %3669 = vmatprep.subr.mxu0 0.0
  %3670 = vmatpush1.xpose.msra.mxu0 0.0
  %3671 = vmatprep.subr.mxu0 0.0
  %3672 = vmatpush1.xpose.msra.mxu0 0.0
  %3673 = vmatprep.subr.mxu0 0.0
  %3674 = vmatpush1.xpose.msra.mxu0 0.0
  %3675 = vmatprep.subr.mxu0 0.0
  %3676 = vmatpush1.xpose.msra.mxu0 0.0
  %3677 = vmatprep.subr.mxu0 0.0
  %3678 = vmatpush1.xpose.msra.mxu0 0.0
  %3679 = vmatprep.subr.mxu0 0.0
  %3680 = vmatpush1.xpose.msra.mxu0 0.0
  %3681 = vmatprep.subr.mxu0 0.0
  %3682 = vmatpush1.xpose.msra.mxu0 0.0
  %3683 = vmatprep.subr.mxu0 0.0
  %3684 = vmatpush1.xpose.msra.mxu0 0.0
  %3685 = vmatprep.subr.mxu0 0.0
  %3686 = vmatpush1.xpose.msra.mxu0 0.0
  %3687 = vmatprep.subr.mxu0 0.0
  %3688 = vmatpush1.xpose.msra.mxu0 0.0
  %3689 = vmatprep.subr.mxu0 0.0
  %3690 = vmatpush1.xpose.msra.mxu0 0.0
  %3691 = vmatprep.subr.mxu0 0.0
  %3692 = vmatpush1.xpose.msra.mxu0 0.0
  %3693 = vmatprep.subr.mxu0 0.0
  %3694 = vmatpush1.xpose.msra.mxu0 0.0
  %3695 = vmatprep.subr.mxu0 0.0
  %3696 = vmatpush1.xpose.msra.mxu0 0.0
  %3697 = vmatprep.subr.mxu0 0.0
  %3698 = vmatpush1.xpose.msra.mxu0 0.0
  %3699 = vmatprep.subr.mxu0 0.0
  %3700 = vmatpush1.xpose.msra.mxu0 0.0
  %3701 = vmatprep.subr.mxu0 0.0
  %3702 = vmatpush1.xpose.msra.mxu0 0.0
  %3703 = vmatprep.subr.mxu0 0.0
  %3704 = vmatpush1.xpose.msra.mxu0 0.0
  %3705 = vmatprep.subr.mxu0 0.0
  %3706 = vmatpush1.xpose.msra.mxu0 0.0
  %3707 = vmatprep.subr.mxu0 0.0
  %3708 = vmatpush1.xpose.msra.mxu0 0.0
  %3709 = vmatprep.subr.mxu0 0.0
  %3710 = vmatpush1.xpose.msra.mxu0 0.0
  %3711 = vmatprep.subr.mxu0 0.0
  %3712 = vmatpush1.xpose.msra.mxu0 0.0
  %3713 = vmatprep.subr.mxu0 0.0
  %3714 = vmatpush1.xpose.msra.mxu0 0.0
  %3715 = vmatprep.subr.mxu0 0.0
  %3716 = vmatpush1.xpose.msra.mxu0 0.0
  %3717 = vmatprep.subr.mxu0 0.0
  %3718 = vmatpush1.xpose.msra.mxu0 0.0
  %3719 = vmatprep.subr.mxu0 0.0
  %3720 = vmatpush1.xpose.msra.mxu0 0.0
  %3721 = vmatprep.subr.mxu0 0.0
  %3722 = vmatpush1.xpose.msra.mxu0 0.0
  %3723 = vmatprep.mubr.f32.mxu0 0.0
  %3724 = vmatmul.mubr.f32.gmra.mrb[0].mxu0 %v3655
  %v3725 = vpop.f32.mrb[0].mxu0
  %v3726 = vadd.f32 0.0, %v3725
  %v3727 = vpop.f32.mrb[0].mxu0
  %3728 = vdwg.mxu0
  %v3729 = vsel %vm226, %v3648, -inf
  %3730 = vmax.xlane.f32.xlu0 %v3729
  %v3731 = vpop.xlane.xlu0 %3730
  %v3732 = vsel %vm226, %v3726, -inf
  %3733 = vmax.xlane.f32.xlu0 %v3732
  %v3734 = vpop.xlane.xlu0 %3733
  %v3735 = vsub.f32 %v3648, %v3731
  %v3736 = vsub.f32 %v3726, %v3734
  %v3737 = vmul.f32 %v3735, 1.442695
  %v3738 = vpow.pop %v3737
  %v3739 = vmul.f32 %v3736, 1.442695
  %v3740 = vpow.pop %v3739
  %v3741 = vsel %vm226, %v3738, 0.0
  %3742 = vadd.xlane.f32.xlu0 %v3741
  %v3743 = vpop.xlane.xlu0 %3742
  %v3744 = vsel %vm226, %v3740, 0.0
  %3745 = vadd.xlane.f32.xlu0 %v3744
  %v3746 = vpop.xlane.xlu0 %3745
  %v3747 = vrcp.pop %v3743
  %v3748 = vmul.f32 %v3738, %v3747
  %v3749 = vrcp.pop %v3746
  %v3750 = vmul.f32 %v3740, %v3749
  %3751 = vrot.lane.b32.xlu0 %v2325, 104
  %v3752 = vpop.permute.xlu0 %3751
  %v3755 = vsel %vm226, %v3748, 0
  %3757 = vmatprep.subr.mxu0 0.0
  %3758 = vmatpush1.msra.mxu0 %v3752
  %3759 = vmatprep.subr.mxu0 0.0
  %3760 = vmatpush1.msra.mxu0 0.0
  %3761 = vmatprep.subr.mxu0 0.0
  %3762 = vmatpush1.msra.mxu0 0.0
  %3763 = vmatprep.subr.mxu0 0.0
  %3764 = vmatpush1.msra.mxu0 0.0
  %3765 = vmatprep.subr.mxu0 0.0
  %3766 = vmatpush1.msra.mxu0 0.0
  %3767 = vmatprep.subr.mxu0 0.0
  %3768 = vmatpush1.msra.mxu0 0.0
  %3769 = vmatprep.subr.mxu0 0.0
  %3770 = vmatpush1.msra.mxu0 0.0
  %3771 = vmatprep.subr.mxu0 0.0
  %3772 = vmatpush1.msra.mxu0 0.0
  %3773 = vmatprep.subr.mxu0 0.0
  %3774 = vmatpush1.msra.mxu0 0.0
  %3775 = vmatprep.subr.mxu0 0.0
  %3776 = vmatpush1.msra.mxu0 0.0
  %3777 = vmatprep.subr.mxu0 0.0
  %3778 = vmatpush1.msra.mxu0 0.0
  %3779 = vmatprep.subr.mxu0 0.0
  %3780 = vmatpush1.msra.mxu0 0.0
  %3781 = vmatprep.subr.mxu0 0.0
  %3782 = vmatpush1.msra.mxu0 0.0
  %3783 = vmatprep.subr.mxu0 0.0
  %3784 = vmatpush1.msra.mxu0 0.0
  %3785 = vmatprep.subr.mxu0 0.0
  %3786 = vmatpush1.msra.mxu0 0.0
  %3787 = vmatprep.subr.mxu0 0.0
  %3788 = vmatpush1.msra.mxu0 0.0
  %3789 = vmatprep.subr.mxu0 0.0
  %3790 = vmatpush1.msra.mxu0 0.0
  %3791 = vmatprep.subr.mxu0 0.0
  %3792 = vmatpush1.msra.mxu0 0.0
  %3793 = vmatprep.subr.mxu0 0.0
  %3794 = vmatpush1.msra.mxu0 0.0
  %3795 = vmatprep.subr.mxu0 0.0
  %3796 = vmatpush1.msra.mxu0 0.0
  %3797 = vmatprep.subr.mxu0 0.0
  %3798 = vmatpush1.msra.mxu0 0.0
  %3799 = vmatprep.subr.mxu0 0.0
  %3800 = vmatpush1.msra.mxu0 0.0
  %3801 = vmatprep.subr.mxu0 0.0
  %3802 = vmatpush1.msra.mxu0 0.0
  %3803 = vmatprep.subr.mxu0 0.0
  %3804 = vmatpush1.msra.mxu0 0.0
  %3805 = vmatprep.subr.mxu0 0.0
  %3806 = vmatpush1.msra.mxu0 0.0
  %3807 = vmatprep.subr.mxu0 0.0
  %3808 = vmatpush1.msra.mxu0 0.0
  %3809 = vmatprep.subr.mxu0 0.0
  %3810 = vmatpush1.msra.mxu0 0.0
  %3811 = vmatprep.subr.mxu0 0.0
  %3812 = vmatpush1.msra.mxu0 0.0
  %3813 = vmatprep.subr.mxu0 0.0
  %3814 = vmatpush1.msra.mxu0 0.0
  %3815 = vmatprep.subr.mxu0 0.0
  %3816 = vmatpush1.msra.mxu0 0.0
  %3817 = vmatprep.subr.mxu0 0.0
  %3818 = vmatpush1.msra.mxu0 0.0
  %3819 = vmatprep.subr.mxu0 0.0
  %3820 = vmatpush1.msra.mxu0 0.0
  %3821 = vmatprep.mubr.f32.mxu0 0.0
  %3822 = vmatmul.mubr.f32.gmra.mrb[0].mxu0 %v3755
  %v3823 = vpop.f32.mrb[0].mxu0
  %v3824 = vadd.f32 0.0, %v3823
  %v3825 = vpop.f32.mrb[0].mxu0
  %3826 = vdwg.mxu0
  %3827 = vrot.lane.b32.xlu0 %v2330, 104
  %v3828 = vpop.permute.xlu0 %3827
  %v3831 = vsel %vm226, %v3750, 0
  %3833 = vmatprep.subr.mxu0 0.0
  %3834 = vmatpush1.msra.mxu0 %v3828
  %3835 = vmatprep.subr.mxu0 0.0
  %3836 = vmatpush1.msra.mxu0 0.0
  %3837 = vmatprep.subr.mxu0 0.0
  %3838 = vmatpush1.msra.mxu0 0.0
  %3839 = vmatprep.subr.mxu0 0.0
  %3840 = vmatpush1.msra.mxu0 0.0
  %3841 = vmatprep.subr.mxu0 0.0
  %3842 = vmatpush1.msra.mxu0 0.0
  %3843 = vmatprep.subr.mxu0 0.0
  %3844 = vmatpush1.msra.mxu0 0.0
  %3845 = vmatprep.subr.mxu0 0.0
  %3846 = vmatpush1.msra.mxu0 0.0
  %3847 = vmatprep.subr.mxu0 0.0
  %3848 = vmatpush1.msra.mxu0 0.0
  %3849 = vmatprep.subr.mxu0 0.0
  %3850 = vmatpush1.msra.mxu0 0.0
  %3851 = vmatprep.subr.mxu0 0.0
  %3852 = vmatpush1.msra.mxu0 0.0
  %3853 = vmatprep.subr.mxu0 0.0
  %3854 = vmatpush1.msra.mxu0 0.0
  %3855 = vmatprep.subr.mxu0 0.0
  %3856 = vmatpush1.msra.mxu0 0.0
  %3857 = vmatprep.subr.mxu0 0.0
  %3858 = vmatpush1.msra.mxu0 0.0
  %3859 = vmatprep.subr.mxu0 0.0
  %3860 = vmatpush1.msra.mxu0 0.0
  %3861 = vmatprep.subr.mxu0 0.0
  %3862 = vmatpush1.msra.mxu0 0.0
  %3863 = vmatprep.subr.mxu0 0.0
  %3864 = vmatpush1.msra.mxu0 0.0
  %3865 = vmatprep.subr.mxu0 0.0
  %3866 = vmatpush1.msra.mxu0 0.0
  %3867 = vmatprep.subr.mxu0 0.0
  %3868 = vmatpush1.msra.mxu0 0.0
  %3869 = vmatprep.subr.mxu0 0.0
  %3870 = vmatpush1.msra.mxu0 0.0
  %3871 = vmatprep.subr.mxu0 0.0
  %3872 = vmatpush1.msra.mxu0 0.0
  %3873 = vmatprep.subr.mxu0 0.0
  %3874 = vmatpush1.msra.mxu0 0.0
  %3875 = vmatprep.subr.mxu0 0.0
  %3876 = vmatpush1.msra.mxu0 0.0
  %3877 = vmatprep.subr.mxu0 0.0
  %3878 = vmatpush1.msra.mxu0 0.0
  %3879 = vmatprep.subr.mxu0 0.0
  %3880 = vmatpush1.msra.mxu0 0.0
  %3881 = vmatprep.subr.mxu0 0.0
  %3882 = vmatpush1.msra.mxu0 0.0
  %3883 = vmatprep.subr.mxu0 0.0
  %3884 = vmatpush1.msra.mxu0 0.0
  %3885 = vmatprep.subr.mxu0 0.0
  %3886 = vmatpush1.msra.mxu0 0.0
  %3887 = vmatprep.subr.mxu0 0.0
  %3888 = vmatpush1.msra.mxu0 0.0
  %3889 = vmatprep.subr.mxu0 0.0
  %3890 = vmatpush1.msra.mxu0 0.0
  %3891 = vmatprep.subr.mxu0 0.0
  %3892 = vmatpush1.msra.mxu0 0.0
  %3893 = vmatprep.subr.mxu0 0.0
  %3894 = vmatpush1.msra.mxu0 0.0
  %3895 = vmatprep.subr.mxu0 0.0
  %3896 = vmatpush1.msra.mxu0 0.0
  %3897 = vmatprep.mubr.f32.mxu0 0.0
  %3898 = vmatmul.mubr.f32.gmra.mrb[0].mxu0 %v3831
  %v3899 = vpop.f32.mrb[0].mxu0
  %v3900 = vadd.f32 0.0, %v3899
  %v3901 = vpop.f32.mrb[0].mxu0
  %3902 = vdwg.mxu0
  %v3903 = vld [vmem:[%s2 + $0x118] sm:$0xff]
  %v3905 = vsel %vm226, %v3824, 0
  %v3908 = vsel %vm226, %v3900, 0
  %3910 = vmatprep.subr.mxu0 0.0
  %3911 = vmatpush1.msra.mxu0 %v3903
  %3912 = vmatprep.subr.mxu0 0.0
  %3913 = vmatpush1.msra.mxu0 0.0
  %3914 = vmatprep.subr.mxu0 0.0
  %3915 = vmatpush1.msra.mxu0 0.0
  %3916 = vmatprep.subr.mxu0 0.0
  %3917 = vmatpush1.msra.mxu0 0.0
  %3918 = vmatprep.subr.mxu0 0.0
  %3919 = vmatpush1.msra.mxu0 0.0
  %3920 = vmatprep.subr.mxu0 0.0
  %3921 = vmatpush1.msra.mxu0 0.0
  %3922 = vmatprep.subr.mxu0 0.0
  %3923 = vmatpush1.msra.mxu0 0.0
  %3924 = vmatprep.subr.mxu0 0.0
  %3925 = vmatpush1.msra.mxu0 0.0
  %3926 = vmatprep.subr.mxu0 0.0
  %3927 = vmatpush1.msra.mxu0 0.0
  %3928 = vmatprep.subr.mxu0 0.0
  %3929 = vmatpush1.msra.mxu0 0.0
  %3930 = vmatprep.subr.mxu0 0.0
  %3931 = vmatpush1.msra.mxu0 0.0
  %3932 = vmatprep.subr.mxu0 0.0
  %3933 = vmatpush1.msra.mxu0 0.0
  %3934 = vmatprep.subr.mxu0 0.0
  %3935 = vmatpush1.msra.mxu0 0.0
  %3936 = vmatprep.subr.mxu0 0.0
  %3937 = vmatpush1.msra.mxu0 0.0
  %3938 = vmatprep.subr.mxu0 0.0
  %3939 = vmatpush1.msra.mxu0 0.0
  %3940 = vmatprep.subr.mxu0 0.0
  %3941 = vmatpush1.msra.mxu0 0.0
  %3942 = vmatprep.subr.mxu0 0.0
  %3943 = vmatpush1.msra.mxu0 0.0
  %3944 = vmatprep.subr.mxu0 0.0
  %3945 = vmatpush1.msra.mxu0 0.0
  %3946 = vmatprep.subr.mxu0 0.0
  %3947 = vmatpush1.msra.mxu0 0.0
  %3948 = vmatprep.subr.mxu0 0.0
  %3949 = vmatpush1.msra.mxu0 0.0
  %3950 = vmatprep.subr.mxu0 0.0
  %3951 = vmatpush1.msra.mxu0 0.0
  %3952 = vmatprep.subr.mxu0 0.0
  %3953 = vmatpush1.msra.mxu0 0.0
  %3954 = vmatprep.subr.mxu0 0.0
  %3955 = vmatpush1.msra.mxu0 0.0
  %3956 = vmatprep.subr.mxu0 0.0
  %3957 = vmatpush1.msra.mxu0 0.0
  %3958 = vmatprep.subr.mxu0 0.0
  %3959 = vmatpush1.msra.mxu0 0.0
  %3960 = vmatprep.subr.mxu0 0.0
  %3961 = vmatpush1.msra.mxu0 0.0
  %3962 = vmatprep.subr.mxu0 0.0
  %3963 = vmatpush1.msra.mxu0 0.0
  %3964 = vmatprep.subr.mxu0 0.0
  %3965 = vmatpush1.msra.mxu0 0.0
  %3966 = vmatprep.subr.mxu0 0.0
  %3967 = vmatpush1.msra.mxu0 0.0
  %3968 = vmatprep.subr.mxu0 0.0
  %3969 = vmatpush1.msra.mxu0 0.0
  %3970 = vmatprep.subr.mxu0 0.0
  %3971 = vmatpush1.msra.mxu0 0.0
  %3972 = vmatprep.subr.mxu0 0.0
  %3973 = vmatpush1.msra.mxu0 0.0
  %3974 = vmatprep.mubr.f32.mxu0 0.0
  %3975 = vmatmul.mubr.f32.gmra.mrb[0].mxu0 %v3905
  %v3976 = vpop.f32.mrb[0].mxu0
  %v3977 = vadd.f32 0.0, %v3976
  %v3978 = vpop.f32.mrb[0].mxu0
  %3979 = vmatprep.mubr.f32.mxu0 0.0
  %3980 = vmatmul.mubr.f32.gmra.mrb[0].mxu0 %v3908
  %v3981 = vpop.f32.mrb[0].mxu0
  %v3982 = vadd.f32 0.0, %v3981
  %v3983 = vpop.f32.mrb[0].mxu0
  %3984 = vdwg.mxu0
  %v3985 = vadd.f32 %v3571, %v3977
  %v3986 = vadd.f32 %v3572, %v3982
  %v3987 = vadd.f32 %v2130, %v3985
  %v3988 = vadd.f32 %v2131, %v3986
  %v3989 = vsel %vm56, %v3987, 0.0
  %3990 = vadd.xlane.f32.xlu0 %v3989
  %v3991 = vpop.xlane.xlu0 %3990
  %v3992 = vsel %vm56, %v3988, 0.0
  %3993 = vadd.xlane.f32.xlu0 %v3992
  %v3994 = vpop.xlane.xlu0 %3993
  %v3995 = vmul.f32 %v3991, %v1886
  %v3996 = vmul.f32 %v3994, %v1886
  %v3997 = vsub.f32 %v3987, %v3995
  %v3998 = vsub.f32 %v3988, %v3996
  %v3999 = vmul.f32 %v3997, %v3997
  %v4000 = vmul.f32 %v3998, %v3998
  %v4001 = vsel %vm56, %v3999, 0.0
  %4002 = vadd.xlane.f32.xlu0 %v4001
  %v4003 = vpop.xlane.xlu0 %4002
  %v4004 = vsel %vm56, %v4000, 0.0
  %4005 = vadd.xlane.f32.xlu0 %v4004
  %v4006 = vpop.xlane.xlu0 %4005
  %v4007 = vmul.f32 %v4003, %v1886
  %v4008 = vmul.f32 %v4006, %v1886
  %v4009 = vadd.f32 %v4007, 1e-05
  %v4010 = vadd.f32 %v4008, 1e-05
  %v4011 = vrsqrt.pop %v4009
  %v4012 = vrsqrt.pop %v4010
  %v4013 = vmul.f32 %v3997, %v4011
  %v4014 = vmul.f32 %v3998, %v4012
  %v4015 = vlaneseq
  %v4016 = vshrl.u32 %v4015, 7
  %v4017 = vsub.s32 0, %v4016
  %v4018 = vrot.slane %v2157, %v4017
  %v4019 = vmul.f32 %v4013, %v4018
  %v4020 = vmul.f32 %v4014, %v4018
  %v4021 = vlaneseq
  %v4022 = vshrl.u32 %v4021, 7
  %v4023 = vsub.s32 0, %v4022
  %v4024 = vrot.slane %v2158, %v4023
  %v4025 = vadd.f32 %v4019, %v4024
  %v4026 = vadd.f32 %v4020, %v4024
  %v4027 = vlaneseq
  %v4028 = vshrl.u32 %v4027, 7
  %v4029 = vsub.s32 0, %v4028
  %v4030 = vrot.slane %v2155, %v4029
  %v4032 = vsel %vm56, %v4025, 0
  %v4035 = vsel %vm56, %v4026, 0
  %4037 = vmatprep.subr.mxu0 0.0
  %4038 = vmatpush1.msra.mxu0 %v2140
  %4039 = vmatprep.subr.mxu0 0.0
  %4040 = vmatpush1.msra.mxu0 %v2141
  %4041 = vmatprep.subr.mxu0 0.0
  %4042 = vmatpush1.msra.mxu0 %v2142
  %4043 = vmatprep.subr.mxu0 0.0
  %4044 = vmatpush1.msra.mxu0 %v2143
  %4045 = vmatprep.subr.mxu0 0.0
  %4046 = vmatpush1.msra.mxu0 0.0
  %4047 = vmatprep.subr.mxu0 0.0
  %4048 = vmatpush1.msra.mxu0 0.0
  %4049 = vmatprep.subr.mxu0 0.0
  %4050 = vmatpush1.msra.mxu0 0.0
  %4051 = vmatprep.subr.mxu0 0.0
  %4052 = vmatpush1.msra.mxu0 0.0
  %4053 = vmatprep.subr.mxu0 0.0
  %4054 = vmatpush1.msra.mxu0 0.0
  %4055 = vmatprep.subr.mxu0 0.0
  %4056 = vmatpush1.msra.mxu0 0.0
  %4057 = vmatprep.subr.mxu0 0.0
  %4058 = vmatpush1.msra.mxu0 0.0
  %4059 = vmatprep.subr.mxu0 0.0
  %4060 = vmatpush1.msra.mxu0 0.0
  %4061 = vmatprep.subr.mxu0 0.0
  %4062 = vmatpush1.msra.mxu0 0.0
  %4063 = vmatprep.subr.mxu0 0.0
  %4064 = vmatpush1.msra.mxu0 0.0
  %4065 = vmatprep.subr.mxu0 0.0
  %4066 = vmatpush1.msra.mxu0 0.0
  %4067 = vmatprep.subr.mxu0 0.0
  %4068 = vmatpush1.msra.mxu0 0.0
  %4069 = vmatprep.subr.mxu0 0.0
  %4070 = vmatpush1.msra.mxu0 0.0
  %4071 = vmatprep.subr.mxu0 0.0
  %4072 = vmatpush1.msra.mxu0 0.0
  %4073 = vmatprep.subr.mxu0 0.0
  %4074 = vmatpush1.msra.mxu0 0.0
  %4075 = vmatprep.subr.mxu0 0.0
  %4076 = vmatpush1.msra.mxu0 0.0
  %4077 = vmatprep.subr.mxu0 0.0
  %4078 = vmatpush1.msra.mxu0 0.0
  %4079 = vmatprep.subr.mxu0 0.0
  %4080 = vmatpush1.msra.mxu0 0.0
  %4081 = vmatprep.subr.mxu0 0.0
  %4082 = vmatpush1.msra.mxu0 0.0
  %4083 = vmatprep.subr.mxu0 0.0
  %4084 = vmatpush1.msra.mxu0 0.0
  %4085 = vmatprep.subr.mxu0 0.0
  %4086 = vmatpush1.msra.mxu0 0.0
  %4087 = vmatprep.subr.mxu0 0.0
  %4088 = vmatpush1.msra.mxu0 0.0
  %4089 = vmatprep.subr.mxu0 0.0
  %4090 = vmatpush1.msra.mxu0 0.0
  %4091 = vmatprep.subr.mxu0 0.0
  %4092 = vmatpush1.msra.mxu0 0.0
  %4093 = vmatprep.subr.mxu0 0.0
  %4094 = vmatpush1.msra.mxu0 0.0
  %4095 = vmatprep.subr.mxu0 0.0
  %4096 = vmatpush1.msra.mxu0 0.0
  %4097 = vmatprep.subr.mxu0 0.0
  %4098 = vmatpush1.msra.mxu0 0.0
  %4099 = vmatprep.subr.mxu0 0.0
  %4100 = vmatpush1.msra.mxu0 0.0
  %4101 = vmatprep.mubr.f32.mxu0 0.0
  %4102 = vmatmul.mubr.f32.gmra.mrb[0].mxu0 %v4032
  %v4103 = vpop.f32.mrb[0].mxu0
  %v4104 = vadd.f32 %v4030, %v4103
  %v4105 = vpop.f32.mrb[0].mxu0
  %4106 = vmatprep.mubr.f32.mxu0 0.0
  %4107 = vmatmul.mubr.f32.gmra.mrb[0].mxu0 %v4035
  %v4108 = vpop.f32.mrb[0].mxu0
  %v4109 = vadd.f32 %v4030, %v4108
  %v4110 = vpop.f32.mrb[0].mxu0
  %4111 = vdwg.mxu0
  %v4112 = vmax.f32 %v4104, 0.0
  %v4113 = vmax.f32 %v4109, 0.0
  %v4114 = vlaneseq
  %v4115 = vshrl.u32 %v4114, 7
  %v4116 = vsub.s32 0, %v4115
  %v4117 = vrot.slane %v2156, %v4116
  %v4119 = vsel %vm2010, %v4112, 0
  %v4122 = vsel %vm2010, %v4113, 0
  %4124 = vmatprep.subr.mxu0 0.0
  %4125 = vmatpush1.msra.mxu0 %v2144
  %4126 = vmatprep.subr.mxu0 0.0
  %4127 = vmatpush1.msra.mxu0 %v2145
  %4128 = vmatprep.subr.mxu0 0.0
  %4129 = vmatpush1.msra.mxu0 %v2146
  %4130 = vmatprep.subr.mxu0 0.0
  %4131 = vmatpush1.msra.mxu0 %v2147
  %4132 = vmatprep.subr.mxu0 0.0
  %4133 = vmatpush1.msra.mxu0 %v2148
  %4134 = vmatprep.subr.mxu0 0.0
  %4135 = vmatpush1.msra.mxu0 %v2149
  %4136 = vmatprep.subr.mxu0 0.0
  %4137 = vmatpush1.msra.mxu0 %v2150
  %4138 = vmatprep.subr.mxu0 0.0
  %4139 = vmatpush1.msra.mxu0 %v2151
  %4140 = vmatprep.subr.mxu0 0.0
  %4141 = vmatpush1.msra.mxu0 0.0
  %4142 = vmatprep.subr.mxu0 0.0
  %4143 = vmatpush1.msra.mxu0 0.0
  %4144 = vmatprep.subr.mxu0 0.0
  %4145 = vmatpush1.msra.mxu0 0.0
  %4146 = vmatprep.subr.mxu0 0.0
  %4147 = vmatpush1.msra.mxu0 0.0
  %4148 = vmatprep.subr.mxu0 0.0
  %4149 = vmatpush1.msra.mxu0 0.0
  %4150 = vmatprep.subr.mxu0 0.0
  %4151 = vmatpush1.msra.mxu0 0.0
  %4152 = vmatprep.subr.mxu0 0.0
  %4153 = vmatpush1.msra.mxu0 0.0
  %4154 = vmatprep.subr.mxu0 0.0
  %4155 = vmatpush1.msra.mxu0 0.0
  %4156 = vmatprep.subr.mxu0 0.0
  %4157 = vmatpush1.msra.mxu0 0.0
  %4158 = vmatprep.subr.mxu0 0.0
  %4159 = vmatpush1.msra.mxu0 0.0
  %4160 = vmatprep.subr.mxu0 0.0
  %4161 = vmatpush1.msra.mxu0 0.0
  %4162 = vmatprep.subr.mxu0 0.0
  %4163 = vmatpush1.msra.mxu0 0.0
  %4164 = vmatprep.subr.mxu0 0.0
  %4165 = vmatpush1.msra.mxu0 0.0
  %4166 = vmatprep.subr.mxu0 0.0
  %4167 = vmatpush1.msra.mxu0 0.0
  %4168 = vmatprep.subr.mxu0 0.0
  %4169 = vmatpush1.msra.mxu0 0.0
  %4170 = vmatprep.subr.mxu0 0.0
  %4171 = vmatpush1.msra.mxu0 0.0
  %4172 = vmatprep.subr.mxu0 0.0
  %4173 = vmatpush1.msra.mxu0 0.0
  %4174 = vmatprep.subr.mxu0 0.0
  %4175 = vmatpush1.msra.mxu0 0.0
  %4176 = vmatprep.subr.mxu0 0.0
  %4177 = vmatpush1.msra.mxu0 0.0
  %4178 = vmatprep.subr.mxu0 0.0
  %4179 = vmatpush1.msra.mxu0 0.0
  %4180 = vmatprep.subr.mxu0 0.0
  %4181 = vmatpush1.msra.mxu0 0.0
  %4182 = vmatprep.subr.mxu0 0.0
  %4183 = vmatpush1.msra.mxu0 0.0
  %4184 = vmatprep.subr.mxu0 0.0
  %4185 = vmatpush1.msra.mxu0 0.0
  %4186 = vmatprep.subr.mxu0 0.0
  %4187 = vmatpush1.msra.mxu0 0.0
  %4188 = vmatprep.mubr.f32.mxu0 0.0
  %4189 = vmatmul.mubr.f32.gmra.mrb[0].mxu0 %v4119
  %v4190 = vpop.f32.mrb[0].mxu0
  %v4191 = vadd.f32 %v4117, %v4190
  %v4192 = vpop.f32.mrb[0].mxu0
  %4193 = vmatprep.mubr.f32.mxu0 0.0
  %4194 = vmatmul.mubr.f32.gmra.mrb[0].mxu0 %v4122
  %v4195 = vpop.f32.mrb[0].mxu0
  %v4196 = vadd.f32 %v4117, %v4195
  %v4197 = vpop.f32.mrb[0].mxu0
  %4198 = vdwg.mxu0
  %v4199 = vadd.f32 %v4025, %v4191
  %v4200 = vadd.f32 %v4026, %v4196
  %v4201 = vsel %vm56, %v4199, 0.0
  %4202 = vadd.xlane.f32.xlu0 %v4201
  %v4203 = vpop.xlane.xlu0 %4202
  %v4204 = vsel %vm56, %v4200, 0.0
  %4205 = vadd.xlane.f32.xlu0 %v4204
  %v4206 = vpop.xlane.xlu0 %4205
  %v4207 = vmul.f32 %v4203, %v1886
  %v4208 = vmul.f32 %v4206, %v1886
  %v4209 = vsub.f32 %v4199, %v4207
  %v4210 = vsub.f32 %v4200, %v4208
  %v4211 = vmul.f32 %v4209, %v4209
  %v4212 = vmul.f32 %v4210, %v4210
  %v4213 = vsel %vm56, %v4211, 0.0
  %4214 = vadd.xlane.f32.xlu0 %v4213
  %v4215 = vpop.xlane.xlu0 %4214
  %v4216 = vsel %vm56, %v4212, 0.0
  %4217 = vadd.xlane.f32.xlu0 %v4216
  %v4218 = vpop.xlane.xlu0 %4217
  %v4219 = vmul.f32 %v4215, %v1886
  %v4220 = vmul.f32 %v4218, %v1886
  %v4221 = vadd.f32 %v4219, 1e-05
  %v4222 = vadd.f32 %v4220, 1e-05
  %v4223 = vrsqrt.pop %v4221
  %v4224 = vrsqrt.pop %v4222
  %v4225 = vmul.f32 %v4209, %v4223
  %v4226 = vmul.f32 %v4210, %v4224
  %v4227 = vlaneseq
  %v4228 = vshrl.u32 %v4227, 7
  %v4229 = vsub.s32 0, %v4228
  %v4230 = vrot.slane %v2159, %v4229
  %v4231 = vmul.f32 %v4225, %v4230
  %v4232 = vmul.f32 %v4226, %v4230
  %v4233 = vlaneseq
  %v4234 = vshrl.u32 %v4233, 7
  %v4235 = vsub.s32 0, %v4234
  %v4236 = vrot.slane %v2160, %v4235
  %v4237 = vadd.f32 %v4231, %v4236
  %v4238 = vadd.f32 %v4232, %v4236
  %v4239 = vld [vmem:[%s3 + $0x12] sm:$0x1]
  %v4240 = vld [vmem:[%s3 + $0x13] sm:$0x1]
  %v4241 = vsel %vm56, %v4237, 0.0
  %4242 = vadd.xlane.f32.xlu0 %v4241
  %v4243 = vpop.xlane.xlu0 %4242
  %v4244 = vsel %vm56, %v4238, 0.0
  %4245 = vadd.xlane.f32.xlu0 %v4244
  %v4246 = vpop.xlane.xlu0 %4245
  %v4247 = vmul.f32 %v4243, %v1886
  %v4248 = vmul.f32 %v4246, %v1886
  %v4249 = vsub.f32 %v4237, %v4247
  %v4250 = vsub.f32 %v4238, %v4248
  %v4251 = vmul.f32 %v4249, %v4249
  %v4252 = vmul.f32 %v4250, %v4250
  %v4253 = vsel %vm56, %v4251, 0.0
  %4254 = vadd.xlane.f32.xlu0 %v4253
  %v4255 = vpop.xlane.xlu0 %4254
  %v4256 = vsel %vm56, %v4252, 0.0
  %4257 = vadd.xlane.f32.xlu0 %v4256
  %v4258 = vpop.xlane.xlu0 %4257
  %v4259 = vmul.f32 %v4255, %v1886
  %v4260 = vmul.f32 %v4258, %v1886
  %v4261 = vadd.f32 %v4259, 1e-05
  %v4262 = vadd.f32 %v4260, 1e-05
  %v4263 = vrsqrt.pop %v4261
  %v4264 = vrsqrt.pop %v4262
  %v4265 = vmul.f32 %v4249, %v4263
  %v4266 = vmul.f32 %v4250, %v4264
  %v4267 = vlaneseq
  %v4268 = vshrl.u32 %v4267, 7
  %v4269 = vsub.s32 0, %v4268
  %v4270 = vrot.slane %v4239, %v4269
  %v4271 = vmul.f32 %v4265, %v4270
  %v4272 = vmul.f32 %v4266, %v4270
  %v4273 = vlaneseq
  %v4274 = vshrl.u32 %v4273, 7
  %v4275 = vsub.s32 0, %v4274
  %v4276 = vrot.slane %v4240, %v4275
  %v4277 = vadd.f32 %v4271, %v4276
  %v4278 = vadd.f32 %v4272, %v4276
  %4279 = vst.msk [vmem:[%s4] sm:$0xff] %vm56, %v4277
  %4280 = vst.msk [vmem:[%s4 + $0x8] sm:$0xff] %vm56, %v4278
  // Predicated region
  $region18: #{encoder_forward.1} parent=0 // pred_check
    _
  $region19: #{encoder_forward.1} parent=0 // pred_check_branch
    %4282 = sbr.rel (0) target = $region21
  $region20: #{encoder_forward.1} parent=0 // pred_region
    _
  $region21: #{encoder_forward.1} parent=0 // pred_fallthru
    _
  // Predicated region
  $region22: #{encoder_forward.1} parent=0 // pred_check
    _
  $region23: #{encoder_forward.1} parent=0 // pred_check_branch
    %4284 = sbr.rel (0) target = $region25
  $region24: #{encoder_forward.1} parent=0 // pred_region
    _
  $region25: #{encoder_forward.1} parent=0 // pred_fallthru
    _

</llo_original>
